<compile_context>
chip_gen: v5e
topology: v5e:2x2
jax: 0.10.0
libtpu: 0.0.40
codegen_flags: <defaults>
</compile_context>

<pallas_src>
import functools
import math

import jax
import jax.numpy as jnp
import numpy as np
from jax.experimental import pallas as pl
from jax.experimental.pallas import tpu as pltpu


# ----------------------------- DFT constants -----------------------------

@functools.lru_cache(maxsize=None)
def _dft2d_mats_np(h, w):
    """Real/imag parts of the ortho-normalized 2-D DFT matrix acting on
    row-major flattened (h*w,) vectors.  The 1/sqrt(h*w) scale is folded in.
    Forward:  X_hat_row = x_row @ (RE2D + i*IM2D)      (matrices are symmetric)
    Inverse real part:  Re(ifft2(r + i*q)) = r @ RE2D + q @ IM2D
    """
    kh = np.arange(h)
    kw = np.arange(w)
    ah = 2.0 * np.pi * np.outer(kh, kh) / h
    aw = 2.0 * np.pi * np.outer(kw, kw) / w
    ch, sh = np.cos(ah), np.sin(ah)
    cw, sw = np.cos(aw), np.sin(aw)
    scale = 1.0 / math.sqrt(h * w)
    re2d = (np.kron(ch, cw) - np.kron(sh, sw)) * scale
    im2d = -(np.kron(ch, sw) + np.kron(sh, cw)) * scale
    return re2d.astype(np.float32), im2d.astype(np.float32)


# ----------------------------- Pallas kernels -----------------------------

def _fourier_unit_kernel(x_ref, re_ref, im_ref,
                         wrr_ref, wri_ref, wir_ref, wii_ref,
                         sr_ref, br_ref, si_ref, bi_ref, o_ref):
    """Fused FourierUnit: fft2 -> 1x1 conv + BN + ReLU -> Re(ifft2), one batch."""
    mxu_dtype = re_ref.dtype
    re2d = re_ref[...]                                   # (HW, HW)
    im2d = im_ref[...]
    x = x_ref[0].astype(mxu_dtype)                       # (C, HW)

    # fft2 (ortho): spectrum = x @ (RE2D + i*IM2D)
    fre = jnp.dot(x, re2d, preferred_element_type=jnp.float32)   # (C, HW)
    fim = jnp.dot(x, im2d, preferred_element_type=jnp.float32)

    # 1x1 conv over stacked [re; im] channels (quadrant form) + BN + ReLU.
    r = (jnp.dot(wrr_ref[...], fre, preferred_element_type=jnp.float32)
         + jnp.dot(wri_ref[...], fim, preferred_element_type=jnp.float32))
    q = (jnp.dot(wir_ref[...], fre, preferred_element_type=jnp.float32)
         + jnp.dot(wii_ref[...], fim, preferred_element_type=jnp.float32))
    r = jnp.maximum(r * sr_ref[...] + br_ref[...], 0.0)
    q = jnp.maximum(q * si_ref[...] + bi_ref[...], 0.0)

    # Real part of ortho ifft2 (inverse = conjugate of the symmetric forward).
    out = (jnp.dot(r.astype(mxu_dtype), re2d, preferred_element_type=jnp.float32)
           + jnp.dot(q.astype(mxu_dtype), im2d, preferred_element_type=jnp.float32))
    o_ref[0] = out


def _pointwise_bn_relu_kernel(x_ref, w_ref, s_ref, b_ref, o_ref):
    # 1x1 conv (no bias) + folded BatchNorm + ReLU on a (Cin, TL) lane tile.
    y = jnp.dot(w_ref[...], x_ref[0], preferred_element_type=jnp.float32)
    o_ref[0] = jnp.maximum(y * s_ref[...] + b_ref[...], 0.0)


def _sum3_pointwise_kernel(a_ref, b_ref, c_ref, w_ref, o_ref):
    # conv2( x + fu(x) + lfu(x) ): fused elementwise sum + 1x1 conv matmul.
    s = a_ref[0] + b_ref[0] + c_ref[0]
    o_ref[0] = jnp.dot(w_ref[...], s, preferred_element_type=jnp.float32)


# ----------------------------- wrappers -----------------------------

def _parallel(n_axes):
    return pltpu.CompilerParams(dimension_semantics=("parallel",) * n_axes)


def _lane_tile(l, max_tile=2048):
    """Largest lane tile <= max_tile that divides l (multiple of 128), else l.
    Bounds per-step VMEM for large H*W (v7x: 64 MiB/TC) while staying lane-dense."""
    if l <= max_tile or l % 128 != 0:
        return l
    for t in range(max_tile, 127, -128):
        if l % t == 0:
            return t
    return l


def fourier_unit(x, w, bn_scale, bn_bias, *, mxu_dtype=jnp.bfloat16):
    """FourierUnit.forward.  x: (N, C, H, W) -> (N, C, H, W)."""
    N, C, H, W = x.shape
    hw = H * W
    re_np, im_np = _dft2d_mats_np(H, W)
    re2d = jnp.asarray(re_np, dtype=mxu_dtype)
    im2d = jnp.asarray(im_np, dtype=mxu_dtype)
    # Split the (2C,2C) conv weight and (2C,1) BN params into real/imag halves
    # so the kernel needs no sublane concat/split.
    wrr, wri = w[:C, :C], w[:C, C:]
    wir, wii = w[C:, :C], w[C:, C:]
    sr, si = bn_scale[:C], bn_scale[C:]
    br, bi = bn_bias[:C], bn_bias[C:]

    cmat = lambda n: (0, 0)   # constants: same block every grid step (resident)
    grid_spec = pltpu.PrefetchScalarGridSpec(
        num_scalar_prefetch=0, grid=(N,),
        in_specs=[pl.BlockSpec((1, C, hw), lambda n: (n, 0, 0)),
                  pl.BlockSpec((hw, hw), cmat),
                  pl.BlockSpec((hw, hw), cmat),
                  pl.BlockSpec((C, C), cmat),
                  pl.BlockSpec((C, C), cmat),
                  pl.BlockSpec((C, C), cmat),
                  pl.BlockSpec((C, C), cmat),
                  pl.BlockSpec((C, 1), cmat),
                  pl.BlockSpec((C, 1), cmat),
                  pl.BlockSpec((C, 1), cmat),
                  pl.BlockSpec((C, 1), cmat)],
        out_specs=pl.BlockSpec((1, C, hw), lambda n: (n, 0, 0)))
    out = pl.pallas_call(
        _fourier_unit_kernel,
        out_shape=jax.ShapeDtypeStruct((N, C, hw), jnp.float32),
        grid_spec=grid_spec,
        compiler_params=_parallel(1),
    )(x.reshape(N, C, hw), re2d, im2d, wrr, wri, wir, wii, sr, br, si, bi)
    return out.reshape(N, C, H, W)


def pointwise_bn_relu(x, w, scale, bias):
    """x: (N, Cin, L), w: (Cout, Cin), scale/bias: (Cout, 1) -> (N, Cout, L)."""
    N, Cin, L = x.shape
    Cout = w.shape[0]
    tl = _lane_tile(L)
    grid_spec = pltpu.PrefetchScalarGridSpec(
        num_scalar_prefetch=0, grid=(N, L // tl),
        in_specs=[pl.BlockSpec((1, Cin, tl), lambda n, l: (n, 0, l)),
                  pl.BlockSpec((Cout, Cin), lambda n, l: (0, 0)),
                  pl.BlockSpec((Cout, 1), lambda n, l: (0, 0)),
                  pl.BlockSpec((Cout, 1), lambda n, l: (0, 0))],
        out_specs=pl.BlockSpec((1, Cout, tl), lambda n, l: (n, 0, l)))
    return pl.pallas_call(
        _pointwise_bn_relu_kernel,
        out_shape=jax.ShapeDtypeStruct((N, Cout, L), jnp.float32),
        grid_spec=grid_spec,
        compiler_params=_parallel(2),
    )(x, w, scale, bias)


def sum3_pointwise(a, b, c, w):
    """a,b,c: (N, Cin, L), w: (Cout, Cin) -> (N, Cout, L)."""
    N, Cin, L = a.shape
    Cout = w.shape[0]
    tl = _lane_tile(L)
    grid_spec = pltpu.PrefetchScalarGridSpec(
        num_scalar_prefetch=0, grid=(N, L // tl),
        in_specs=[pl.BlockSpec((1, Cin, tl), lambda n, l: (n, 0, l)),
                  pl.BlockSpec((1, Cin, tl), lambda n, l: (n, 0, l)),
                  pl.BlockSpec((1, Cin, tl), lambda n, l: (n, 0, l)),
                  pl.BlockSpec((Cout, Cin), lambda n, l: (0, 0))],
        out_specs=pl.BlockSpec((1, Cout, tl), lambda n, l: (n, 0, l)))
    return pl.pallas_call(
        _sum3_pointwise_kernel,
        out_shape=jax.ShapeDtypeStruct((N, Cout, L), jnp.float32),
        grid_spec=grid_spec,
        compiler_params=_parallel(2),
    )(a, b, c, w)


# ----------------------------- Module forward -----------------------------

def spectral_transform(x, p, stride=1, enable_lfu=True, mxu_dtype=jnp.bfloat16):
    """SpectralTransform.forward.  x: (N, Cin, H, W) -> (N, Cout, H, W)."""
    N, Cin, H, W = x.shape
    if stride == 2:
        # TODO(synk): AvgPool2d(2,2) downsample is left as XLA glue (reshape+mean).
        x = x.reshape(N, Cin, H // 2, 2, W // 2, 2).mean(axis=(3, 5))
        H, W = H // 2, W // 2
    hw = H * W

    # conv1: 1x1 conv + BN + ReLU (lane-tiled over H*W).
    x1 = pointwise_bn_relu(x.reshape(N, Cin, hw),
                           p["w1"], p["bn1_scale"], p["bn1_bias"])   # (N, C2, hw)
    C2 = p["w1"].shape[0]
    xc = x1.reshape(N, C2, H, W)

    # Fourier unit on the full feature map (single fused pallas_call).
    fu_out = fourier_unit(xc, p["fu_w"], p["fu_bn_scale"], p["fu_bn_bias"],
                          mxu_dtype=mxu_dtype)

    if enable_lfu:
        # TODO(synk): the LFU quadrant shuffle and 2x2 repeat stay as XLA glue
        # (a few KiB here); fold them into index_maps if they ever dominate.
        xs = xc[:, : C2 // 4]
        xs = jnp.concatenate(jnp.split(xs, 2, axis=2), axis=1)
        xs = jnp.concatenate(jnp.split(xs, 2, axis=3), axis=1)   # (N, C2, H/2, W/2)
        xs = fourier_unit(xs, p["lfu_w"], p["lfu_bn_scale"], p["lfu_bn_bias"],
                          mxu_dtype=mxu_dtype)
        xs = jnp.tile(xs, (1, 1, 2, 2))                          # (N, C2, H, W)
    else:
        xs = jnp.zeros_like(xc)

    # conv2( x + fu(x) + lfu(x) ) -- fused sum + matmul.
    Cout = p["w2"].shape[0]
    y = sum3_pointwise(x1,
                       fu_out.reshape(N, C2, hw),
                       xs.reshape(N, C2, hw),
                       p["w2"])
    return y.reshape(N, Cout, H, W)


# ----------------------------- Reference (pure JAX) -----------------------------

def _fourier_unit_ref(x, w, scale, bias):
    N, C, H, W = x.shape
    f = jnp.fft.fft2(x, norm="ortho")
    ff = jnp.concatenate([f.real, f.imag], axis=1)
    y = jnp.einsum("oc,nchw->nohw", w, ff, precision="highest")
    y = jnp.maximum(y * scale.reshape(1, -1, 1, 1) + bias.reshape(1, -1, 1, 1), 0.0)
    r, i = jnp.split(y, 2, axis=1)
    return jnp.fft.ifft2(r + 1j * i, s=(H, W), norm="ortho").real


def _spectral_transform_ref(x, p, enable_lfu=True):
    x1 = jnp.einsum("oc,nchw->nohw", p["w1"], x, precision="highest")
    x1 = jnp.maximum(x1 * p["bn1_scale"].reshape(1, -1, 1, 1)
                     + p["bn1_bias"].reshape(1, -1, 1, 1), 0.0)
    C2 = x1.shape[1]
    out = _fourier_unit_ref(x1, p["fu_w"], p["fu_bn_scale"], p["fu_bn_bias"])
    if enable_lfu:
        xs = x1[:, : C2 // 4]
        xs = jnp.concatenate(jnp.split(xs, 2, axis=2), axis=1)
        xs = jnp.concatenate(jnp.split(xs, 2, axis=3), axis=1)
        xs = _fourier_unit_ref(xs, p["lfu_w"], p["lfu_bn_scale"], p["lfu_bn_bias"])
        xs = jnp.tile(xs, (1, 1, 2, 2))
    else:
        xs = 0.0
    return jnp.einsum("oc,nchw->nohw", p["w2"], x1 + out + xs, precision="highest")


# ----------------------------- Parameter init -----------------------------

def _fold_bn(gamma, beta, mean, var, eps=1e-5):
    scale = gamma / jnp.sqrt(var + eps)
    bias = beta - mean * scale
    return scale[:, None].astype(jnp.float32), bias[:, None].astype(jnp.float32)


def _init_bn(key, c):
    kg, kb, km, kv = jax.random.split(key, 4)
    gamma = 1.0 + 0.1 * jax.random.normal(kg, (c,), jnp.float32)
    beta = 0.1 * jax.random.normal(kb, (c,), jnp.float32)
    mean = 0.1 * jax.random.normal(km, (c,), jnp.float32)
    var = 1.0 + 0.5 * jax.random.uniform(kv, (c,), jnp.float32)
    return _fold_bn(gamma, beta, mean, var)


def init_params(key, in_channels, out_channels):
    c2 = out_channels // 2
    k1, k2, k3, k4, k5, k6 = jax.random.split(key, 6)
    p = {}
    p["w1"] = jax.random.normal(k1, (c2, in_channels), jnp.float32) * math.sqrt(2.0 / in_channels)
    p["bn1_scale"], p["bn1_bias"] = _init_bn(k2, c2)
    p["fu_w"] = jax.random.normal(k3, (2 * c2, 2 * c2), jnp.float32) * math.sqrt(2.0 / (2 * c2))
    p["fu_bn_scale"], p["fu_bn_bias"] = _init_bn(k4, 2 * c2)
    p["lfu_w"] = jax.random.normal(k5, (2 * c2, 2 * c2), jnp.float32) * math.sqrt(2.0 / (2 * c2))
    p["lfu_bn_scale"], p["lfu_bn_bias"] = _init_bn(k6, 2 * c2)
    p["w2"] = jax.random.normal(jax.random.fold_in(key, 7),
                                (out_channels, c2), jnp.float32) * math.sqrt(2.0 / c2)
    return p


# ----------------------------- Main -----------------------------

def _check(name, out, ref, rtol, atol):
    out = np.asarray(out)
    ref = np.asarray(ref)
    if not np.allclose(out, ref, rtol=rtol, atol=atol):
        raise AssertionError("%s mismatch vs reference, max abs diff = %g"
                             % (name, float(np.max(np.abs(out - ref)))))


if __name__ == "__main__":
    key = jax.random.PRNGKey(0)
    kx, kp = jax.random.split(key)

    N, Cin, H, W = 2, 4, 16, 16
    Cout = 8
    x = jax.random.normal(kx, (N, Cin, H, W), jnp.float32)
    params = init_params(kp, Cin, Cout)

    ref = jax.block_until_ready(_spectral_transform_ref(x, params, enable_lfu=True))

    # High-precision MXU path (f32): tight parity with the jnp.fft reference.
    fwd_f32 = jax.jit(functools.partial(spectral_transform, stride=1,
                                        enable_lfu=True, mxu_dtype=jnp.float32))
    out_f32 = jax.block_until_ready(fwd_f32(x, params))
    assert out_f32.shape == (N, Cout, H, W), out_f32.shape
    _check("f32", out_f32, ref, rtol=5e-2, atol=5e-2)

    # Fast MXU path (bf16 inputs, f32 accumulation) -- default for v6e/v7x.
    fwd_bf16 = jax.jit(functools.partial(spectral_transform, stride=1,
                                         enable_lfu=True, mxu_dtype=jnp.bfloat16))
    out_bf16 = jax.block_until_ready(fwd_bf16(x, params))
    assert out_bf16.shape == (N, Cout, H, W), out_bf16.shape
    _check("bf16", out_bf16, ref, rtol=1e-1, atol=1e-1)

    print("KERNEL_OK")
</pallas_src>

<mosaic_0001>
module attributes {stable_mosaic.version = 11 : i64} {
  func.func @_pointwise_bn_relu_kernel(%arg0: i32, %arg1: i32, %arg2: memref<1x4x256xf32, #tpu.memory_space<vmem>>, %arg3: memref<4x4xf32, #tpu.memory_space<vmem>>, %arg4: memref<4x1xf32, #tpu.memory_space<vmem>>, %arg5: memref<4x1xf32, #tpu.memory_space<vmem>>, %arg6: memref<1x4x256xf32, #tpu.memory_space<vmem>>) attributes {dimension_semantics = [#tpu.dimension_semantics<parallel>, #tpu.dimension_semantics<parallel>], iteration_bounds = array<i64: 2, 1>, scalar_prefetch = 0 : i64, scratch_operands = 0 : i64, tpu.core_type = #tpu.core_type<tc>, window_params = [{transform_indices = @transform_0, window_bounds = array<i64: 1, 4, 256>}, {pipeline_mode = #tpu.pipeline_mode<synchronous>, transform_indices = @transform_1, window_bounds = array<i64: 4, 4>}, {pipeline_mode = #tpu.pipeline_mode<synchronous>, transform_indices = @transform_2, window_bounds = array<i64: 4, 1>}, {pipeline_mode = #tpu.pipeline_mode<synchronous>, transform_indices = @transform_3, window_bounds = array<i64: 4, 1>}, {transform_indices = @transform_4, window_bounds = array<i64: 1, 4, 256>}]} {
    %c0 = arith.constant 0 : index
    %c0_0 = arith.constant 0 : index
    %0 = vector.load %arg3[%c0, %c0_0] : memref<4x4xf32, #tpu.memory_space<vmem>>, vector<4x4xf32>
    %c0_1 = arith.constant 0 : index
    %c0_2 = arith.constant 0 : index
    %c0_3 = arith.constant 0 : index
    %1 = vector.load %arg2[%c0_1, %c0_2, %c0_3] : memref<1x4x256xf32, #tpu.memory_space<vmem>>, vector<1x4x256xf32>
    %2 = vector.shape_cast %1 : vector<1x4x256xf32> to vector<4x256xf32>
    %cst = arith.constant dense<0.000000e+00> : vector<4x256xf32>
    %3 = tpu.matmul %0, %2, %cst {dimension_numbers = #tpu.dot_dimension_numbers<[1], [0], [0], [1], [0, 0, 1, 1], [], []>} : vector<4x4xf32>, vector<4x256xf32>, vector<4x256xf32> -> vector<4x256xf32>
    %c0_4 = arith.constant 0 : index
    %c0_5 = arith.constant 0 : index
    %4 = vector.load %arg4[%c0_4, %c0_5] : memref<4x1xf32, #tpu.memory_space<vmem>>, vector<4x1xf32>
    %5 = vector.broadcast %4 : vector<4x1xf32> to vector<4x256xf32>
    %6 = arith.mulf %3, %5 : vector<4x256xf32>
    %c0_6 = arith.constant 0 : index
    %c0_7 = arith.constant 0 : index
    %7 = vector.load %arg5[%c0_6, %c0_7] : memref<4x1xf32, #tpu.memory_space<vmem>>, vector<4x1xf32>
    %8 = vector.broadcast %7 : vector<4x1xf32> to vector<4x256xf32>
    %9 = arith.addf %6, %8 : vector<4x256xf32>
    %cst_8 = arith.constant 0.000000e+00 : f32
    %10 = vector.broadcast %cst_8 : f32 to vector<4x256xf32>
    %11 = arith.maximumf %9, %10 : vector<4x256xf32>
    %c0_9 = arith.constant 0 : index
    %c0_10 = arith.constant 0 : index
    %c0_11 = arith.constant 0 : index
    %12 = vector.load %arg6[%c0_9, %c0_10, %c0_11] : memref<1x4x256xf32, #tpu.memory_space<vmem>>, vector<1x4x256xf32>
    %13 = vector.shape_cast %12 : vector<1x4x256xf32> to vector<4x256xf32>
    %14 = vector.shape_cast %11 : vector<4x256xf32> to vector<1x4x256xf32>
    tpu.vector_store %arg6[%c0_9, %c0_10, %c0_11], %14 {strides = array<i32>} : memref<1x4x256xf32, #tpu.memory_space<vmem>>, vector<1x4x256xf32>,
    return
  }
  func.func @transform_0(%arg0: i32, %arg1: i32) -> (i32, i32, i32) {
    %c0_i32 = arith.constant 0 : i32
    %c0_i32_0 = arith.constant 0 : i32
    return %arg0, %c0_i32, %arg1 : i32, i32, i32
  }
  func.func @transform_1(%arg0: i32, %arg1: i32) -> (i32, i32) {
    %c0_i32 = arith.constant 0 : i32
    %c0_i32_0 = arith.constant 0 : i32
    %c0_i32_1 = arith.constant 0 : i32
    return %c0_i32, %c0_i32_0 : i32, i32
  }
  func.func @transform_2(%arg0: i32, %arg1: i32) -> (i32, i32) {
    %c0_i32 = arith.constant 0 : i32
    %c0_i32_0 = arith.constant 0 : i32
    %c0_i32_1 = arith.constant 0 : i32
    return %c0_i32, %c0_i32_0 : i32, i32
  }
  func.func @transform_3(%arg0: i32, %arg1: i32) -> (i32, i32) {
    %c0_i32 = arith.constant 0 : i32
    %c0_i32_0 = arith.constant 0 : i32
    %c0_i32_1 = arith.constant 0 : i32
    return %c0_i32, %c0_i32_0 : i32, i32
  }
  func.func @transform_4(%arg0: i32, %arg1: i32) -> (i32, i32, i32) {
    %c0_i32 = arith.constant 0 : i32
    %c0_i32_0 = arith.constant 0 : i32
    return %arg0, %c0_i32, %arg1 : i32, i32, i32
  }
}

module attributes {stable_mosaic.version = 11 : i64} {
  func.func @_fourier_unit_kernel(%arg0: i32, %arg1: memref<1x4x64xf32, #tpu.memory_space<vmem>>, %arg2: memref<64x64xf32, #tpu.memory_space<vmem>>, %arg3: memref<64x64xf32, #tpu.memory_space<vmem>>, %arg4: memref<4x4xf32, #tpu.memory_space<vmem>>, %arg5: memref<4x4xf32, #tpu.memory_space<vmem>>, %arg6: memref<4x4xf32, #tpu.memory_space<vmem>>, %arg7: memref<4x4xf32, #tpu.memory_space<vmem>>, %arg8: memref<4x1xf32, #tpu.memory_space<vmem>>, %arg9: memref<4x1xf32, #tpu.memory_space<vmem>>, %arg10: memref<4x1xf32, #tpu.memory_space<vmem>>, %arg11: memref<4x1xf32, #tpu.memory_space<vmem>>, %arg12: memref<1x4x64xf32, #tpu.memory_space<vmem>>) attributes {dimension_semantics = [#tpu.dimension_semantics<parallel>], iteration_bounds = array<i64: 2>, scalar_prefetch = 0 : i64, scratch_operands = 0 : i64, tpu.core_type = #tpu.core_type<tc>, window_params = [{transform_indices = @transform_0, window_bounds = array<i64: 1, 4, 64>}, {pipeline_mode = #tpu.pipeline_mode<synchronous>, transform_indices = @transform_1, window_bounds = array<i64: 64, 64>}, {pipeline_mode = #tpu.pipeline_mode<synchronous>, transform_indices = @transform_2, window_bounds = array<i64: 64, 64>}, {pipeline_mode = #tpu.pipeline_mode<synchronous>, transform_indices = @transform_3, window_bounds = array<i64: 4, 4>}, {pipeline_mode = #tpu.pipeline_mode<synchronous>, transform_indices = @transform_4, window_bounds = array<i64: 4, 4>}, {pipeline_mode = #tpu.pipeline_mode<synchronous>, transform_indices = @transform_5, window_bounds = array<i64: 4, 4>}, {pipeline_mode = #tpu.pipeline_mode<synchronous>, transform_indices = @transform_6, window_bounds = array<i64: 4, 4>}, {pipeline_mode = #tpu.pipeline_mode<synchronous>, transform_indices = @transform_7, window_bounds = array<i64: 4, 1>}, {pipeline_mode = #tpu.pipeline_mode<synchronous>, transform_indices = @transform_8, window_bounds = array<i64: 4, 1>}, {pipeline_mode = #tpu.pipeline_mode<synchronous>, transform_indices = @transform_9, window_bounds = array<i64: 4, 1>}, {pipeline_mode = #tpu.pipeline_mode<synchronous>, transform_indices = @transform_10, window_bounds = array<i64: 4, 1>}, {transform_indices = @transform_11, window_bounds = array<i64: 1, 4, 64>}]} {
    %c0 = arith.constant 0 : index
    %c0_0 = arith.constant 0 : index
    %0 = vector.load %arg2[%c0, %c0_0] : memref<64x64xf32, #tpu.memory_space<vmem>>, vector<64x64xf32>
    %c0_1 = arith.constant 0 : index
    %c0_2 = arith.constant 0 : index
    %1 = vector.load %arg3[%c0_1, %c0_2] : memref<64x64xf32, #tpu.memory_space<vmem>>, vector<64x64xf32>
    %c0_3 = arith.constant 0 : index
    %c0_4 = arith.constant 0 : index
    %c0_5 = arith.constant 0 : index
    %2 = vector.load %arg1[%c0_3, %c0_4, %c0_5] : memref<1x4x64xf32, #tpu.memory_space<vmem>>, vector<1x4x64xf32>
    %3 = vector.shape_cast %2 : vector<1x4x64xf32> to vector<4x64xf32>
    %cst = arith.constant dense<0.000000e+00> : vector<4x64xf32>
    %4 = tpu.matmul %3, %0, %cst {dimension_numbers = #tpu.dot_dimension_numbers<[1], [0], [0], [1], [0, 0, 1, 1], [], []>} : vector<4x64xf32>, vector<64x64xf32>, vector<4x64xf32> -> vector<4x64xf32>
    %cst_6 = arith.constant dense<0.000000e+00> : vector<4x64xf32>
    %5 = tpu.matmul %3, %1, %cst_6 {dimension_numbers = #tpu.dot_dimension_numbers<[1], [0], [0], [1], [0, 0, 1, 1], [], []>} : vector<4x64xf32>, vector<64x64xf32>, vector<4x64xf32> -> vector<4x64xf32>
    %c0_7 = arith.constant 0 : index
    %c0_8 = arith.constant 0 : index
    %6 = vector.load %arg4[%c0_7, %c0_8] : memref<4x4xf32, #tpu.memory_space<vmem>>, vector<4x4xf32>
    %cst_9 = arith.constant dense<0.000000e+00> : vector<4x64xf32>
    %7 = tpu.matmul %6, %4, %cst_9 {dimension_numbers = #tpu.dot_dimension_numbers<[1], [0], [0], [1], [0, 0, 1, 1], [], []>} : vector<4x4xf32>, vector<4x64xf32>, vector<4x64xf32> -> vector<4x64xf32>
    %c0_10 = arith.constant 0 : index
    %c0_11 = arith.constant 0 : index
    %8 = vector.load %arg5[%c0_10, %c0_11] : memref<4x4xf32, #tpu.memory_space<vmem>>, vector<4x4xf32>
    %cst_12 = arith.constant dense<0.000000e+00> : vector<4x64xf32>
    %9 = tpu.matmul %8, %5, %cst_12 {dimension_numbers = #tpu.dot_dimension_numbers<[1], [0], [0], [1], [0, 0, 1, 1], [], []>} : vector<4x4xf32>, vector<4x64xf32>, vector<4x64xf32> -> vector<4x64xf32>
    %10 = arith.addf %7, %9 : vector<4x64xf32>
    %c0_13 = arith.constant 0 : index
    %c0_14 = arith.constant 0 : index
    %11 = vector.load %arg6[%c0_13, %c0_14] : memref<4x4xf32, #tpu.memory_space<vmem>>, vector<4x4xf32>
    %cst_15 = arith.constant dense<0.000000e+00> : vector<4x64xf32>
    %12 = tpu.matmul %11, %4, %cst_15 {dimension_numbers = #tpu.dot_dimension_numbers<[1], [0], [0], [1], [0, 0, 1, 1], [], []>} : vector<4x4xf32>, vector<4x64xf32>, vector<4x64xf32> -> vector<4x64xf32>
    %c0_16 = arith.constant 0 : index
    %c0_17 = arith.constant 0 : index
    %13 = vector.load %arg7[%c0_16, %c0_17] : memref<4x4xf32, #tpu.memory_space<vmem>>, vector<4x4xf32>
    %cst_18 = arith.constant dense<0.000000e+00> : vector<4x64xf32>
    %14 = tpu.matmul %13, %5, %cst_18 {dimension_numbers = #tpu.dot_dimension_numbers<[1], [0], [0], [1], [0, 0, 1, 1], [], []>} : vector<4x4xf32>, vector<4x64xf32>, vector<4x64xf32> -> vector<4x64xf32>
    %15 = arith.addf %12, %14 : vector<4x64xf32>
    %c0_19 = arith.constant 0 : index
    %c0_20 = arith.constant 0 : index
    %16 = vector.load %arg8[%c0_19, %c0_20] : memref<4x1xf32, #tpu.memory_space<vmem>>, vector<4x1xf32>
    %17 = vector.broadcast %16 : vector<4x1xf32> to vector<4x64xf32>
    %18 = arith.mulf %10, %17 : vector<4x64xf32>
    %c0_21 = arith.constant 0 : index
    %c0_22 = arith.constant 0 : index
    %19 = vector.load %arg9[%c0_21, %c0_22] : memref<4x1xf32, #tpu.memory_space<vmem>>, vector<4x1xf32>
    %20 = vector.broadcast %19 : vector<4x1xf32> to vector<4x64xf32>
    %21 = arith.addf %18, %20 : vector<4x64xf32>
    %cst_23 = arith.constant 0.000000e+00 : f32
    %22 = vector.broadcast %cst_23 : f32 to vector<4x64xf32>
    %23 = arith.maximumf %21, %22 : vector<4x64xf32>
    %c0_24 = arith.constant 0 : index
    %c0_25 = arith.constant 0 : index
    %24 = vector.load %arg10[%c0_24, %c0_25] : memref<4x1xf32, #tpu.memory_space<vmem>>, vector<4x1xf32>
    %25 = vector.broadcast %24 : vector<4x1xf32> to vector<4x64xf32>
    %26 = arith.mulf %15, %25 : vector<4x64xf32>
    %c0_26 = arith.constant 0 : index
    %c0_27 = arith.constant 0 : index
    %27 = vector.load %arg11[%c0_26, %c0_27] : memref<4x1xf32, #tpu.memory_space<vmem>>, vector<4x1xf32>
    %28 = vector.broadcast %27 : vector<4x1xf32> to vector<4x64xf32>
    %29 = arith.addf %26, %28 : vector<4x64xf32>
    %cst_28 = arith.constant 0.000000e+00 : f32
    %30 = vector.broadcast %cst_28 : f32 to vector<4x64xf32>
    %31 = arith.maximumf %29, %30 : vector<4x64xf32>
    %cst_29 = arith.constant dense<0.000000e+00> : vector<4x64xf32>
    %32 = tpu.matmul %23, %0, %cst_29 {dimension_numbers = #tpu.dot_dimension_numbers<[1], [0], [0], [1], [0, 0, 1, 1], [], []>} : vector<4x64xf32>, vector<64x64xf32>, vector<4x64xf32> -> vector<4x64xf32>
    %cst_30 = arith.constant dense<0.000000e+00> : vector<4x64xf32>
    %33 = tpu.matmul %31, %1, %cst_30 {dimension_numbers = #tpu.dot_dimension_numbers<[1], [0], [0], [1], [0, 0, 1, 1], [], []>} : vector<4x64xf32>, vector<64x64xf32>, vector<4x64xf32> -> vector<4x64xf32>
    %34 = arith.addf %32, %33 : vector<4x64xf32>
    %c0_31 = arith.constant 0 : index
    %c0_32 = arith.constant 0 : index
    %c0_33 = arith.constant 0 : index
    %35 = vector.load %arg12[%c0_31, %c0_32, %c0_33] : memref<1x4x64xf32, #tpu.memory_space<vmem>>, vector<1x4x64xf32>
    %36 = vector.shape_cast %35 : vector<1x4x64xf32> to vector<4x64xf32>
    %37 = vector.shape_cast %34 : vector<4x64xf32> to vector<1x4x64xf32>
    tpu.vector_store %arg12[%c0_31, %c0_32, %c0_33], %37 {strides = array<i32>} : memref<1x4x64xf32, #tpu.memory_space<vmem>>, vector<1x4x64xf32>,
    return
  }
  func.func @transform_0(%arg0: i32) -> (i32, i32, i32) {
    %c0_i32 = arith.constant 0 : i32
    %c0_i32_0 = arith.constant 0 : i32
    %c0_i32_1 = arith.constant 0 : i32
    return %arg0, %c0_i32, %c0_i32_0 : i32, i32, i32
  }
  func.func @transform_1(%arg0: i32) -> (i32, i32) {
    %c0_i32 = arith.constant 0 : i32
    %c0_i32_0 = arith.constant 0 : i32
    %c0_i32_1 = arith.constant 0 : i32
    return %c0_i32, %c0_i32_0 : i32, i32
  }
  func.func @transform_2(%arg0: i32) -> (i32, i32) {
    %c0_i32 = arith.constant 0 : i32
    %c0_i32_0 = arith.constant 0 : i32
    %c0_i32_1 = arith.constant 0 : i32
    return %c0_i32, %c0_i32_0 : i32, i32
  }
  func.func @transform_3(%arg0: i32) -> (i32, i32) {
    %c0_i32 = arith.constant 0 : i32
    %c0_i32_0 = arith.constant 0 : i32
    %c0_i32_1 = arith.constant 0 : i32
    return %c0_i32, %c0_i32_0 : i32, i32
  }
  func.func @transform_4(%arg0: i32) -> (i32, i32) {
    %c0_i32 = arith.constant 0 : i32
    %c0_i32_0 = arith.constant 0 : i32
    %c0_i32_1 = arith.constant 0 : i32
    return %c0_i32, %c0_i32_0 : i32, i32
  }
  func.func @transform_5(%arg0: i32) -> (i32, i32) {
    %c0_i32 = arith.constant 0 : i32
    %c0_i32_0 = arith.constant 0 : i32
    %c0_i32_1 = arith.constant 0 : i32
    return %c0_i32, %c0_i32_0 : i32, i32
  }
  func.func @transform_6(%arg0: i32) -> (i32, i32) {
    %c0_i32 = arith.constant 0 : i32
    %c0_i32_0 = arith.constant 0 : i32
    %c0_i32_1 = arith.constant 0 : i32
    return %c0_i32, %c0_i32_0 : i32, i32
  }
  func.func @transform_7(%arg0: i32) -> (i32, i32) {
    %c0_i32 = arith.constant 0 : i32
    %c0_i32_0 = arith.constant 0 : i32
    %c0_i32_1 = arith.constant 0 : i32
    return %c0_i32, %c0_i32_0 : i32, i32
  }
  func.func @transform_8(%arg0: i32) -> (i32, i32) {
    %c0_i32 = arith.constant 0 : i32
    %c0_i32_0 = arith.constant 0 : i32
    %c0_i32_1 = arith.constant 0 : i32
    return %c0_i32, %c0_i32_0 : i32, i32
  }
  func.func @transform_9(%arg0: i32) -> (i32, i32) {
    %c0_i32 = arith.constant 0 : i32
    %c0_i32_0 = arith.constant 0 : i32
    %c0_i32_1 = arith.constant 0 : i32
    return %c0_i32, %c0_i32_0 : i32, i32
  }
  func.func @transform_10(%arg0: i32) -> (i32, i32) {
    %c0_i32 = arith.constant 0 : i32
    %c0_i32_0 = arith.constant 0 : i32
    %c0_i32_1 = arith.constant 0 : i32
    return %c0_i32, %c0_i32_0 : i32, i32
  }
  func.func @transform_11(%arg0: i32) -> (i32, i32, i32) {
    %c0_i32 = arith.constant 0 : i32
    %c0_i32_0 = arith.constant 0 : i32
    %c0_i32_1 = arith.constant 0 : i32
    return %arg0, %c0_i32, %c0_i32_0 : i32, i32, i32
  }
}

module attributes {stable_mosaic.version = 11 : i64} {
  func.func @_fourier_unit_kernel(%arg0: i32, %arg1: memref<1x4x256xf32, #tpu.memory_space<vmem>>, %arg2: memref<256x256xf32, #tpu.memory_space<vmem>>, %arg3: memref<256x256xf32, #tpu.memory_space<vmem>>, %arg4: memref<4x4xf32, #tpu.memory_space<vmem>>, %arg5: memref<4x4xf32, #tpu.memory_space<vmem>>, %arg6: memref<4x4xf32, #tpu.memory_space<vmem>>, %arg7: memref<4x4xf32, #tpu.memory_space<vmem>>, %arg8: memref<4x1xf32, #tpu.memory_space<vmem>>, %arg9: memref<4x1xf32, #tpu.memory_space<vmem>>, %arg10: memref<4x1xf32, #tpu.memory_space<vmem>>, %arg11: memref<4x1xf32, #tpu.memory_space<vmem>>, %arg12: memref<1x4x256xf32, #tpu.memory_space<vmem>>) attributes {dimension_semantics = [#tpu.dimension_semantics<parallel>], iteration_bounds = array<i64: 2>, scalar_prefetch = 0 : i64, scratch_operands = 0 : i64, tpu.core_type = #tpu.core_type<tc>, window_params = [{transform_indices = @transform_0, window_bounds = array<i64: 1, 4, 256>}, {pipeline_mode = #tpu.pipeline_mode<synchronous>, transform_indices = @transform_1, window_bounds = array<i64: 256, 256>}, {pipeline_mode = #tpu.pipeline_mode<synchronous>, transform_indices = @transform_2, window_bounds = array<i64: 256, 256>}, {pipeline_mode = #tpu.pipeline_mode<synchronous>, transform_indices = @transform_3, window_bounds = array<i64: 4, 4>}, {pipeline_mode = #tpu.pipeline_mode<synchronous>, transform_indices = @transform_4, window_bounds = array<i64: 4, 4>}, {pipeline_mode = #tpu.pipeline_mode<synchronous>, transform_indices = @transform_5, window_bounds = array<i64: 4, 4>}, {pipeline_mode = #tpu.pipeline_mode<synchronous>, transform_indices = @transform_6, window_bounds = array<i64: 4, 4>}, {pipeline_mode = #tpu.pipeline_mode<synchronous>, transform_indices = @transform_7, window_bounds = array<i64: 4, 1>}, {pipeline_mode = #tpu.pipeline_mode<synchronous>, transform_indices = @transform_8, window_bounds = array<i64: 4, 1>}, {pipeline_mode = #tpu.pipeline_mode<synchronous>, transform_indices = @transform_9, window_bounds = array<i64: 4, 1>}, {pipeline_mode = #tpu.pipeline_mode<synchronous>, transform_indices = @transform_10, window_bounds = array<i64: 4, 1>}, {transform_indices = @transform_11, window_bounds = array<i64: 1, 4, 256>}]} {
    %c0 = arith.constant 0 : index
    %c0_0 = arith.constant 0 : index
    %0 = vector.load %arg2[%c0, %c0_0] : memref<256x256xf32, #tpu.memory_space<vmem>>, vector<256x256xf32>
    %c0_1 = arith.constant 0 : index
    %c0_2 = arith.constant 0 : index
    %1 = vector.load %arg3[%c0_1, %c0_2] : memref<256x256xf32, #tpu.memory_space<vmem>>, vector<256x256xf32>
    %c0_3 = arith.constant 0 : index
    %c0_4 = arith.constant 0 : index
    %c0_5 = arith.constant 0 : index
    %2 = vector.load %arg1[%c0_3, %c0_4, %c0_5] : memref<1x4x256xf32, #tpu.memory_space<vmem>>, vector<1x4x256xf32>
    %3 = vector.shape_cast %2 : vector<1x4x256xf32> to vector<4x256xf32>
    %cst = arith.constant dense<0.000000e+00> : vector<4x256xf32>
    %4 = tpu.matmul %3, %0, %cst {dimension_numbers = #tpu.dot_dimension_numbers<[1], [0], [0], [1], [0, 0, 1, 1], [], []>} : vector<4x256xf32>, vector<256x256xf32>, vector<4x256xf32> -> vector<4x256xf32>
    %cst_6 = arith.constant dense<0.000000e+00> : vector<4x256xf32>
    %5 = tpu.matmul %3, %1, %cst_6 {dimension_numbers = #tpu.dot_dimension_numbers<[1], [0], [0], [1], [0, 0, 1, 1], [], []>} : vector<4x256xf32>, vector<256x256xf32>, vector<4x256xf32> -> vector<4x256xf32>
    %c0_7 = arith.constant 0 : index
    %c0_8 = arith.constant 0 : index
    %6 = vector.load %arg4[%c0_7, %c0_8] : memref<4x4xf32, #tpu.memory_space<vmem>>, vector<4x4xf32>
    %cst_9 = arith.constant dense<0.000000e+00> : vector<4x256xf32>
    %7 = tpu.matmul %6, %4, %cst_9 {dimension_numbers = #tpu.dot_dimension_numbers<[1], [0], [0], [1], [0, 0, 1, 1], [], []>} : vector<4x4xf32>, vector<4x256xf32>, vector<4x256xf32> -> vector<4x256xf32>
    %c0_10 = arith.constant 0 : index
    %c0_11 = arith.constant 0 : index
    %8 = vector.load %arg5[%c0_10, %c0_11] : memref<4x4xf32, #tpu.memory_space<vmem>>, vector<4x4xf32>
    %cst_12 = arith.constant dense<0.000000e+00> : vector<4x256xf32>
    %9 = tpu.matmul %8, %5, %cst_12 {dimension_numbers = #tpu.dot_dimension_numbers<[1], [0], [0], [1], [0, 0, 1, 1], [], []>} : vector<4x4xf32>, vector<4x256xf32>, vector<4x256xf32> -> vector<4x256xf32>
    %10 = arith.addf %7, %9 : vector<4x256xf32>
    %c0_13 = arith.constant 0 : index
    %c0_14 = arith.constant 0 : index
    %11 = vector.load %arg6[%c0_13, %c0_14] : memref<4x4xf32, #tpu.memory_space<vmem>>, vector<4x4xf32>
    %cst_15 = arith.constant dense<0.000000e+00> : vector<4x256xf32>
    %12 = tpu.matmul %11, %4, %cst_15 {dimension_numbers = #tpu.dot_dimension_numbers<[1], [0], [0], [1], [0, 0, 1, 1], [], []>} : vector<4x4xf32>, vector<4x256xf32>, vector<4x256xf32> -> vector<4x256xf32>
    %c0_16 = arith.constant 0 : index
    %c0_17 = arith.constant 0 : index
    %13 = vector.load %arg7[%c0_16, %c0_17] : memref<4x4xf32, #tpu.memory_space<vmem>>, vector<4x4xf32>
    %cst_18 = arith.constant dense<0.000000e+00> : vector<4x256xf32>
    %14 = tpu.matmul %13, %5, %cst_18 {dimension_numbers = #tpu.dot_dimension_numbers<[1], [0], [0], [1], [0, 0, 1, 1], [], []>} : vector<4x4xf32>, vector<4x256xf32>, vector<4x256xf32> -> vector<4x256xf32>
    %15 = arith.addf %12, %14 : vector<4x256xf32>
    %c0_19 = arith.constant 0 : index
    %c0_20 = arith.constant 0 : index
    %16 = vector.load %arg8[%c0_19, %c0_20] : memref<4x1xf32, #tpu.memory_space<vmem>>, vector<4x1xf32>
    %17 = vector.broadcast %16 : vector<4x1xf32> to vector<4x256xf32>
    %18 = arith.mulf %10, %17 : vector<4x256xf32>
    %c0_21 = arith.constant 0 : index
    %c0_22 = arith.constant 0 : index
    %19 = vector.load %arg9[%c0_21, %c0_22] : memref<4x1xf32, #tpu.memory_space<vmem>>, vector<4x1xf32>
    %20 = vector.broadcast %19 : vector<4x1xf32> to vector<4x256xf32>
    %21 = arith.addf %18, %20 : vector<4x256xf32>
    %cst_23 = arith.constant 0.000000e+00 : f32
    %22 = vector.broadcast %cst_23 : f32 to vector<4x256xf32>
    %23 = arith.maximumf %21, %22 : vector<4x256xf32>
    %c0_24 = arith.constant 0 : index
    %c0_25 = arith.constant 0 : index
    %24 = vector.load %arg10[%c0_24, %c0_25] : memref<4x1xf32, #tpu.memory_space<vmem>>, vector<4x1xf32>
    %25 = vector.broadcast %24 : vector<4x1xf32> to vector<4x256xf32>
    %26 = arith.mulf %15, %25 : vector<4x256xf32>
    %c0_26 = arith.constant 0 : index
    %c0_27 = arith.constant 0 : index
    %27 = vector.load %arg11[%c0_26, %c0_27] : memref<4x1xf32, #tpu.memory_space<vmem>>, vector<4x1xf32>
    %28 = vector.broadcast %27 : vector<4x1xf32> to vector<4x256xf32>
    %29 = arith.addf %26, %28 : vector<4x256xf32>
    %cst_28 = arith.constant 0.000000e+00 : f32
    %30 = vector.broadcast %cst_28 : f32 to vector<4x256xf32>
    %31 = arith.maximumf %29, %30 : vector<4x256xf32>
    %cst_29 = arith.constant dense<0.000000e+00> : vector<4x256xf32>
    %32 = tpu.matmul %23, %0, %cst_29 {dimension_numbers = #tpu.dot_dimension_numbers<[1], [0], [0], [1], [0, 0, 1, 1], [], []>} : vector<4x256xf32>, vector<256x256xf32>, vector<4x256xf32> -> vector<4x256xf32>
    %cst_30 = arith.constant dense<0.000000e+00> : vector<4x256xf32>
    %33 = tpu.matmul %31, %1, %cst_30 {dimension_numbers = #tpu.dot_dimension_numbers<[1], [0], [0], [1], [0, 0, 1, 1], [], []>} : vector<4x256xf32>, vector<256x256xf32>, vector<4x256xf32> -> vector<4x256xf32>
    %34 = arith.addf %32, %33 : vector<4x256xf32>
    %c0_31 = arith.constant 0 : index
    %c0_32 = arith.constant 0 : index
    %c0_33 = arith.constant 0 : index
    %35 = vector.load %arg12[%c0_31, %c0_32, %c0_33] : memref<1x4x256xf32, #tpu.memory_space<vmem>>, vector<1x4x256xf32>
    %36 = vector.shape_cast %35 : vector<1x4x256xf32> to vector<4x256xf32>
    %37 = vector.shape_cast %34 : vector<4x256xf32> to vector<1x4x256xf32>
    tpu.vector_store %arg12[%c0_31, %c0_32, %c0_33], %37 {strides = array<i32>} : memref<1x4x256xf32, #tpu.memory_space<vmem>>, vector<1x4x256xf32>,
    return
  }
  func.func @transform_0(%arg0: i32) -> (i32, i32, i32) {
    %c0_i32 = arith.constant 0 : i32
    %c0_i32_0 = arith.constant 0 : i32
    %c0_i32_1 = arith.constant 0 : i32
    return %arg0, %c0_i32, %c0_i32_0 : i32, i32, i32
  }
  func.func @transform_1(%arg0: i32) -> (i32, i32) {
    %c0_i32 = arith.constant 0 : i32
    %c0_i32_0 = arith.constant 0 : i32
    %c0_i32_1 = arith.constant 0 : i32
    return %c0_i32, %c0_i32_0 : i32, i32
  }
  func.func @transform_2(%arg0: i32) -> (i32, i32) {
    %c0_i32 = arith.constant 0 : i32
    %c0_i32_0 = arith.constant 0 : i32
    %c0_i32_1 = arith.constant 0 : i32
    return %c0_i32, %c0_i32_0 : i32, i32
  }
  func.func @transform_3(%arg0: i32) -> (i32, i32) {
    %c0_i32 = arith.constant 0 : i32
    %c0_i32_0 = arith.constant 0 : i32
    %c0_i32_1 = arith.constant 0 : i32
    return %c0_i32, %c0_i32_0 : i32, i32
  }
  func.func @transform_4(%arg0: i32) -> (i32, i32) {
    %c0_i32 = arith.constant 0 : i32
    %c0_i32_0 = arith.constant 0 : i32
    %c0_i32_1 = arith.constant 0 : i32
    return %c0_i32, %c0_i32_0 : i32, i32
  }
  func.func @transform_5(%arg0: i32) -> (i32, i32) {
    %c0_i32 = arith.constant 0 : i32
    %c0_i32_0 = arith.constant 0 : i32
    %c0_i32_1 = arith.constant 0 : i32
    return %c0_i32, %c0_i32_0 : i32, i32
  }
  func.func @transform_6(%arg0: i32) -> (i32, i32) {
    %c0_i32 = arith.constant 0 : i32
    %c0_i32_0 = arith.constant 0 : i32
    %c0_i32_1 = arith.constant 0 : i32
    return %c0_i32, %c0_i32_0 : i32, i32
  }
  func.func @transform_7(%arg0: i32) -> (i32, i32) {
    %c0_i32 = arith.constant 0 : i32
    %c0_i32_0 = arith.constant 0 : i32
    %c0_i32_1 = arith.constant 0 : i32
    return %c0_i32, %c0_i32_0 : i32, i32
  }
  func.func @transform_8(%arg0: i32) -> (i32, i32) {
    %c0_i32 = arith.constant 0 : i32
    %c0_i32_0 = arith.constant 0 : i32
    %c0_i32_1 = arith.constant 0 : i32
    return %c0_i32, %c0_i32_0 : i32, i32
  }
  func.func @transform_9(%arg0: i32) -> (i32, i32) {
    %c0_i32 = arith.constant 0 : i32
    %c0_i32_0 = arith.constant 0 : i32
    %c0_i32_1 = arith.constant 0 : i32
    return %c0_i32, %c0_i32_0 : i32, i32
  }
  func.func @transform_10(%arg0: i32) -> (i32, i32) {
    %c0_i32 = arith.constant 0 : i32
    %c0_i32_0 = arith.constant 0 : i32
    %c0_i32_1 = arith.constant 0 : i32
    return %c0_i32, %c0_i32_0 : i32, i32
  }
  func.func @transform_11(%arg0: i32) -> (i32, i32, i32) {
    %c0_i32 = arith.constant 0 : i32
    %c0_i32_0 = arith.constant 0 : i32
    %c0_i32_1 = arith.constant 0 : i32
    return %arg0, %c0_i32, %c0_i32_0 : i32, i32, i32
  }
}

module attributes {stable_mosaic.version = 11 : i64} {
  func.func @_sum3_pointwise_kernel(%arg0: i32, %arg1: i32, %arg2: memref<1x4x256xf32, #tpu.memory_space<vmem>>, %arg3: memref<1x4x256xf32, #tpu.memory_space<vmem>>, %arg4: memref<1x4x256xf32, #tpu.memory_space<vmem>>, %arg5: memref<8x4xf32, #tpu.memory_space<vmem>>, %arg6: memref<1x8x256xf32, #tpu.memory_space<vmem>>) attributes {dimension_semantics = [#tpu.dimension_semantics<parallel>, #tpu.dimension_semantics<parallel>], iteration_bounds = array<i64: 2, 1>, scalar_prefetch = 0 : i64, scratch_operands = 0 : i64, tpu.core_type = #tpu.core_type<tc>, window_params = [{transform_indices = @transform_0, window_bounds = array<i64: 1, 4, 256>}, {transform_indices = @transform_1, window_bounds = array<i64: 1, 4, 256>}, {transform_indices = @transform_2, window_bounds = array<i64: 1, 4, 256>}, {pipeline_mode = #tpu.pipeline_mode<synchronous>, transform_indices = @transform_3, window_bounds = array<i64: 8, 4>}, {transform_indices = @transform_4, window_bounds = array<i64: 1, 8, 256>}]} {
    %c0 = arith.constant 0 : index
    %c0_0 = arith.constant 0 : index
    %c0_1 = arith.constant 0 : index
    %0 = vector.load %arg2[%c0, %c0_0, %c0_1] : memref<1x4x256xf32, #tpu.memory_space<vmem>>, vector<1x4x256xf32>
    %1 = vector.shape_cast %0 : vector<1x4x256xf32> to vector<4x256xf32>
    %c0_2 = arith.constant 0 : index
    %c0_3 = arith.constant 0 : index
    %c0_4 = arith.constant 0 : index
    %2 = vector.load %arg3[%c0_2, %c0_3, %c0_4] : memref<1x4x256xf32, #tpu.memory_space<vmem>>, vector<1x4x256xf32>
    %3 = vector.shape_cast %2 : vector<1x4x256xf32> to vector<4x256xf32>
    %4 = arith.addf %1, %3 : vector<4x256xf32>
    %c0_5 = arith.constant 0 : index
    %c0_6 = arith.constant 0 : index
    %c0_7 = arith.constant 0 : index
    %5 = vector.load %arg4[%c0_5, %c0_6, %c0_7] : memref<1x4x256xf32, #tpu.memory_space<vmem>>, vector<1x4x256xf32>
    %6 = vector.shape_cast %5 : vector<1x4x256xf32> to vector<4x256xf32>
    %7 = arith.addf %4, %6 : vector<4x256xf32>
    %c0_8 = arith.constant 0 : index
    %c0_9 = arith.constant 0 : index
    %8 = vector.load %arg5[%c0_8, %c0_9] : memref<8x4xf32, #tpu.memory_space<vmem>>, vector<8x4xf32>
    %cst = arith.constant dense<0.000000e+00> : vector<8x256xf32>
    %9 = tpu.matmul %8, %7, %cst {dimension_numbers = #tpu.dot_dimension_numbers<[1], [0], [0], [1], [0, 0, 1, 1], [], []>} : vector<8x4xf32>, vector<4x256xf32>, vector<8x256xf32> -> vector<8x256xf32>
    %c0_10 = arith.constant 0 : index
    %c0_11 = arith.constant 0 : index
    %c0_12 = arith.constant 0 : index
    %10 = vector.load %arg6[%c0_10, %c0_11, %c0_12] : memref<1x8x256xf32, #tpu.memory_space<vmem>>, vector<1x8x256xf32>
    %11 = vector.shape_cast %10 : vector<1x8x256xf32> to vector<8x256xf32>
    %12 = vector.shape_cast %9 : vector<8x256xf32> to vector<1x8x256xf32>
    tpu.vector_store %arg6[%c0_10, %c0_11, %c0_12], %12 {strides = array<i32>} : memref<1x8x256xf32, #tpu.memory_space<vmem>>, vector<1x8x256xf32>,
    return
  }
  func.func @transform_0(%arg0: i32, %arg1: i32) -> (i32, i32, i32) {
    %c0_i32 = arith.constant 0 : i32
    %c0_i32_0 = arith.constant 0 : i32
    return %arg0, %c0_i32, %arg1 : i32, i32, i32
  }
  func.func @transform_1(%arg0: i32, %arg1: i32) -> (i32, i32, i32) {
    %c0_i32 = arith.constant 0 : i32
    %c0_i32_0 = arith.constant 0 : i32
    return %arg0, %c0_i32, %arg1 : i32, i32, i32
  }
  func.func @transform_2(%arg0: i32, %arg1: i32) -> (i32, i32, i32) {
    %c0_i32 = arith.constant 0 : i32
    %c0_i32_0 = arith.constant 0 : i32
    return %arg0, %c0_i32, %arg1 : i32, i32, i32
  }
  func.func @transform_3(%arg0: i32, %arg1: i32) -> (i32, i32) {
    %c0_i32 = arith.constant 0 : i32
    %c0_i32_0 = arith.constant 0 : i32
    %c0_i32_1 = arith.constant 0 : i32
    return %c0_i32, %c0_i32_0 : i32, i32
  }
  func.func @transform_4(%arg0: i32, %arg1: i32) -> (i32, i32, i32) {
    %c0_i32 = arith.constant 0 : i32
    %c0_i32_0 = arith.constant 0 : i32
    return %arg0, %c0_i32, %arg1 : i32, i32, i32
  }
}

</mosaic_0001>

<llo_original>
// kernel: tile.7
$region0: #{tile.7}
  %s0 = inlined_call_operand.vmem [shape: f32[2,4,2,8,2,8], index: 0, kind: input, shape index: {}]
  %s1 = inlined_call_operand.vmem [shape: f32[2,4,256], index: 1, kind: output, shape index: {}]
  $region1: #{tile.7} parent=0
    #allocation0 [shape = 'u8[16384]{0}', space=vmem, size = 0x4000, scoped, tag = 'scoped mem for output reshape']
    #allocation1 [shape = 'u8[524288]{0}', space=vmem, size = 0x80000, scoped, tag = 'scoped mem for input reshape']
    %s3 = ssub.s32 4, 1
    %s4 = scalar_lea.vmem %s0, 254
    %v5 = vld [vmem:[%s4] sm:%s3]
    %s6 = scalar_lea.vmem [#allocation1], 1016
    %7 = vst [vmem:[%s6] sm:%s3] %v5
    %s8 = scalar_lea.vmem %s0, 252
    %v9 = vld [vmem:[%s8] sm:%s3]
    %s10 = scalar_lea.vmem [#allocation1], 1008
    %11 = vst [vmem:[%s10] sm:%s3] %v9
    %s12 = scalar_lea.vmem %s0, 250
    %v13 = vld [vmem:[%s12] sm:%s3]
    %s14 = scalar_lea.vmem [#allocation1], 1000
    %15 = vst [vmem:[%s14] sm:%s3] %v13
    %s16 = scalar_lea.vmem %s0, 248
    %v17 = vld [vmem:[%s16] sm:%s3]
    %s18 = scalar_lea.vmem [#allocation1], 992
    %19 = vst [vmem:[%s18] sm:%s3] %v17
    %s20 = scalar_lea.vmem %s0, 246
    %v21 = vld [vmem:[%s20] sm:%s3]
    %s22 = scalar_lea.vmem [#allocation1], 984
    %23 = vst [vmem:[%s22] sm:%s3] %v21
    %s24 = scalar_lea.vmem %s0, 244
    %v25 = vld [vmem:[%s24] sm:%s3]
    %s26 = scalar_lea.vmem [#allocation1], 976
    %27 = vst [vmem:[%s26] sm:%s3] %v25
    %s28 = scalar_lea.vmem %s0, 242
    %v29 = vld [vmem:[%s28] sm:%s3]
    %s30 = scalar_lea.vmem [#allocation1], 968
    %31 = vst [vmem:[%s30] sm:%s3] %v29
    %s32 = scalar_lea.vmem %s0, 240
    %v33 = vld [vmem:[%s32] sm:%s3]
    %s34 = scalar_lea.vmem [#allocation1], 960
    %35 = vst [vmem:[%s34] sm:%s3] %v33
    %s36 = scalar_lea.vmem %s0, 238
    %v37 = vld [vmem:[%s36] sm:%s3]
    %s38 = scalar_lea.vmem [#allocation1], 952
    %39 = vst [vmem:[%s38] sm:%s3] %v37
    %s40 = scalar_lea.vmem %s0, 236
    %v41 = vld [vmem:[%s40] sm:%s3]
    %s42 = scalar_lea.vmem [#allocation1], 944
    %43 = vst [vmem:[%s42] sm:%s3] %v41
    %s44 = scalar_lea.vmem %s0, 234
    %v45 = vld [vmem:[%s44] sm:%s3]
    %s46 = scalar_lea.vmem [#allocation1], 936
    %47 = vst [vmem:[%s46] sm:%s3] %v45
    %s48 = scalar_lea.vmem %s0, 232
    %v49 = vld [vmem:[%s48] sm:%s3]
    %s50 = scalar_lea.vmem [#allocation1], 928
    %51 = vst [vmem:[%s50] sm:%s3] %v49
    %s52 = scalar_lea.vmem %s0, 230
    %v53 = vld [vmem:[%s52] sm:%s3]
    %s54 = scalar_lea.vmem [#allocation1], 920
    %55 = vst [vmem:[%s54] sm:%s3] %v53
    %s56 = scalar_lea.vmem %s0, 228
    %v57 = vld [vmem:[%s56] sm:%s3]
    %s58 = scalar_lea.vmem [#allocation1], 912
    %59 = vst [vmem:[%s58] sm:%s3] %v57
    %s60 = scalar_lea.vmem %s0, 226
    %v61 = vld [vmem:[%s60] sm:%s3]
    %s62 = scalar_lea.vmem [#allocation1], 904
    %63 = vst [vmem:[%s62] sm:%s3] %v61
    %s64 = scalar_lea.vmem %s0, 224
    %v65 = vld [vmem:[%s64] sm:%s3]
    %s66 = scalar_lea.vmem [#allocation1], 896
    %67 = vst [vmem:[%s66] sm:%s3] %v65
    %s68 = scalar_lea.vmem %s0, 222
    %v69 = vld [vmem:[%s68] sm:%s3]
    %s70 = scalar_lea.vmem [#allocation1], 888
    %71 = vst [vmem:[%s70] sm:%s3] %v69
    %s72 = scalar_lea.vmem %s0, 220
    %v73 = vld [vmem:[%s72] sm:%s3]
    %s74 = scalar_lea.vmem [#allocation1], 880
    %75 = vst [vmem:[%s74] sm:%s3] %v73
    %s76 = scalar_lea.vmem %s0, 218
    %v77 = vld [vmem:[%s76] sm:%s3]
    %s78 = scalar_lea.vmem [#allocation1], 872
    %79 = vst [vmem:[%s78] sm:%s3] %v77
    %s80 = scalar_lea.vmem %s0, 216
    %v81 = vld [vmem:[%s80] sm:%s3]
    %s82 = scalar_lea.vmem [#allocation1], 864
    %83 = vst [vmem:[%s82] sm:%s3] %v81
    %s84 = scalar_lea.vmem %s0, 214
    %v85 = vld [vmem:[%s84] sm:%s3]
    %s86 = scalar_lea.vmem [#allocation1], 856
    %87 = vst [vmem:[%s86] sm:%s3] %v85
    %s88 = scalar_lea.vmem %s0, 212
    %v89 = vld [vmem:[%s88] sm:%s3]
    %s90 = scalar_lea.vmem [#allocation1], 848
    %91 = vst [vmem:[%s90] sm:%s3] %v89
    %s92 = scalar_lea.vmem %s0, 210
    %v93 = vld [vmem:[%s92] sm:%s3]
    %s94 = scalar_lea.vmem [#allocation1], 840
    %95 = vst [vmem:[%s94] sm:%s3] %v93
    %s96 = scalar_lea.vmem %s0, 208
    %v97 = vld [vmem:[%s96] sm:%s3]
    %s98 = scalar_lea.vmem [#allocation1], 832
    %99 = vst [vmem:[%s98] sm:%s3] %v97
    %s100 = scalar_lea.vmem %s0, 206
    %v101 = vld [vmem:[%s100] sm:%s3]
    %s102 = scalar_lea.vmem [#allocation1], 824
    %103 = vst [vmem:[%s102] sm:%s3] %v101
    %s104 = scalar_lea.vmem %s0, 204
    %v105 = vld [vmem:[%s104] sm:%s3]
    %s106 = scalar_lea.vmem [#allocation1], 816
    %107 = vst [vmem:[%s106] sm:%s3] %v105
    %s108 = scalar_lea.vmem %s0, 202
    %v109 = vld [vmem:[%s108] sm:%s3]
    %s110 = scalar_lea.vmem [#allocation1], 808
    %111 = vst [vmem:[%s110] sm:%s3] %v109
    %s112 = scalar_lea.vmem %s0, 200
    %v113 = vld [vmem:[%s112] sm:%s3]
    %s114 = scalar_lea.vmem [#allocation1], 800
    %115 = vst [vmem:[%s114] sm:%s3] %v113
    %s116 = scalar_lea.vmem %s0, 198
    %v117 = vld [vmem:[%s116] sm:%s3]
    %s118 = scalar_lea.vmem [#allocation1], 792
    %119 = vst [vmem:[%s118] sm:%s3] %v117
    %s120 = scalar_lea.vmem %s0, 196
    %v121 = vld [vmem:[%s120] sm:%s3]
    %s122 = scalar_lea.vmem [#allocation1], 784
    %123 = vst [vmem:[%s122] sm:%s3] %v121
    %s124 = scalar_lea.vmem %s0, 194
    %v125 = vld [vmem:[%s124] sm:%s3]
    %s126 = scalar_lea.vmem [#allocation1], 776
    %127 = vst [vmem:[%s126] sm:%s3] %v125
    %s128 = scalar_lea.vmem %s0, 192
    %v129 = vld [vmem:[%s128] sm:%s3]
    %s130 = scalar_lea.vmem [#allocation1], 768
    %131 = vst [vmem:[%s130] sm:%s3] %v129
    %s132 = scalar_lea.vmem %s0, 190
    %v133 = vld [vmem:[%s132] sm:%s3]
    %s134 = scalar_lea.vmem [#allocation1], 760
    %135 = vst [vmem:[%s134] sm:%s3] %v133
    %s136 = scalar_lea.vmem %s0, 188
    %v137 = vld [vmem:[%s136] sm:%s3]
    %s138 = scalar_lea.vmem [#allocation1], 752
    %139 = vst [vmem:[%s138] sm:%s3] %v137
    %s140 = scalar_lea.vmem %s0, 186
    %v141 = vld [vmem:[%s140] sm:%s3]
    %s142 = scalar_lea.vmem [#allocation1], 744
    %143 = vst [vmem:[%s142] sm:%s3] %v141
    %s144 = scalar_lea.vmem %s0, 184
    %v145 = vld [vmem:[%s144] sm:%s3]
    %s146 = scalar_lea.vmem [#allocation1], 736
    %147 = vst [vmem:[%s146] sm:%s3] %v145
    %s148 = scalar_lea.vmem %s0, 182
    %v149 = vld [vmem:[%s148] sm:%s3]
    %s150 = scalar_lea.vmem [#allocation1], 728
    %151 = vst [vmem:[%s150] sm:%s3] %v149
    %s152 = scalar_lea.vmem %s0, 180
    %v153 = vld [vmem:[%s152] sm:%s3]
    %s154 = scalar_lea.vmem [#allocation1], 720
    %155 = vst [vmem:[%s154] sm:%s3] %v153
    %s156 = scalar_lea.vmem %s0, 178
    %v157 = vld [vmem:[%s156] sm:%s3]
    %s158 = scalar_lea.vmem [#allocation1], 712
    %159 = vst [vmem:[%s158] sm:%s3] %v157
    %s160 = scalar_lea.vmem %s0, 176
    %v161 = vld [vmem:[%s160] sm:%s3]
    %s162 = scalar_lea.vmem [#allocation1], 704
    %163 = vst [vmem:[%s162] sm:%s3] %v161
    %s164 = scalar_lea.vmem %s0, 174
    %v165 = vld [vmem:[%s164] sm:%s3]
    %s166 = scalar_lea.vmem [#allocation1], 696
    %167 = vst [vmem:[%s166] sm:%s3] %v165
    %s168 = scalar_lea.vmem %s0, 172
    %v169 = vld [vmem:[%s168] sm:%s3]
    %s170 = scalar_lea.vmem [#allocation1], 688
    %171 = vst [vmem:[%s170] sm:%s3] %v169
    %s172 = scalar_lea.vmem %s0, 170
    %v173 = vld [vmem:[%s172] sm:%s3]
    %s174 = scalar_lea.vmem [#allocation1], 680
    %175 = vst [vmem:[%s174] sm:%s3] %v173
    %s176 = scalar_lea.vmem %s0, 168
    %v177 = vld [vmem:[%s176] sm:%s3]
    %s178 = scalar_lea.vmem [#allocation1], 672
    %179 = vst [vmem:[%s178] sm:%s3] %v177
    %s180 = scalar_lea.vmem %s0, 166
    %v181 = vld [vmem:[%s180] sm:%s3]
    %s182 = scalar_lea.vmem [#allocation1], 664
    %183 = vst [vmem:[%s182] sm:%s3] %v181
    %s184 = scalar_lea.vmem %s0, 164
    %v185 = vld [vmem:[%s184] sm:%s3]
    %s186 = scalar_lea.vmem [#allocation1], 656
    %187 = vst [vmem:[%s186] sm:%s3] %v185
    %s188 = scalar_lea.vmem %s0, 162
    %v189 = vld [vmem:[%s188] sm:%s3]
    %s190 = scalar_lea.vmem [#allocation1], 648
    %191 = vst [vmem:[%s190] sm:%s3] %v189
    %s192 = scalar_lea.vmem %s0, 160
    %v193 = vld [vmem:[%s192] sm:%s3]
    %s194 = scalar_lea.vmem [#allocation1], 640
    %195 = vst [vmem:[%s194] sm:%s3] %v193
    %s196 = scalar_lea.vmem %s0, 158
    %v197 = vld [vmem:[%s196] sm:%s3]
    %s198 = scalar_lea.vmem [#allocation1], 632
    %199 = vst [vmem:[%s198] sm:%s3] %v197
    %s200 = scalar_lea.vmem %s0, 156
    %v201 = vld [vmem:[%s200] sm:%s3]
    %s202 = scalar_lea.vmem [#allocation1], 624
    %203 = vst [vmem:[%s202] sm:%s3] %v201
    %s204 = scalar_lea.vmem %s0, 154
    %v205 = vld [vmem:[%s204] sm:%s3]
    %s206 = scalar_lea.vmem [#allocation1], 616
    %207 = vst [vmem:[%s206] sm:%s3] %v205
    %s208 = scalar_lea.vmem %s0, 152
    %v209 = vld [vmem:[%s208] sm:%s3]
    %s210 = scalar_lea.vmem [#allocation1], 608
    %211 = vst [vmem:[%s210] sm:%s3] %v209
    %s212 = scalar_lea.vmem %s0, 150
    %v213 = vld [vmem:[%s212] sm:%s3]
    %s214 = scalar_lea.vmem [#allocation1], 600
    %215 = vst [vmem:[%s214] sm:%s3] %v213
    %s216 = scalar_lea.vmem %s0, 148
    %v217 = vld [vmem:[%s216] sm:%s3]
    %s218 = scalar_lea.vmem [#allocation1], 592
    %219 = vst [vmem:[%s218] sm:%s3] %v217
    %s220 = scalar_lea.vmem %s0, 146
    %v221 = vld [vmem:[%s220] sm:%s3]
    %s222 = scalar_lea.vmem [#allocation1], 584
    %223 = vst [vmem:[%s222] sm:%s3] %v221
    %s224 = scalar_lea.vmem %s0, 144
    %v225 = vld [vmem:[%s224] sm:%s3]
    %s226 = scalar_lea.vmem [#allocation1], 576
    %227 = vst [vmem:[%s226] sm:%s3] %v225
    %s228 = scalar_lea.vmem %s0, 142
    %v229 = vld [vmem:[%s228] sm:%s3]
    %s230 = scalar_lea.vmem [#allocation1], 568
    %231 = vst [vmem:[%s230] sm:%s3] %v229
    %s232 = scalar_lea.vmem %s0, 140
    %v233 = vld [vmem:[%s232] sm:%s3]
    %s234 = scalar_lea.vmem [#allocation1], 560
    %235 = vst [vmem:[%s234] sm:%s3] %v233
    %s236 = scalar_lea.vmem %s0, 138
    %v237 = vld [vmem:[%s236] sm:%s3]
    %s238 = scalar_lea.vmem [#allocation1], 552
    %239 = vst [vmem:[%s238] sm:%s3] %v237
    %s240 = scalar_lea.vmem %s0, 136
    %v241 = vld [vmem:[%s240] sm:%s3]
    %s242 = scalar_lea.vmem [#allocation1], 544
    %243 = vst [vmem:[%s242] sm:%s3] %v241
    %s244 = scalar_lea.vmem %s0, 134
    %v245 = vld [vmem:[%s244] sm:%s3]
    %s246 = scalar_lea.vmem [#allocation1], 536
    %247 = vst [vmem:[%s246] sm:%s3] %v245
    %s248 = scalar_lea.vmem %s0, 132
    %v249 = vld [vmem:[%s248] sm:%s3]
    %s250 = scalar_lea.vmem [#allocation1], 528
    %251 = vst [vmem:[%s250] sm:%s3] %v249
    %s252 = scalar_lea.vmem %s0, 130
    %v253 = vld [vmem:[%s252] sm:%s3]
    %s254 = scalar_lea.vmem [#allocation1], 520
    %255 = vst [vmem:[%s254] sm:%s3] %v253
    %s256 = scalar_lea.vmem %s0, 128
    %v257 = vld [vmem:[%s256] sm:%s3]
    %s258 = scalar_lea.vmem [#allocation1], 512
    %259 = vst [vmem:[%s258] sm:%s3] %v257
    %s260 = scalar_lea.vmem %s0, 126
    %v261 = vld [vmem:[%s260] sm:%s3]
    %s262 = scalar_lea.vmem [#allocation1], 504
    %263 = vst [vmem:[%s262] sm:%s3] %v261
    %s264 = scalar_lea.vmem %s0, 124
    %v265 = vld [vmem:[%s264] sm:%s3]
    %s266 = scalar_lea.vmem [#allocation1], 496
    %267 = vst [vmem:[%s266] sm:%s3] %v265
    %s268 = scalar_lea.vmem %s0, 122
    %v269 = vld [vmem:[%s268] sm:%s3]
    %s270 = scalar_lea.vmem [#allocation1], 488
    %271 = vst [vmem:[%s270] sm:%s3] %v269
    %s272 = scalar_lea.vmem %s0, 120
    %v273 = vld [vmem:[%s272] sm:%s3]
    %s274 = scalar_lea.vmem [#allocation1], 480
    %275 = vst [vmem:[%s274] sm:%s3] %v273
    %s276 = scalar_lea.vmem %s0, 118
    %v277 = vld [vmem:[%s276] sm:%s3]
    %s278 = scalar_lea.vmem [#allocation1], 472
    %279 = vst [vmem:[%s278] sm:%s3] %v277
    %s280 = scalar_lea.vmem %s0, 116
    %v281 = vld [vmem:[%s280] sm:%s3]
    %s282 = scalar_lea.vmem [#allocation1], 464
    %283 = vst [vmem:[%s282] sm:%s3] %v281
    %s284 = scalar_lea.vmem %s0, 114
    %v285 = vld [vmem:[%s284] sm:%s3]
    %s286 = scalar_lea.vmem [#allocation1], 456
    %287 = vst [vmem:[%s286] sm:%s3] %v285
    %s288 = scalar_lea.vmem %s0, 112
    %v289 = vld [vmem:[%s288] sm:%s3]
    %s290 = scalar_lea.vmem [#allocation1], 448
    %291 = vst [vmem:[%s290] sm:%s3] %v289
    %s292 = scalar_lea.vmem %s0, 110
    %v293 = vld [vmem:[%s292] sm:%s3]
    %s294 = scalar_lea.vmem [#allocation1], 440
    %295 = vst [vmem:[%s294] sm:%s3] %v293
    %s296 = scalar_lea.vmem %s0, 108
    %v297 = vld [vmem:[%s296] sm:%s3]
    %s298 = scalar_lea.vmem [#allocation1], 432
    %299 = vst [vmem:[%s298] sm:%s3] %v297
    %s300 = scalar_lea.vmem %s0, 106
    %v301 = vld [vmem:[%s300] sm:%s3]
    %s302 = scalar_lea.vmem [#allocation1], 424
    %303 = vst [vmem:[%s302] sm:%s3] %v301
    %s304 = scalar_lea.vmem %s0, 104
    %v305 = vld [vmem:[%s304] sm:%s3]
    %s306 = scalar_lea.vmem [#allocation1], 416
    %307 = vst [vmem:[%s306] sm:%s3] %v305
    %s308 = scalar_lea.vmem %s0, 102
    %v309 = vld [vmem:[%s308] sm:%s3]
    %s310 = scalar_lea.vmem [#allocation1], 408
    %311 = vst [vmem:[%s310] sm:%s3] %v309
    %s312 = scalar_lea.vmem %s0, 100
    %v313 = vld [vmem:[%s312] sm:%s3]
    %s314 = scalar_lea.vmem [#allocation1], 400
    %315 = vst [vmem:[%s314] sm:%s3] %v313
    %s316 = scalar_lea.vmem %s0, 98
    %v317 = vld [vmem:[%s316] sm:%s3]
    %s318 = scalar_lea.vmem [#allocation1], 392
    %319 = vst [vmem:[%s318] sm:%s3] %v317
    %s320 = scalar_lea.vmem %s0, 96
    %v321 = vld [vmem:[%s320] sm:%s3]
    %s322 = scalar_lea.vmem [#allocation1], 384
    %323 = vst [vmem:[%s322] sm:%s3] %v321
    %s324 = scalar_lea.vmem %s0, 94
    %v325 = vld [vmem:[%s324] sm:%s3]
    %s326 = scalar_lea.vmem [#allocation1], 376
    %327 = vst [vmem:[%s326] sm:%s3] %v325
    %s328 = scalar_lea.vmem %s0, 92
    %v329 = vld [vmem:[%s328] sm:%s3]
    %s330 = scalar_lea.vmem [#allocation1], 368
    %331 = vst [vmem:[%s330] sm:%s3] %v329
    %s332 = scalar_lea.vmem %s0, 90
    %v333 = vld [vmem:[%s332] sm:%s3]
    %s334 = scalar_lea.vmem [#allocation1], 360
    %335 = vst [vmem:[%s334] sm:%s3] %v333
    %s336 = scalar_lea.vmem %s0, 88
    %v337 = vld [vmem:[%s336] sm:%s3]
    %s338 = scalar_lea.vmem [#allocation1], 352
    %339 = vst [vmem:[%s338] sm:%s3] %v337
    %s340 = scalar_lea.vmem %s0, 86
    %v341 = vld [vmem:[%s340] sm:%s3]
    %s342 = scalar_lea.vmem [#allocation1], 344
    %343 = vst [vmem:[%s342] sm:%s3] %v341
    %s344 = scalar_lea.vmem %s0, 84
    %v345 = vld [vmem:[%s344] sm:%s3]
    %s346 = scalar_lea.vmem [#allocation1], 336
    %347 = vst [vmem:[%s346] sm:%s3] %v345
    %s348 = scalar_lea.vmem %s0, 82
    %v349 = vld [vmem:[%s348] sm:%s3]
    %s350 = scalar_lea.vmem [#allocation1], 328
    %351 = vst [vmem:[%s350] sm:%s3] %v349
    %s352 = scalar_lea.vmem %s0, 80
    %v353 = vld [vmem:[%s352] sm:%s3]
    %s354 = scalar_lea.vmem [#allocation1], 320
    %355 = vst [vmem:[%s354] sm:%s3] %v353
    %s356 = scalar_lea.vmem %s0, 78
    %v357 = vld [vmem:[%s356] sm:%s3]
    %s358 = scalar_lea.vmem [#allocation1], 312
    %359 = vst [vmem:[%s358] sm:%s3] %v357
    %s360 = scalar_lea.vmem %s0, 76
    %v361 = vld [vmem:[%s360] sm:%s3]
    %s362 = scalar_lea.vmem [#allocation1], 304
    %363 = vst [vmem:[%s362] sm:%s3] %v361
    %s364 = scalar_lea.vmem %s0, 74
    %v365 = vld [vmem:[%s364] sm:%s3]
    %s366 = scalar_lea.vmem [#allocation1], 296
    %367 = vst [vmem:[%s366] sm:%s3] %v365
    %s368 = scalar_lea.vmem %s0, 72
    %v369 = vld [vmem:[%s368] sm:%s3]
    %s370 = scalar_lea.vmem [#allocation1], 288
    %371 = vst [vmem:[%s370] sm:%s3] %v369
    %s372 = scalar_lea.vmem %s0, 70
    %v373 = vld [vmem:[%s372] sm:%s3]
    %s374 = scalar_lea.vmem [#allocation1], 280
    %375 = vst [vmem:[%s374] sm:%s3] %v373
    %s376 = scalar_lea.vmem %s0, 68
    %v377 = vld [vmem:[%s376] sm:%s3]
    %s378 = scalar_lea.vmem [#allocation1], 272
    %379 = vst [vmem:[%s378] sm:%s3] %v377
    %s380 = scalar_lea.vmem %s0, 66
    %v381 = vld [vmem:[%s380] sm:%s3]
    %s382 = scalar_lea.vmem [#allocation1], 264
    %383 = vst [vmem:[%s382] sm:%s3] %v381
    %s384 = scalar_lea.vmem %s0, 64
    %v385 = vld [vmem:[%s384] sm:%s3]
    %s386 = scalar_lea.vmem [#allocation1], 256
    %387 = vst [vmem:[%s386] sm:%s3] %v385
    %s388 = scalar_lea.vmem %s0, 62
    %v389 = vld [vmem:[%s388] sm:%s3]
    %s390 = scalar_lea.vmem [#allocation1], 248
    %391 = vst [vmem:[%s390] sm:%s3] %v389
    %s392 = scalar_lea.vmem %s0, 60
    %v393 = vld [vmem:[%s392] sm:%s3]
    %s394 = scalar_lea.vmem [#allocation1], 240
    %395 = vst [vmem:[%s394] sm:%s3] %v393
    %s396 = scalar_lea.vmem %s0, 58
    %v397 = vld [vmem:[%s396] sm:%s3]
    %s398 = scalar_lea.vmem [#allocation1], 232
    %399 = vst [vmem:[%s398] sm:%s3] %v397
    %s400 = scalar_lea.vmem %s0, 56
    %v401 = vld [vmem:[%s400] sm:%s3]
    %s402 = scalar_lea.vmem [#allocation1], 224
    %403 = vst [vmem:[%s402] sm:%s3] %v401
    %s404 = scalar_lea.vmem %s0, 54
    %v405 = vld [vmem:[%s404] sm:%s3]
    %s406 = scalar_lea.vmem [#allocation1], 216
    %407 = vst [vmem:[%s406] sm:%s3] %v405
    %s408 = scalar_lea.vmem %s0, 52
    %v409 = vld [vmem:[%s408] sm:%s3]
    %s410 = scalar_lea.vmem [#allocation1], 208
    %411 = vst [vmem:[%s410] sm:%s3] %v409
    %s412 = scalar_lea.vmem %s0, 50
    %v413 = vld [vmem:[%s412] sm:%s3]
    %s414 = scalar_lea.vmem [#allocation1], 200
    %415 = vst [vmem:[%s414] sm:%s3] %v413
    %s416 = scalar_lea.vmem %s0, 48
    %v417 = vld [vmem:[%s416] sm:%s3]
    %s418 = scalar_lea.vmem [#allocation1], 192
    %419 = vst [vmem:[%s418] sm:%s3] %v417
    %s420 = scalar_lea.vmem %s0, 46
    %v421 = vld [vmem:[%s420] sm:%s3]
    %s422 = scalar_lea.vmem [#allocation1], 184
    %423 = vst [vmem:[%s422] sm:%s3] %v421
    %s424 = scalar_lea.vmem %s0, 44
    %v425 = vld [vmem:[%s424] sm:%s3]
    %s426 = scalar_lea.vmem [#allocation1], 176
    %427 = vst [vmem:[%s426] sm:%s3] %v425
    %s428 = scalar_lea.vmem %s0, 42
    %v429 = vld [vmem:[%s428] sm:%s3]
    %s430 = scalar_lea.vmem [#allocation1], 168
    %431 = vst [vmem:[%s430] sm:%s3] %v429
    %s432 = scalar_lea.vmem %s0, 40
    %v433 = vld [vmem:[%s432] sm:%s3]
    %s434 = scalar_lea.vmem [#allocation1], 160
    %435 = vst [vmem:[%s434] sm:%s3] %v433
    %s436 = scalar_lea.vmem %s0, 38
    %v437 = vld [vmem:[%s436] sm:%s3]
    %s438 = scalar_lea.vmem [#allocation1], 152
    %439 = vst [vmem:[%s438] sm:%s3] %v437
    %s440 = scalar_lea.vmem %s0, 36
    %v441 = vld [vmem:[%s440] sm:%s3]
    %s442 = scalar_lea.vmem [#allocation1], 144
    %443 = vst [vmem:[%s442] sm:%s3] %v441
    %s444 = scalar_lea.vmem %s0, 34
    %v445 = vld [vmem:[%s444] sm:%s3]
    %s446 = scalar_lea.vmem [#allocation1], 136
    %447 = vst [vmem:[%s446] sm:%s3] %v445
    %s448 = scalar_lea.vmem %s0, 32
    %v449 = vld [vmem:[%s448] sm:%s3]
    %s450 = scalar_lea.vmem [#allocation1], 128
    %451 = vst [vmem:[%s450] sm:%s3] %v449
    %s452 = scalar_lea.vmem %s0, 30
    %v453 = vld [vmem:[%s452] sm:%s3]
    %s454 = scalar_lea.vmem [#allocation1], 120
    %455 = vst [vmem:[%s454] sm:%s3] %v453
    %s456 = scalar_lea.vmem %s0, 28
    %v457 = vld [vmem:[%s456] sm:%s3]
    %s458 = scalar_lea.vmem [#allocation1], 112
    %459 = vst [vmem:[%s458] sm:%s3] %v457
    %s460 = scalar_lea.vmem %s0, 26
    %v461 = vld [vmem:[%s460] sm:%s3]
    %s462 = scalar_lea.vmem [#allocation1], 104
    %463 = vst [vmem:[%s462] sm:%s3] %v461
    %s464 = scalar_lea.vmem %s0, 24
    %v465 = vld [vmem:[%s464] sm:%s3]
    %s466 = scalar_lea.vmem [#allocation1], 96
    %467 = vst [vmem:[%s466] sm:%s3] %v465
    %s468 = scalar_lea.vmem %s0, 22
    %v469 = vld [vmem:[%s468] sm:%s3]
    %s470 = scalar_lea.vmem [#allocation1], 88
    %471 = vst [vmem:[%s470] sm:%s3] %v469
    %s472 = scalar_lea.vmem %s0, 20
    %v473 = vld [vmem:[%s472] sm:%s3]
    %s474 = scalar_lea.vmem [#allocation1], 80
    %475 = vst [vmem:[%s474] sm:%s3] %v473
    %s476 = scalar_lea.vmem %s0, 18
    %v477 = vld [vmem:[%s476] sm:%s3]
    %s478 = scalar_lea.vmem [#allocation1], 72
    %479 = vst [vmem:[%s478] sm:%s3] %v477
    %s480 = scalar_lea.vmem %s0, 16
    %v481 = vld [vmem:[%s480] sm:%s3]
    %s482 = scalar_lea.vmem [#allocation1], 64
    %483 = vst [vmem:[%s482] sm:%s3] %v481
    %s484 = scalar_lea.vmem %s0, 14
    %v485 = vld [vmem:[%s484] sm:%s3]
    %s486 = scalar_lea.vmem [#allocation1], 56
    %487 = vst [vmem:[%s486] sm:%s3] %v485
    %s488 = scalar_lea.vmem %s0, 12
    %v489 = vld [vmem:[%s488] sm:%s3]
    %s490 = scalar_lea.vmem [#allocation1], 48
    %491 = vst [vmem:[%s490] sm:%s3] %v489
    %s492 = scalar_lea.vmem %s0, 10
    %v493 = vld [vmem:[%s492] sm:%s3]
    %s494 = scalar_lea.vmem [#allocation1], 40
    %495 = vst [vmem:[%s494] sm:%s3] %v493
    %s496 = scalar_lea.vmem %s0, 8
    %v497 = vld [vmem:[%s496] sm:%s3]
    %s498 = scalar_lea.vmem [#allocation1], 32
    %499 = vst [vmem:[%s498] sm:%s3] %v497
    %s500 = scalar_lea.vmem %s0, 6
    %v501 = vld [vmem:[%s500] sm:%s3]
    %s502 = scalar_lea.vmem [#allocation1], 24
    %503 = vst [vmem:[%s502] sm:%s3] %v501
    %s504 = scalar_lea.vmem %s0, 4
    %v505 = vld [vmem:[%s504] sm:%s3]
    %s506 = scalar_lea.vmem [#allocation1], 16
    %507 = vst [vmem:[%s506] sm:%s3] %v505
    %s508 = scalar_lea.vmem %s0, 2
    %v509 = vld [vmem:[%s508] sm:%s3]
    %s510 = scalar_lea.vmem [#allocation1], 8
    %511 = vst [vmem:[%s510] sm:%s3] %v509
    %v512 = vld [vmem:[%s0] sm:%s3]
    %513 = vst [vmem:[#allocation1] sm:%s3] %v512
    %v514 = vld [vmem:[#allocation1] sm:$0x1]
    %s515 = scalar_lea.vmem [#allocation1], 63
    %v516 = vld [vmem:[%s515] sm:$0x2]
    %vm517 = vcmask 1041409
    %v518 = vsel %vm517, %v516, %v514
    %s519 = scalar_lea.vmem [#allocation1], 126
    %v520 = vld [vmem:[%s519] sm:$0x4]
    %vm521 = vcmask 1042434
    %v522 = vsel %vm521, %v520, %v518
    %s523 = scalar_lea.vmem [#allocation1], 189
    %v524 = vld [vmem:[%s523] sm:$0x8]
    %vm525 = vcmask 1043459
    %v526 = vsel %vm525, %v524, %v522
    %s527 = scalar_lea.vmem [#allocation1], 252
    %v528 = vld [vmem:[%s527] sm:$0x10]
    %vm529 = vcmask 1044484
    %v530 = vsel %vm529, %v528, %v526
    %s531 = scalar_lea.vmem [#allocation1], 315
    %v532 = vld [vmem:[%s531] sm:$0x20]
    %vm533 = vcmask 1045509
    %v534 = vsel %vm533, %v532, %v530
    %s535 = scalar_lea.vmem [#allocation1], 378
    %v536 = vld [vmem:[%s535] sm:$0x40]
    %vm537 = vcmask 1046534
    %v538 = vsel %vm537, %v536, %v534
    %s539 = scalar_lea.vmem [#allocation1], 441
    %v540 = vld [vmem:[%s539] sm:$0x80]
    %vm541 = vcmask 1047559
    %v542 = vsel %vm541, %v540, %v538
    %vm543 = vcmask 64512
    %544 = vst.msk [vmem:[#allocation0] ss:$8 sm:$0x3] %vm543, %v542
    %s545 = scalar_lea.vmem [#allocation0], 4294967281
    %546 = vst.msk [vmem:[%s545] ss:$8 sm:$0xc] %vm543, %v542
    %s547 = scalar_lea.vmem [#allocation0], 4294967266
    %548 = vst.msk [vmem:[%s547] ss:$8 sm:$0x30] %vm543, %v542
    %s549 = scalar_lea.vmem [#allocation0], 4294967251
    %550 = vst.msk [vmem:[%s549] ss:$8 sm:$0xc0] %vm543, %v542
    %s551 = scalar_lea.vmem [#allocation1], 512
    %v552 = vld [vmem:[%s551] sm:$0x1]
    %s553 = scalar_lea.vmem [#allocation1], 575
    %v554 = vld [vmem:[%s553] sm:$0x2]
    %vm555 = vcmask 1041409
    %v556 = vsel %vm555, %v554, %v552
    %s557 = scalar_lea.vmem [#allocation1], 638
    %v558 = vld [vmem:[%s557] sm:$0x4]
    %vm559 = vcmask 1042434
    %v560 = vsel %vm559, %v558, %v556
    %s561 = scalar_lea.vmem [#allocation1], 701
    %v562 = vld [vmem:[%s561] sm:$0x8]
    %vm563 = vcmask 1043459
    %v564 = vsel %vm563, %v562, %v560
    %s565 = scalar_lea.vmem [#allocation1], 764
    %v566 = vld [vmem:[%s565] sm:$0x10]
    %vm567 = vcmask 1044484
    %v568 = vsel %vm567, %v566, %v564
    %s569 = scalar_lea.vmem [#allocation1], 827
    %v570 = vld [vmem:[%s569] sm:$0x20]
    %vm571 = vcmask 1045509
    %v572 = vsel %vm571, %v570, %v568
    %s573 = scalar_lea.vmem [#allocation1], 890
    %v574 = vld [vmem:[%s573] sm:$0x40]
    %vm575 = vcmask 1046534
    %v576 = vsel %vm575, %v574, %v572
    %s577 = scalar_lea.vmem [#allocation1], 953
    %v578 = vld [vmem:[%s577] sm:$0x80]
    %vm579 = vcmask 1047559
    %v580 = vsel %vm579, %v578, %v576
    %vm581 = vcmask 64512
    %s582 = scalar_lea.vmem [#allocation0], 16
    %583 = vst.msk [vmem:[%s582] ss:$8 sm:$0x3] %vm581, %v580
    %s584 = scalar_lea.vmem [#allocation0], 1
    %585 = vst.msk [vmem:[%s584] ss:$8 sm:$0xc] %vm581, %v580
    %s586 = scalar_lea.vmem [#allocation0], 4294967282
    %587 = vst.msk [vmem:[%s586] ss:$8 sm:$0x30] %vm581, %v580
    %s588 = scalar_lea.vmem [#allocation0], 4294967267
    %589 = vst.msk [vmem:[%s588] ss:$8 sm:$0xc0] %vm581, %v580
    %s590 = scalar_lea.vmem [#allocation1], 57
    %v591 = vld [vmem:[%s590] sm:$0x1]
    %s592 = scalar_lea.vmem [#allocation1], 184
    %v593 = vld [vmem:[%s592] sm:$0x2]
    %vm594 = vcmask 1041409
    %v595 = vsel %vm594, %v593, %v591
    %s596 = scalar_lea.vmem [#allocation1], 311
    %v597 = vld [vmem:[%s596] sm:$0x4]
    %vm598 = vcmask 1042434
    %v599 = vsel %vm598, %v597, %v595
    %s600 = scalar_lea.vmem [#allocation1], 438
    %v601 = vld [vmem:[%s600] sm:$0x8]
    %vm602 = vcmask 1043459
    %v603 = vsel %vm602, %v601, %v599
    %s604 = scalar_lea.vmem [#allocation1], 117
    %v605 = vld [vmem:[%s604] sm:$0x10]
    %vm606 = vcmask 1044484
    %v607 = vsel %vm606, %v605, %v603
    %s608 = scalar_lea.vmem [#allocation1], 244
    %v609 = vld [vmem:[%s608] sm:$0x20]
    %vm610 = vcmask 1045509
    %v611 = vsel %vm610, %v609, %v607
    %s612 = scalar_lea.vmem [#allocation1], 371
    %v613 = vld [vmem:[%s612] sm:$0x40]
    %vm614 = vcmask 1046534
    %v615 = vsel %vm614, %v613, %v611
    %s616 = scalar_lea.vmem [#allocation1], 498
    %v617 = vld [vmem:[%s616] sm:$0x80]
    %vm618 = vcmask 1047559
    %v619 = vsel %vm618, %v617, %v615
    %620 = vrot.lane.b32.xlu0 %v619, 120
    %v621 = vpop.permute.xlu0 %620
    %vm622 = vcmask 1048512
    %623 = vst.msk [vmem:[#allocation0] sm:$0xf] %vm622, %v621
    %s624 = scalar_lea.vmem [#allocation0], 4
    %625 = vst.msk [vmem:[%s624] sm:$0xf0] %vm622, %v621
    %s626 = scalar_lea.vmem [#allocation1], 569
    %v627 = vld [vmem:[%s626] sm:$0x1]
    %s628 = scalar_lea.vmem [#allocation1], 696
    %v629 = vld [vmem:[%s628] sm:$0x2]
    %vm630 = vcmask 1041409
    %v631 = vsel %vm630, %v629, %v627
    %s632 = scalar_lea.vmem [#allocation1], 823
    %v633 = vld [vmem:[%s632] sm:$0x4]
    %vm634 = vcmask 1042434
    %v635 = vsel %vm634, %v633, %v631
    %s636 = scalar_lea.vmem [#allocation1], 950
    %v637 = vld [vmem:[%s636] sm:$0x8]
    %vm638 = vcmask 1043459
    %v639 = vsel %vm638, %v637, %v635
    %s640 = scalar_lea.vmem [#allocation1], 629
    %v641 = vld [vmem:[%s640] sm:$0x10]
    %vm642 = vcmask 1044484
    %v643 = vsel %vm642, %v641, %v639
    %s644 = scalar_lea.vmem [#allocation1], 756
    %v645 = vld [vmem:[%s644] sm:$0x20]
    %vm646 = vcmask 1045509
    %v647 = vsel %vm646, %v645, %v643
    %s648 = scalar_lea.vmem [#allocation1], 883
    %v649 = vld [vmem:[%s648] sm:$0x40]
    %vm650 = vcmask 1046534
    %v651 = vsel %vm650, %v649, %v647
    %s652 = scalar_lea.vmem [#allocation1], 1010
    %v653 = vld [vmem:[%s652] sm:$0x80]
    %vm654 = vcmask 1047559
    %v655 = vsel %vm654, %v653, %v651
    %656 = vrot.lane.b32.xlu0 %v655, 120
    %v657 = vpop.permute.xlu0 %656
    %vm658 = vcmask 1048512
    %s659 = scalar_lea.vmem [#allocation0], 16
    %660 = vst.msk [vmem:[%s659] sm:$0xf] %vm658, %v657
    %s661 = scalar_lea.vmem [#allocation0], 20
    %662 = vst.msk [vmem:[%s661] sm:$0xf0] %vm658, %v657
    %s663 = scalar_lea.vmem [#allocation1], 56
    %v664 = vld [vmem:[%s663] sm:$0x1]
    %s665 = scalar_lea.vmem [#allocation1], 183
    %v666 = vld [vmem:[%s665] sm:$0x2]
    %vm667 = vcmask 1041409
    %v668 = vsel %vm667, %v666, %v664
    %s669 = scalar_lea.vmem [#allocation1], 310
    %v670 = vld [vmem:[%s669] sm:$0x4]
    %vm671 = vcmask 1042434
    %v672 = vsel %vm671, %v670, %v668
    %s673 = scalar_lea.vmem [#allocation1], 437
    %v674 = vld [vmem:[%s673] sm:$0x8]
    %vm675 = vcmask 1043459
    %v676 = vsel %vm675, %v674, %v672
    %s677 = scalar_lea.vmem [#allocation1], 116
    %v678 = vld [vmem:[%s677] sm:$0x10]
    %vm679 = vcmask 1044484
    %v680 = vsel %vm679, %v678, %v676
    %s681 = scalar_lea.vmem [#allocation1], 243
    %v682 = vld [vmem:[%s681] sm:$0x20]
    %vm683 = vcmask 1045509
    %v684 = vsel %vm683, %v682, %v680
    %s685 = scalar_lea.vmem [#allocation1], 370
    %v686 = vld [vmem:[%s685] sm:$0x40]
    %vm687 = vcmask 1046534
    %v688 = vsel %vm687, %v686, %v684
    %s689 = scalar_lea.vmem [#allocation1], 497
    %v690 = vld [vmem:[%s689] sm:$0x80]
    %vm691 = vcmask 1047559
    %v692 = vsel %vm691, %v690, %v688
    %693 = vrot.lane.b32.xlu0 %v692, 112
    %v694 = vpop.permute.xlu0 %693
    %vm695 = vcmask 982912
    %696 = vst.msk [vmem:[#allocation0] sm:$0xf] %vm695, %v694
    %s697 = scalar_lea.vmem [#allocation0], 4
    %698 = vst.msk [vmem:[%s697] sm:$0xf0] %vm695, %v694
    %s699 = scalar_lea.vmem [#allocation1], 568
    %v700 = vld [vmem:[%s699] sm:$0x1]
    %s701 = scalar_lea.vmem [#allocation1], 695
    %v702 = vld [vmem:[%s701] sm:$0x2]
    %vm703 = vcmask 1041409
    %v704 = vsel %vm703, %v702, %v700
    %s705 = scalar_lea.vmem [#allocation1], 822
    %v706 = vld [vmem:[%s705] sm:$0x4]
    %vm707 = vcmask 1042434
    %v708 = vsel %vm707, %v706, %v704
    %s709 = scalar_lea.vmem [#allocation1], 949
    %v710 = vld [vmem:[%s709] sm:$0x8]
    %vm711 = vcmask 1043459
    %v712 = vsel %vm711, %v710, %v708
    %s713 = scalar_lea.vmem [#allocation1], 628
    %v714 = vld [vmem:[%s713] sm:$0x10]
    %vm715 = vcmask 1044484
    %v716 = vsel %vm715, %v714, %v712
    %s717 = scalar_lea.vmem [#allocation1], 755
    %v718 = vld [vmem:[%s717] sm:$0x20]
    %vm719 = vcmask 1045509
    %v720 = vsel %vm719, %v718, %v716
    %s721 = scalar_lea.vmem [#allocation1], 882
    %v722 = vld [vmem:[%s721] sm:$0x40]
    %vm723 = vcmask 1046534
    %v724 = vsel %vm723, %v722, %v720
    %s725 = scalar_lea.vmem [#allocation1], 1009
    %v726 = vld [vmem:[%s725] sm:$0x80]
    %vm727 = vcmask 1047559
    %v728 = vsel %vm727, %v726, %v724
    %729 = vrot.lane.b32.xlu0 %v728, 112
    %v730 = vpop.permute.xlu0 %729
    %vm731 = vcmask 982912
    %s732 = scalar_lea.vmem [#allocation0], 16
    %733 = vst.msk [vmem:[%s732] sm:$0xf] %vm731, %v730
    %s734 = scalar_lea.vmem [#allocation0], 20
    %735 = vst.msk [vmem:[%s734] sm:$0xf0] %vm731, %v730
    %s736 = scalar_lea.vmem [#allocation1], 49
    %v737 = vld [vmem:[%s736] sm:$0x1]
    %s738 = scalar_lea.vmem [#allocation1], 176
    %v739 = vld [vmem:[%s738] sm:$0x2]
    %vm740 = vcmask 1041409
    %v741 = vsel %vm740, %v739, %v737
    %s742 = scalar_lea.vmem [#allocation1], 303
    %v743 = vld [vmem:[%s742] sm:$0x4]
    %vm744 = vcmask 1042434
    %v745 = vsel %vm744, %v743, %v741
    %s746 = scalar_lea.vmem [#allocation1], 430
    %v747 = vld [vmem:[%s746] sm:$0x8]
    %vm748 = vcmask 1043459
    %v749 = vsel %vm748, %v747, %v745
    %s750 = scalar_lea.vmem [#allocation1], 109
    %v751 = vld [vmem:[%s750] sm:$0x10]
    %vm752 = vcmask 1044484
    %v753 = vsel %vm752, %v751, %v749
    %s754 = scalar_lea.vmem [#allocation1], 236
    %v755 = vld [vmem:[%s754] sm:$0x20]
    %vm756 = vcmask 1045509
    %v757 = vsel %vm756, %v755, %v753
    %s758 = scalar_lea.vmem [#allocation1], 363
    %v759 = vld [vmem:[%s758] sm:$0x40]
    %vm760 = vcmask 1046534
    %v761 = vsel %vm760, %v759, %v757
    %s762 = scalar_lea.vmem [#allocation1], 490
    %v763 = vld [vmem:[%s762] sm:$0x80]
    %vm764 = vcmask 1047559
    %v765 = vsel %vm764, %v763, %v761
    %766 = vrot.lane.b32.xlu0 %v765, 104
    %v767 = vpop.permute.xlu0 %766
    %vm768 = vcmask 917312
    %769 = vst.msk [vmem:[#allocation0] sm:$0xf] %vm768, %v767
    %s770 = scalar_lea.vmem [#allocation0], 4
    %771 = vst.msk [vmem:[%s770] sm:$0xf0] %vm768, %v767
    %s772 = scalar_lea.vmem [#allocation1], 561
    %v773 = vld [vmem:[%s772] sm:$0x1]
    %s774 = scalar_lea.vmem [#allocation1], 688
    %v775 = vld [vmem:[%s774] sm:$0x2]
    %vm776 = vcmask 1041409
    %v777 = vsel %vm776, %v775, %v773
    %s778 = scalar_lea.vmem [#allocation1], 815
    %v779 = vld [vmem:[%s778] sm:$0x4]
    %vm780 = vcmask 1042434
    %v781 = vsel %vm780, %v779, %v777
    %s782 = scalar_lea.vmem [#allocation1], 942
    %v783 = vld [vmem:[%s782] sm:$0x8]
    %vm784 = vcmask 1043459
    %v785 = vsel %vm784, %v783, %v781
    %s786 = scalar_lea.vmem [#allocation1], 621
    %v787 = vld [vmem:[%s786] sm:$0x10]
    %vm788 = vcmask 1044484
    %v789 = vsel %vm788, %v787, %v785
    %s790 = scalar_lea.vmem [#allocation1], 748
    %v791 = vld [vmem:[%s790] sm:$0x20]
    %vm792 = vcmask 1045509
    %v793 = vsel %vm792, %v791, %v789
    %s794 = scalar_lea.vmem [#allocation1], 875
    %v795 = vld [vmem:[%s794] sm:$0x40]
    %vm796 = vcmask 1046534
    %v797 = vsel %vm796, %v795, %v793
    %s798 = scalar_lea.vmem [#allocation1], 1002
    %v799 = vld [vmem:[%s798] sm:$0x80]
    %vm800 = vcmask 1047559
    %v801 = vsel %vm800, %v799, %v797
    %802 = vrot.lane.b32.xlu0 %v801, 104
    %v803 = vpop.permute.xlu0 %802
    %vm804 = vcmask 917312
    %s805 = scalar_lea.vmem [#allocation0], 16
    %806 = vst.msk [vmem:[%s805] sm:$0xf] %vm804, %v803
    %s807 = scalar_lea.vmem [#allocation0], 20
    %808 = vst.msk [vmem:[%s807] sm:$0xf0] %vm804, %v803
    %s809 = scalar_lea.vmem [#allocation1], 48
    %v810 = vld [vmem:[%s809] sm:$0x1]
    %s811 = scalar_lea.vmem [#allocation1], 175
    %v812 = vld [vmem:[%s811] sm:$0x2]
    %vm813 = vcmask 1041409
    %v814 = vsel %vm813, %v812, %v810
    %s815 = scalar_lea.vmem [#allocation1], 302
    %v816 = vld [vmem:[%s815] sm:$0x4]
    %vm817 = vcmask 1042434
    %v818 = vsel %vm817, %v816, %v814
    %s819 = scalar_lea.vmem [#allocation1], 429
    %v820 = vld [vmem:[%s819] sm:$0x8]
    %vm821 = vcmask 1043459
    %v822 = vsel %vm821, %v820, %v818
    %s823 = scalar_lea.vmem [#allocation1], 108
    %v824 = vld [vmem:[%s823] sm:$0x10]
    %vm825 = vcmask 1044484
    %v826 = vsel %vm825, %v824, %v822
    %s827 = scalar_lea.vmem [#allocation1], 235
    %v828 = vld [vmem:[%s827] sm:$0x20]
    %vm829 = vcmask 1045509
    %v830 = vsel %vm829, %v828, %v826
    %s831 = scalar_lea.vmem [#allocation1], 362
    %v832 = vld [vmem:[%s831] sm:$0x40]
    %vm833 = vcmask 1046534
    %v834 = vsel %vm833, %v832, %v830
    %s835 = scalar_lea.vmem [#allocation1], 489
    %v836 = vld [vmem:[%s835] sm:$0x80]
    %vm837 = vcmask 1047559
    %v838 = vsel %vm837, %v836, %v834
    %839 = vrot.lane.b32.xlu0 %v838, 96
    %v840 = vpop.permute.xlu0 %839
    %vm841 = vcmask 851712
    %842 = vst.msk [vmem:[#allocation0] sm:$0xf] %vm841, %v840
    %s843 = scalar_lea.vmem [#allocation0], 4
    %844 = vst.msk [vmem:[%s843] sm:$0xf0] %vm841, %v840
    %s845 = scalar_lea.vmem [#allocation1], 560
    %v846 = vld [vmem:[%s845] sm:$0x1]
    %s847 = scalar_lea.vmem [#allocation1], 687
    %v848 = vld [vmem:[%s847] sm:$0x2]
    %vm849 = vcmask 1041409
    %v850 = vsel %vm849, %v848, %v846
    %s851 = scalar_lea.vmem [#allocation1], 814
    %v852 = vld [vmem:[%s851] sm:$0x4]
    %vm853 = vcmask 1042434
    %v854 = vsel %vm853, %v852, %v850
    %s855 = scalar_lea.vmem [#allocation1], 941
    %v856 = vld [vmem:[%s855] sm:$0x8]
    %vm857 = vcmask 1043459
    %v858 = vsel %vm857, %v856, %v854
    %s859 = scalar_lea.vmem [#allocation1], 620
    %v860 = vld [vmem:[%s859] sm:$0x10]
    %vm861 = vcmask 1044484
    %v862 = vsel %vm861, %v860, %v858
    %s863 = scalar_lea.vmem [#allocation1], 747
    %v864 = vld [vmem:[%s863] sm:$0x20]
    %vm865 = vcmask 1045509
    %v866 = vsel %vm865, %v864, %v862
    %s867 = scalar_lea.vmem [#allocation1], 874
    %v868 = vld [vmem:[%s867] sm:$0x40]
    %vm869 = vcmask 1046534
    %v870 = vsel %vm869, %v868, %v866
    %s871 = scalar_lea.vmem [#allocation1], 1001
    %v872 = vld [vmem:[%s871] sm:$0x80]
    %vm873 = vcmask 1047559
    %v874 = vsel %vm873, %v872, %v870
    %875 = vrot.lane.b32.xlu0 %v874, 96
    %v876 = vpop.permute.xlu0 %875
    %vm877 = vcmask 851712
    %s878 = scalar_lea.vmem [#allocation0], 16
    %879 = vst.msk [vmem:[%s878] sm:$0xf] %vm877, %v876
    %s880 = scalar_lea.vmem [#allocation0], 20
    %881 = vst.msk [vmem:[%s880] sm:$0xf0] %vm877, %v876
    %s882 = scalar_lea.vmem [#allocation1], 41
    %v883 = vld [vmem:[%s882] sm:$0x1]
    %s884 = scalar_lea.vmem [#allocation1], 168
    %v885 = vld [vmem:[%s884] sm:$0x2]
    %vm886 = vcmask 1041409
    %v887 = vsel %vm886, %v885, %v883
    %s888 = scalar_lea.vmem [#allocation1], 295
    %v889 = vld [vmem:[%s888] sm:$0x4]
    %vm890 = vcmask 1042434
    %v891 = vsel %vm890, %v889, %v887
    %s892 = scalar_lea.vmem [#allocation1], 422
    %v893 = vld [vmem:[%s892] sm:$0x8]
    %vm894 = vcmask 1043459
    %v895 = vsel %vm894, %v893, %v891
    %s896 = scalar_lea.vmem [#allocation1], 101
    %v897 = vld [vmem:[%s896] sm:$0x10]
    %vm898 = vcmask 1044484
    %v899 = vsel %vm898, %v897, %v895
    %s900 = scalar_lea.vmem [#allocation1], 228
    %v901 = vld [vmem:[%s900] sm:$0x20]
    %vm902 = vcmask 1045509
    %v903 = vsel %vm902, %v901, %v899
    %s904 = scalar_lea.vmem [#allocation1], 355
    %v905 = vld [vmem:[%s904] sm:$0x40]
    %vm906 = vcmask 1046534
    %v907 = vsel %vm906, %v905, %v903
    %s908 = scalar_lea.vmem [#allocation1], 482
    %v909 = vld [vmem:[%s908] sm:$0x80]
    %vm910 = vcmask 1047559
    %v911 = vsel %vm910, %v909, %v907
    %912 = vrot.lane.b32.xlu0 %v911, 88
    %v913 = vpop.permute.xlu0 %912
    %vm914 = vcmask 786112
    %915 = vst.msk [vmem:[#allocation0] sm:$0xf] %vm914, %v913
    %s916 = scalar_lea.vmem [#allocation0], 4
    %917 = vst.msk [vmem:[%s916] sm:$0xf0] %vm914, %v913
    %s918 = scalar_lea.vmem [#allocation1], 553
    %v919 = vld [vmem:[%s918] sm:$0x1]
    %s920 = scalar_lea.vmem [#allocation1], 680
    %v921 = vld [vmem:[%s920] sm:$0x2]
    %vm922 = vcmask 1041409
    %v923 = vsel %vm922, %v921, %v919
    %s924 = scalar_lea.vmem [#allocation1], 807
    %v925 = vld [vmem:[%s924] sm:$0x4]
    %vm926 = vcmask 1042434
    %v927 = vsel %vm926, %v925, %v923
    %s928 = scalar_lea.vmem [#allocation1], 934
    %v929 = vld [vmem:[%s928] sm:$0x8]
    %vm930 = vcmask 1043459
    %v931 = vsel %vm930, %v929, %v927
    %s932 = scalar_lea.vmem [#allocation1], 613
    %v933 = vld [vmem:[%s932] sm:$0x10]
    %vm934 = vcmask 1044484
    %v935 = vsel %vm934, %v933, %v931
    %s936 = scalar_lea.vmem [#allocation1], 740
    %v937 = vld [vmem:[%s936] sm:$0x20]
    %vm938 = vcmask 1045509
    %v939 = vsel %vm938, %v937, %v935
    %s940 = scalar_lea.vmem [#allocation1], 867
    %v941 = vld [vmem:[%s940] sm:$0x40]
    %vm942 = vcmask 1046534
    %v943 = vsel %vm942, %v941, %v939
    %s944 = scalar_lea.vmem [#allocation1], 994
    %v945 = vld [vmem:[%s944] sm:$0x80]
    %vm946 = vcmask 1047559
    %v947 = vsel %vm946, %v945, %v943
    %948 = vrot.lane.b32.xlu0 %v947, 88
    %v949 = vpop.permute.xlu0 %948
    %vm950 = vcmask 786112
    %s951 = scalar_lea.vmem [#allocation0], 16
    %952 = vst.msk [vmem:[%s951] sm:$0xf] %vm950, %v949
    %s953 = scalar_lea.vmem [#allocation0], 20
    %954 = vst.msk [vmem:[%s953] sm:$0xf0] %vm950, %v949
    %s955 = scalar_lea.vmem [#allocation1], 40
    %v956 = vld [vmem:[%s955] sm:$0x1]
    %s957 = scalar_lea.vmem [#allocation1], 167
    %v958 = vld [vmem:[%s957] sm:$0x2]
    %vm959 = vcmask 1041409
    %v960 = vsel %vm959, %v958, %v956
    %s961 = scalar_lea.vmem [#allocation1], 294
    %v962 = vld [vmem:[%s961] sm:$0x4]
    %vm963 = vcmask 1042434
    %v964 = vsel %vm963, %v962, %v960
    %s965 = scalar_lea.vmem [#allocation1], 421
    %v966 = vld [vmem:[%s965] sm:$0x8]
    %vm967 = vcmask 1043459
    %v968 = vsel %vm967, %v966, %v964
    %s969 = scalar_lea.vmem [#allocation1], 100
    %v970 = vld [vmem:[%s969] sm:$0x10]
    %vm971 = vcmask 1044484
    %v972 = vsel %vm971, %v970, %v968
    %s973 = scalar_lea.vmem [#allocation1], 227
    %v974 = vld [vmem:[%s973] sm:$0x20]
    %vm975 = vcmask 1045509
    %v976 = vsel %vm975, %v974, %v972
    %s977 = scalar_lea.vmem [#allocation1], 354
    %v978 = vld [vmem:[%s977] sm:$0x40]
    %vm979 = vcmask 1046534
    %v980 = vsel %vm979, %v978, %v976
    %s981 = scalar_lea.vmem [#allocation1], 481
    %v982 = vld [vmem:[%s981] sm:$0x80]
    %vm983 = vcmask 1047559
    %v984 = vsel %vm983, %v982, %v980
    %985 = vrot.lane.b32.xlu0 %v984, 80
    %v986 = vpop.permute.xlu0 %985
    %vm987 = vcmask 720512
    %988 = vst.msk [vmem:[#allocation0] sm:$0xf] %vm987, %v986
    %s989 = scalar_lea.vmem [#allocation0], 4
    %990 = vst.msk [vmem:[%s989] sm:$0xf0] %vm987, %v986
    %s991 = scalar_lea.vmem [#allocation1], 552
    %v992 = vld [vmem:[%s991] sm:$0x1]
    %s993 = scalar_lea.vmem [#allocation1], 679
    %v994 = vld [vmem:[%s993] sm:$0x2]
    %vm995 = vcmask 1041409
    %v996 = vsel %vm995, %v994, %v992
    %s997 = scalar_lea.vmem [#allocation1], 806
    %v998 = vld [vmem:[%s997] sm:$0x4]
    %vm999 = vcmask 1042434
    %v1000 = vsel %vm999, %v998, %v996
    %s1001 = scalar_lea.vmem [#allocation1], 933
    %v1002 = vld [vmem:[%s1001] sm:$0x8]
    %vm1003 = vcmask 1043459
    %v1004 = vsel %vm1003, %v1002, %v1000
    %s1005 = scalar_lea.vmem [#allocation1], 612
    %v1006 = vld [vmem:[%s1005] sm:$0x10]
    %vm1007 = vcmask 1044484
    %v1008 = vsel %vm1007, %v1006, %v1004
    %s1009 = scalar_lea.vmem [#allocation1], 739
    %v1010 = vld [vmem:[%s1009] sm:$0x20]
    %vm1011 = vcmask 1045509
    %v1012 = vsel %vm1011, %v1010, %v1008
    %s1013 = scalar_lea.vmem [#allocation1], 866
    %v1014 = vld [vmem:[%s1013] sm:$0x40]
    %vm1015 = vcmask 1046534
    %v1016 = vsel %vm1015, %v1014, %v1012
    %s1017 = scalar_lea.vmem [#allocation1], 993
    %v1018 = vld [vmem:[%s1017] sm:$0x80]
    %vm1019 = vcmask 1047559
    %v1020 = vsel %vm1019, %v1018, %v1016
    %1021 = vrot.lane.b32.xlu0 %v1020, 80
    %v1022 = vpop.permute.xlu0 %1021
    %vm1023 = vcmask 720512
    %s1024 = scalar_lea.vmem [#allocation0], 16
    %1025 = vst.msk [vmem:[%s1024] sm:$0xf] %vm1023, %v1022
    %s1026 = scalar_lea.vmem [#allocation0], 20
    %1027 = vst.msk [vmem:[%s1026] sm:$0xf0] %vm1023, %v1022
    %s1028 = scalar_lea.vmem [#allocation1], 33
    %v1029 = vld [vmem:[%s1028] sm:$0x1]
    %s1030 = scalar_lea.vmem [#allocation1], 160
    %v1031 = vld [vmem:[%s1030] sm:$0x2]
    %vm1032 = vcmask 1041409
    %v1033 = vsel %vm1032, %v1031, %v1029
    %s1034 = scalar_lea.vmem [#allocation1], 287
    %v1035 = vld [vmem:[%s1034] sm:$0x4]
    %vm1036 = vcmask 1042434
    %v1037 = vsel %vm1036, %v1035, %v1033
    %s1038 = scalar_lea.vmem [#allocation1], 414
    %v1039 = vld [vmem:[%s1038] sm:$0x8]
    %vm1040 = vcmask 1043459
    %v1041 = vsel %vm1040, %v1039, %v1037
    %s1042 = scalar_lea.vmem [#allocation1], 93
    %v1043 = vld [vmem:[%s1042] sm:$0x10]
    %vm1044 = vcmask 1044484
    %v1045 = vsel %vm1044, %v1043, %v1041
    %s1046 = scalar_lea.vmem [#allocation1], 220
    %v1047 = vld [vmem:[%s1046] sm:$0x20]
    %vm1048 = vcmask 1045509
    %v1049 = vsel %vm1048, %v1047, %v1045
    %s1050 = scalar_lea.vmem [#allocation1], 347
    %v1051 = vld [vmem:[%s1050] sm:$0x40]
    %vm1052 = vcmask 1046534
    %v1053 = vsel %vm1052, %v1051, %v1049
    %s1054 = scalar_lea.vmem [#allocation1], 474
    %v1055 = vld [vmem:[%s1054] sm:$0x80]
    %vm1056 = vcmask 1047559
    %v1057 = vsel %vm1056, %v1055, %v1053
    %1058 = vrot.lane.b32.xlu0 %v1057, 72
    %v1059 = vpop.permute.xlu0 %1058
    %vm1060 = vcmask 654912
    %1061 = vst.msk [vmem:[#allocation0] sm:$0xf] %vm1060, %v1059
    %s1062 = scalar_lea.vmem [#allocation0], 4
    %1063 = vst.msk [vmem:[%s1062] sm:$0xf0] %vm1060, %v1059
    %s1064 = scalar_lea.vmem [#allocation1], 545
    %v1065 = vld [vmem:[%s1064] sm:$0x1]
    %s1066 = scalar_lea.vmem [#allocation1], 672
    %v1067 = vld [vmem:[%s1066] sm:$0x2]
    %vm1068 = vcmask 1041409
    %v1069 = vsel %vm1068, %v1067, %v1065
    %s1070 = scalar_lea.vmem [#allocation1], 799
    %v1071 = vld [vmem:[%s1070] sm:$0x4]
    %vm1072 = vcmask 1042434
    %v1073 = vsel %vm1072, %v1071, %v1069
    %s1074 = scalar_lea.vmem [#allocation1], 926
    %v1075 = vld [vmem:[%s1074] sm:$0x8]
    %vm1076 = vcmask 1043459
    %v1077 = vsel %vm1076, %v1075, %v1073
    %s1078 = scalar_lea.vmem [#allocation1], 605
    %v1079 = vld [vmem:[%s1078] sm:$0x10]
    %vm1080 = vcmask 1044484
    %v1081 = vsel %vm1080, %v1079, %v1077
    %s1082 = scalar_lea.vmem [#allocation1], 732
    %v1083 = vld [vmem:[%s1082] sm:$0x20]
    %vm1084 = vcmask 1045509
    %v1085 = vsel %vm1084, %v1083, %v1081
    %s1086 = scalar_lea.vmem [#allocation1], 859
    %v1087 = vld [vmem:[%s1086] sm:$0x40]
    %vm1088 = vcmask 1046534
    %v1089 = vsel %vm1088, %v1087, %v1085
    %s1090 = scalar_lea.vmem [#allocation1], 986
    %v1091 = vld [vmem:[%s1090] sm:$0x80]
    %vm1092 = vcmask 1047559
    %v1093 = vsel %vm1092, %v1091, %v1089
    %1094 = vrot.lane.b32.xlu0 %v1093, 72
    %v1095 = vpop.permute.xlu0 %1094
    %vm1096 = vcmask 654912
    %s1097 = scalar_lea.vmem [#allocation0], 16
    %1098 = vst.msk [vmem:[%s1097] sm:$0xf] %vm1096, %v1095
    %s1099 = scalar_lea.vmem [#allocation0], 20
    %1100 = vst.msk [vmem:[%s1099] sm:$0xf0] %vm1096, %v1095
    %s1101 = scalar_lea.vmem [#allocation1], 32
    %v1102 = vld [vmem:[%s1101] sm:$0x1]
    %s1103 = scalar_lea.vmem [#allocation1], 159
    %v1104 = vld [vmem:[%s1103] sm:$0x2]
    %vm1105 = vcmask 1041409
    %v1106 = vsel %vm1105, %v1104, %v1102
    %s1107 = scalar_lea.vmem [#allocation1], 286
    %v1108 = vld [vmem:[%s1107] sm:$0x4]
    %vm1109 = vcmask 1042434
    %v1110 = vsel %vm1109, %v1108, %v1106
    %s1111 = scalar_lea.vmem [#allocation1], 413
    %v1112 = vld [vmem:[%s1111] sm:$0x8]
    %vm1113 = vcmask 1043459
    %v1114 = vsel %vm1113, %v1112, %v1110
    %s1115 = scalar_lea.vmem [#allocation1], 92
    %v1116 = vld [vmem:[%s1115] sm:$0x10]
    %vm1117 = vcmask 1044484
    %v1118 = vsel %vm1117, %v1116, %v1114
    %s1119 = scalar_lea.vmem [#allocation1], 219
    %v1120 = vld [vmem:[%s1119] sm:$0x20]
    %vm1121 = vcmask 1045509
    %v1122 = vsel %vm1121, %v1120, %v1118
    %s1123 = scalar_lea.vmem [#allocation1], 346
    %v1124 = vld [vmem:[%s1123] sm:$0x40]
    %vm1125 = vcmask 1046534
    %v1126 = vsel %vm1125, %v1124, %v1122
    %s1127 = scalar_lea.vmem [#allocation1], 473
    %v1128 = vld [vmem:[%s1127] sm:$0x80]
    %vm1129 = vcmask 1047559
    %v1130 = vsel %vm1129, %v1128, %v1126
    %1131 = vrot.lane.b32.xlu0 %v1130, 64
    %v1132 = vpop.permute.xlu0 %1131
    %vm1133 = vcmask 589312
    %1134 = vst.msk [vmem:[#allocation0] sm:$0xf] %vm1133, %v1132
    %s1135 = scalar_lea.vmem [#allocation0], 4
    %1136 = vst.msk [vmem:[%s1135] sm:$0xf0] %vm1133, %v1132
    %s1137 = scalar_lea.vmem [#allocation1], 544
    %v1138 = vld [vmem:[%s1137] sm:$0x1]
    %s1139 = scalar_lea.vmem [#allocation1], 671
    %v1140 = vld [vmem:[%s1139] sm:$0x2]
    %vm1141 = vcmask 1041409
    %v1142 = vsel %vm1141, %v1140, %v1138
    %s1143 = scalar_lea.vmem [#allocation1], 798
    %v1144 = vld [vmem:[%s1143] sm:$0x4]
    %vm1145 = vcmask 1042434
    %v1146 = vsel %vm1145, %v1144, %v1142
    %s1147 = scalar_lea.vmem [#allocation1], 925
    %v1148 = vld [vmem:[%s1147] sm:$0x8]
    %vm1149 = vcmask 1043459
    %v1150 = vsel %vm1149, %v1148, %v1146
    %s1151 = scalar_lea.vmem [#allocation1], 604
    %v1152 = vld [vmem:[%s1151] sm:$0x10]
    %vm1153 = vcmask 1044484
    %v1154 = vsel %vm1153, %v1152, %v1150
    %s1155 = scalar_lea.vmem [#allocation1], 731
    %v1156 = vld [vmem:[%s1155] sm:$0x20]
    %vm1157 = vcmask 1045509
    %v1158 = vsel %vm1157, %v1156, %v1154
    %s1159 = scalar_lea.vmem [#allocation1], 858
    %v1160 = vld [vmem:[%s1159] sm:$0x40]
    %vm1161 = vcmask 1046534
    %v1162 = vsel %vm1161, %v1160, %v1158
    %s1163 = scalar_lea.vmem [#allocation1], 985
    %v1164 = vld [vmem:[%s1163] sm:$0x80]
    %vm1165 = vcmask 1047559
    %v1166 = vsel %vm1165, %v1164, %v1162
    %1167 = vrot.lane.b32.xlu0 %v1166, 64
    %v1168 = vpop.permute.xlu0 %1167
    %vm1169 = vcmask 589312
    %s1170 = scalar_lea.vmem [#allocation0], 16
    %1171 = vst.msk [vmem:[%s1170] sm:$0xf] %vm1169, %v1168
    %s1172 = scalar_lea.vmem [#allocation0], 20
    %1173 = vst.msk [vmem:[%s1172] sm:$0xf0] %vm1169, %v1168
    %s1174 = scalar_lea.vmem [#allocation1], 25
    %v1175 = vld [vmem:[%s1174] sm:$0x1]
    %s1176 = scalar_lea.vmem [#allocation1], 152
    %v1177 = vld [vmem:[%s1176] sm:$0x2]
    %vm1178 = vcmask 1041409
    %v1179 = vsel %vm1178, %v1177, %v1175
    %s1180 = scalar_lea.vmem [#allocation1], 279
    %v1181 = vld [vmem:[%s1180] sm:$0x4]
    %vm1182 = vcmask 1042434
    %v1183 = vsel %vm1182, %v1181, %v1179
    %s1184 = scalar_lea.vmem [#allocation1], 406
    %v1185 = vld [vmem:[%s1184] sm:$0x8]
    %vm1186 = vcmask 1043459
    %v1187 = vsel %vm1186, %v1185, %v1183
    %s1188 = scalar_lea.vmem [#allocation1], 85
    %v1189 = vld [vmem:[%s1188] sm:$0x10]
    %vm1190 = vcmask 1044484
    %v1191 = vsel %vm1190, %v1189, %v1187
    %s1192 = scalar_lea.vmem [#allocation1], 212
    %v1193 = vld [vmem:[%s1192] sm:$0x20]
    %vm1194 = vcmask 1045509
    %v1195 = vsel %vm1194, %v1193, %v1191
    %s1196 = scalar_lea.vmem [#allocation1], 339
    %v1197 = vld [vmem:[%s1196] sm:$0x40]
    %vm1198 = vcmask 1046534
    %v1199 = vsel %vm1198, %v1197, %v1195
    %s1200 = scalar_lea.vmem [#allocation1], 466
    %v1201 = vld [vmem:[%s1200] sm:$0x80]
    %vm1202 = vcmask 1047559
    %v1203 = vsel %vm1202, %v1201, %v1199
    %1204 = vrot.lane.b32.xlu0 %v1203, 56
    %v1205 = vpop.permute.xlu0 %1204
    %vm1206 = vcmask 523712
    %1207 = vst.msk [vmem:[#allocation0] sm:$0xf] %vm1206, %v1205
    %s1208 = scalar_lea.vmem [#allocation0], 4
    %1209 = vst.msk [vmem:[%s1208] sm:$0xf0] %vm1206, %v1205
    %s1210 = scalar_lea.vmem [#allocation1], 537
    %v1211 = vld [vmem:[%s1210] sm:$0x1]
    %s1212 = scalar_lea.vmem [#allocation1], 664
    %v1213 = vld [vmem:[%s1212] sm:$0x2]
    %vm1214 = vcmask 1041409
    %v1215 = vsel %vm1214, %v1213, %v1211
    %s1216 = scalar_lea.vmem [#allocation1], 791
    %v1217 = vld [vmem:[%s1216] sm:$0x4]
    %vm1218 = vcmask 1042434
    %v1219 = vsel %vm1218, %v1217, %v1215
    %s1220 = scalar_lea.vmem [#allocation1], 918
    %v1221 = vld [vmem:[%s1220] sm:$0x8]
    %vm1222 = vcmask 1043459
    %v1223 = vsel %vm1222, %v1221, %v1219
    %s1224 = scalar_lea.vmem [#allocation1], 597
    %v1225 = vld [vmem:[%s1224] sm:$0x10]
    %vm1226 = vcmask 1044484
    %v1227 = vsel %vm1226, %v1225, %v1223
    %s1228 = scalar_lea.vmem [#allocation1], 724
    %v1229 = vld [vmem:[%s1228] sm:$0x20]
    %vm1230 = vcmask 1045509
    %v1231 = vsel %vm1230, %v1229, %v1227
    %s1232 = scalar_lea.vmem [#allocation1], 851
    %v1233 = vld [vmem:[%s1232] sm:$0x40]
    %vm1234 = vcmask 1046534
    %v1235 = vsel %vm1234, %v1233, %v1231
    %s1236 = scalar_lea.vmem [#allocation1], 978
    %v1237 = vld [vmem:[%s1236] sm:$0x80]
    %vm1238 = vcmask 1047559
    %v1239 = vsel %vm1238, %v1237, %v1235
    %1240 = vrot.lane.b32.xlu0 %v1239, 56
    %v1241 = vpop.permute.xlu0 %1240
    %vm1242 = vcmask 523712
    %s1243 = scalar_lea.vmem [#allocation0], 16
    %1244 = vst.msk [vmem:[%s1243] sm:$0xf] %vm1242, %v1241
    %s1245 = scalar_lea.vmem [#allocation0], 20
    %1246 = vst.msk [vmem:[%s1245] sm:$0xf0] %vm1242, %v1241
    %s1247 = scalar_lea.vmem [#allocation1], 24
    %v1248 = vld [vmem:[%s1247] sm:$0x1]
    %s1249 = scalar_lea.vmem [#allocation1], 151
    %v1250 = vld [vmem:[%s1249] sm:$0x2]
    %vm1251 = vcmask 1041409
    %v1252 = vsel %vm1251, %v1250, %v1248
    %s1253 = scalar_lea.vmem [#allocation1], 278
    %v1254 = vld [vmem:[%s1253] sm:$0x4]
    %vm1255 = vcmask 1042434
    %v1256 = vsel %vm1255, %v1254, %v1252
    %s1257 = scalar_lea.vmem [#allocation1], 405
    %v1258 = vld [vmem:[%s1257] sm:$0x8]
    %vm1259 = vcmask 1043459
    %v1260 = vsel %vm1259, %v1258, %v1256
    %s1261 = scalar_lea.vmem [#allocation1], 84
    %v1262 = vld [vmem:[%s1261] sm:$0x10]
    %vm1263 = vcmask 1044484
    %v1264 = vsel %vm1263, %v1262, %v1260
    %s1265 = scalar_lea.vmem [#allocation1], 211
    %v1266 = vld [vmem:[%s1265] sm:$0x20]
    %vm1267 = vcmask 1045509
    %v1268 = vsel %vm1267, %v1266, %v1264
    %s1269 = scalar_lea.vmem [#allocation1], 338
    %v1270 = vld [vmem:[%s1269] sm:$0x40]
    %vm1271 = vcmask 1046534
    %v1272 = vsel %vm1271, %v1270, %v1268
    %s1273 = scalar_lea.vmem [#allocation1], 465
    %v1274 = vld [vmem:[%s1273] sm:$0x80]
    %vm1275 = vcmask 1047559
    %v1276 = vsel %vm1275, %v1274, %v1272
    %1277 = vrot.lane.b32.xlu0 %v1276, 48
    %v1278 = vpop.permute.xlu0 %1277
    %vm1279 = vcmask 458112
    %1280 = vst.msk [vmem:[#allocation0] sm:$0xf] %vm1279, %v1278
    %s1281 = scalar_lea.vmem [#allocation0], 4
    %1282 = vst.msk [vmem:[%s1281] sm:$0xf0] %vm1279, %v1278
    %s1283 = scalar_lea.vmem [#allocation1], 536
    %v1284 = vld [vmem:[%s1283] sm:$0x1]
    %s1285 = scalar_lea.vmem [#allocation1], 663
    %v1286 = vld [vmem:[%s1285] sm:$0x2]
    %vm1287 = vcmask 1041409
    %v1288 = vsel %vm1287, %v1286, %v1284
    %s1289 = scalar_lea.vmem [#allocation1], 790
    %v1290 = vld [vmem:[%s1289] sm:$0x4]
    %vm1291 = vcmask 1042434
    %v1292 = vsel %vm1291, %v1290, %v1288
    %s1293 = scalar_lea.vmem [#allocation1], 917
    %v1294 = vld [vmem:[%s1293] sm:$0x8]
    %vm1295 = vcmask 1043459
    %v1296 = vsel %vm1295, %v1294, %v1292
    %s1297 = scalar_lea.vmem [#allocation1], 596
    %v1298 = vld [vmem:[%s1297] sm:$0x10]
    %vm1299 = vcmask 1044484
    %v1300 = vsel %vm1299, %v1298, %v1296
    %s1301 = scalar_lea.vmem [#allocation1], 723
    %v1302 = vld [vmem:[%s1301] sm:$0x20]
    %vm1303 = vcmask 1045509
    %v1304 = vsel %vm1303, %v1302, %v1300
    %s1305 = scalar_lea.vmem [#allocation1], 850
    %v1306 = vld [vmem:[%s1305] sm:$0x40]
    %vm1307 = vcmask 1046534
    %v1308 = vsel %vm1307, %v1306, %v1304
    %s1309 = scalar_lea.vmem [#allocation1], 977
    %v1310 = vld [vmem:[%s1309] sm:$0x80]
    %vm1311 = vcmask 1047559
    %v1312 = vsel %vm1311, %v1310, %v1308
    %1313 = vrot.lane.b32.xlu0 %v1312, 48
    %v1314 = vpop.permute.xlu0 %1313
    %vm1315 = vcmask 458112
    %s1316 = scalar_lea.vmem [#allocation0], 16
    %1317 = vst.msk [vmem:[%s1316] sm:$0xf] %vm1315, %v1314
    %s1318 = scalar_lea.vmem [#allocation0], 20
    %1319 = vst.msk [vmem:[%s1318] sm:$0xf0] %vm1315, %v1314
    %s1320 = scalar_lea.vmem [#allocation1], 17
    %v1321 = vld [vmem:[%s1320] sm:$0x1]
    %s1322 = scalar_lea.vmem [#allocation1], 144
    %v1323 = vld [vmem:[%s1322] sm:$0x2]
    %vm1324 = vcmask 1041409
    %v1325 = vsel %vm1324, %v1323, %v1321
    %s1326 = scalar_lea.vmem [#allocation1], 271
    %v1327 = vld [vmem:[%s1326] sm:$0x4]
    %vm1328 = vcmask 1042434
    %v1329 = vsel %vm1328, %v1327, %v1325
    %s1330 = scalar_lea.vmem [#allocation1], 398
    %v1331 = vld [vmem:[%s1330] sm:$0x8]
    %vm1332 = vcmask 1043459
    %v1333 = vsel %vm1332, %v1331, %v1329
    %s1334 = scalar_lea.vmem [#allocation1], 77
    %v1335 = vld [vmem:[%s1334] sm:$0x10]
    %vm1336 = vcmask 1044484
    %v1337 = vsel %vm1336, %v1335, %v1333
    %s1338 = scalar_lea.vmem [#allocation1], 204
    %v1339 = vld [vmem:[%s1338] sm:$0x20]
    %vm1340 = vcmask 1045509
    %v1341 = vsel %vm1340, %v1339, %v1337
    %s1342 = scalar_lea.vmem [#allocation1], 331
    %v1343 = vld [vmem:[%s1342] sm:$0x40]
    %vm1344 = vcmask 1046534
    %v1345 = vsel %vm1344, %v1343, %v1341
    %s1346 = scalar_lea.vmem [#allocation1], 458
    %v1347 = vld [vmem:[%s1346] sm:$0x80]
    %vm1348 = vcmask 1047559
    %v1349 = vsel %vm1348, %v1347, %v1345
    %1350 = vrot.lane.b32.xlu0 %v1349, 40
    %v1351 = vpop.permute.xlu0 %1350
    %vm1352 = vcmask 392512
    %1353 = vst.msk [vmem:[#allocation0] sm:$0xf] %vm1352, %v1351
    %s1354 = scalar_lea.vmem [#allocation0], 4
    %1355 = vst.msk [vmem:[%s1354] sm:$0xf0] %vm1352, %v1351
    %s1356 = scalar_lea.vmem [#allocation1], 529
    %v1357 = vld [vmem:[%s1356] sm:$0x1]
    %s1358 = scalar_lea.vmem [#allocation1], 656
    %v1359 = vld [vmem:[%s1358] sm:$0x2]
    %vm1360 = vcmask 1041409
    %v1361 = vsel %vm1360, %v1359, %v1357
    %s1362 = scalar_lea.vmem [#allocation1], 783
    %v1363 = vld [vmem:[%s1362] sm:$0x4]
    %vm1364 = vcmask 1042434
    %v1365 = vsel %vm1364, %v1363, %v1361
    %s1366 = scalar_lea.vmem [#allocation1], 910
    %v1367 = vld [vmem:[%s1366] sm:$0x8]
    %vm1368 = vcmask 1043459
    %v1369 = vsel %vm1368, %v1367, %v1365
    %s1370 = scalar_lea.vmem [#allocation1], 589
    %v1371 = vld [vmem:[%s1370] sm:$0x10]
    %vm1372 = vcmask 1044484
    %v1373 = vsel %vm1372, %v1371, %v1369
    %s1374 = scalar_lea.vmem [#allocation1], 716
    %v1375 = vld [vmem:[%s1374] sm:$0x20]
    %vm1376 = vcmask 1045509
    %v1377 = vsel %vm1376, %v1375, %v1373
    %s1378 = scalar_lea.vmem [#allocation1], 843
    %v1379 = vld [vmem:[%s1378] sm:$0x40]
    %vm1380 = vcmask 1046534
    %v1381 = vsel %vm1380, %v1379, %v1377
    %s1382 = scalar_lea.vmem [#allocation1], 970
    %v1383 = vld [vmem:[%s1382] sm:$0x80]
    %vm1384 = vcmask 1047559
    %v1385 = vsel %vm1384, %v1383, %v1381
    %1386 = vrot.lane.b32.xlu0 %v1385, 40
    %v1387 = vpop.permute.xlu0 %1386
    %vm1388 = vcmask 392512
    %s1389 = scalar_lea.vmem [#allocation0], 16
    %1390 = vst.msk [vmem:[%s1389] sm:$0xf] %vm1388, %v1387
    %s1391 = scalar_lea.vmem [#allocation0], 20
    %1392 = vst.msk [vmem:[%s1391] sm:$0xf0] %vm1388, %v1387
    %s1393 = scalar_lea.vmem [#allocation1], 16
    %v1394 = vld [vmem:[%s1393] sm:$0x1]
    %s1395 = scalar_lea.vmem [#allocation1], 143
    %v1396 = vld [vmem:[%s1395] sm:$0x2]
    %vm1397 = vcmask 1041409
    %v1398 = vsel %vm1397, %v1396, %v1394
    %s1399 = scalar_lea.vmem [#allocation1], 270
    %v1400 = vld [vmem:[%s1399] sm:$0x4]
    %vm1401 = vcmask 1042434
    %v1402 = vsel %vm1401, %v1400, %v1398
    %s1403 = scalar_lea.vmem [#allocation1], 397
    %v1404 = vld [vmem:[%s1403] sm:$0x8]
    %vm1405 = vcmask 1043459
    %v1406 = vsel %vm1405, %v1404, %v1402
    %s1407 = scalar_lea.vmem [#allocation1], 76
    %v1408 = vld [vmem:[%s1407] sm:$0x10]
    %vm1409 = vcmask 1044484
    %v1410 = vsel %vm1409, %v1408, %v1406
    %s1411 = scalar_lea.vmem [#allocation1], 203
    %v1412 = vld [vmem:[%s1411] sm:$0x20]
    %vm1413 = vcmask 1045509
    %v1414 = vsel %vm1413, %v1412, %v1410
    %s1415 = scalar_lea.vmem [#allocation1], 330
    %v1416 = vld [vmem:[%s1415] sm:$0x40]
    %vm1417 = vcmask 1046534
    %v1418 = vsel %vm1417, %v1416, %v1414
    %s1419 = scalar_lea.vmem [#allocation1], 457
    %v1420 = vld [vmem:[%s1419] sm:$0x80]
    %vm1421 = vcmask 1047559
    %v1422 = vsel %vm1421, %v1420, %v1418
    %1423 = vrot.lane.b32.xlu0 %v1422, 32
    %v1424 = vpop.permute.xlu0 %1423
    %vm1425 = vcmask 326912
    %1426 = vst.msk [vmem:[#allocation0] sm:$0xf] %vm1425, %v1424
    %s1427 = scalar_lea.vmem [#allocation0], 4
    %1428 = vst.msk [vmem:[%s1427] sm:$0xf0] %vm1425, %v1424
    %s1429 = scalar_lea.vmem [#allocation1], 528
    %v1430 = vld [vmem:[%s1429] sm:$0x1]
    %s1431 = scalar_lea.vmem [#allocation1], 655
    %v1432 = vld [vmem:[%s1431] sm:$0x2]
    %vm1433 = vcmask 1041409
    %v1434 = vsel %vm1433, %v1432, %v1430
    %s1435 = scalar_lea.vmem [#allocation1], 782
    %v1436 = vld [vmem:[%s1435] sm:$0x4]
    %vm1437 = vcmask 1042434
    %v1438 = vsel %vm1437, %v1436, %v1434
    %s1439 = scalar_lea.vmem [#allocation1], 909
    %v1440 = vld [vmem:[%s1439] sm:$0x8]
    %vm1441 = vcmask 1043459
    %v1442 = vsel %vm1441, %v1440, %v1438
    %s1443 = scalar_lea.vmem [#allocation1], 588
    %v1444 = vld [vmem:[%s1443] sm:$0x10]
    %vm1445 = vcmask 1044484
    %v1446 = vsel %vm1445, %v1444, %v1442
    %s1447 = scalar_lea.vmem [#allocation1], 715
    %v1448 = vld [vmem:[%s1447] sm:$0x20]
    %vm1449 = vcmask 1045509
    %v1450 = vsel %vm1449, %v1448, %v1446
    %s1451 = scalar_lea.vmem [#allocation1], 842
    %v1452 = vld [vmem:[%s1451] sm:$0x40]
    %vm1453 = vcmask 1046534
    %v1454 = vsel %vm1453, %v1452, %v1450
    %s1455 = scalar_lea.vmem [#allocation1], 969
    %v1456 = vld [vmem:[%s1455] sm:$0x80]
    %vm1457 = vcmask 1047559
    %v1458 = vsel %vm1457, %v1456, %v1454
    %1459 = vrot.lane.b32.xlu0 %v1458, 32
    %v1460 = vpop.permute.xlu0 %1459
    %vm1461 = vcmask 326912
    %s1462 = scalar_lea.vmem [#allocation0], 16
    %1463 = vst.msk [vmem:[%s1462] sm:$0xf] %vm1461, %v1460
    %s1464 = scalar_lea.vmem [#allocation0], 20
    %1465 = vst.msk [vmem:[%s1464] sm:$0xf0] %vm1461, %v1460
    %s1466 = scalar_lea.vmem [#allocation1], 9
    %v1467 = vld [vmem:[%s1466] sm:$0x1]
    %s1468 = scalar_lea.vmem [#allocation1], 136
    %v1469 = vld [vmem:[%s1468] sm:$0x2]
    %vm1470 = vcmask 1041409
    %v1471 = vsel %vm1470, %v1469, %v1467
    %s1472 = scalar_lea.vmem [#allocation1], 263
    %v1473 = vld [vmem:[%s1472] sm:$0x4]
    %vm1474 = vcmask 1042434
    %v1475 = vsel %vm1474, %v1473, %v1471
    %s1476 = scalar_lea.vmem [#allocation1], 390
    %v1477 = vld [vmem:[%s1476] sm:$0x8]
    %vm1478 = vcmask 1043459
    %v1479 = vsel %vm1478, %v1477, %v1475
    %s1480 = scalar_lea.vmem [#allocation1], 69
    %v1481 = vld [vmem:[%s1480] sm:$0x10]
    %vm1482 = vcmask 1044484
    %v1483 = vsel %vm1482, %v1481, %v1479
    %s1484 = scalar_lea.vmem [#allocation1], 196
    %v1485 = vld [vmem:[%s1484] sm:$0x20]
    %vm1486 = vcmask 1045509
    %v1487 = vsel %vm1486, %v1485, %v1483
    %s1488 = scalar_lea.vmem [#allocation1], 323
    %v1489 = vld [vmem:[%s1488] sm:$0x40]
    %vm1490 = vcmask 1046534
    %v1491 = vsel %vm1490, %v1489, %v1487
    %s1492 = scalar_lea.vmem [#allocation1], 450
    %v1493 = vld [vmem:[%s1492] sm:$0x80]
    %vm1494 = vcmask 1047559
    %v1495 = vsel %vm1494, %v1493, %v1491
    %1496 = vrot.lane.b32.xlu0 %v1495, 24
    %v1497 = vpop.permute.xlu0 %1496
    %vm1498 = vcmask 261312
    %1499 = vst.msk [vmem:[#allocation0] sm:$0xf] %vm1498, %v1497
    %s1500 = scalar_lea.vmem [#allocation0], 4
    %1501 = vst.msk [vmem:[%s1500] sm:$0xf0] %vm1498, %v1497
    %s1502 = scalar_lea.vmem [#allocation1], 521
    %v1503 = vld [vmem:[%s1502] sm:$0x1]
    %s1504 = scalar_lea.vmem [#allocation1], 648
    %v1505 = vld [vmem:[%s1504] sm:$0x2]
    %vm1506 = vcmask 1041409
    %v1507 = vsel %vm1506, %v1505, %v1503
    %s1508 = scalar_lea.vmem [#allocation1], 775
    %v1509 = vld [vmem:[%s1508] sm:$0x4]
    %vm1510 = vcmask 1042434
    %v1511 = vsel %vm1510, %v1509, %v1507
    %s1512 = scalar_lea.vmem [#allocation1], 902
    %v1513 = vld [vmem:[%s1512] sm:$0x8]
    %vm1514 = vcmask 1043459
    %v1515 = vsel %vm1514, %v1513, %v1511
    %s1516 = scalar_lea.vmem [#allocation1], 581
    %v1517 = vld [vmem:[%s1516] sm:$0x10]
    %vm1518 = vcmask 1044484
    %v1519 = vsel %vm1518, %v1517, %v1515
    %s1520 = scalar_lea.vmem [#allocation1], 708
    %v1521 = vld [vmem:[%s1520] sm:$0x20]
    %vm1522 = vcmask 1045509
    %v1523 = vsel %vm1522, %v1521, %v1519
    %s1524 = scalar_lea.vmem [#allocation1], 835
    %v1525 = vld [vmem:[%s1524] sm:$0x40]
    %vm1526 = vcmask 1046534
    %v1527 = vsel %vm1526, %v1525, %v1523
    %s1528 = scalar_lea.vmem [#allocation1], 962
    %v1529 = vld [vmem:[%s1528] sm:$0x80]
    %vm1530 = vcmask 1047559
    %v1531 = vsel %vm1530, %v1529, %v1527
    %1532 = vrot.lane.b32.xlu0 %v1531, 24
    %v1533 = vpop.permute.xlu0 %1532
    %vm1534 = vcmask 261312
    %s1535 = scalar_lea.vmem [#allocation0], 16
    %1536 = vst.msk [vmem:[%s1535] sm:$0xf] %vm1534, %v1533
    %s1537 = scalar_lea.vmem [#allocation0], 20
    %1538 = vst.msk [vmem:[%s1537] sm:$0xf0] %vm1534, %v1533
    %s1539 = scalar_lea.vmem [#allocation1], 8
    %v1540 = vld [vmem:[%s1539] sm:$0x1]
    %s1541 = scalar_lea.vmem [#allocation1], 135
    %v1542 = vld [vmem:[%s1541] sm:$0x2]
    %vm1543 = vcmask 1041409
    %v1544 = vsel %vm1543, %v1542, %v1540
    %s1545 = scalar_lea.vmem [#allocation1], 262
    %v1546 = vld [vmem:[%s1545] sm:$0x4]
    %vm1547 = vcmask 1042434
    %v1548 = vsel %vm1547, %v1546, %v1544
    %s1549 = scalar_lea.vmem [#allocation1], 389
    %v1550 = vld [vmem:[%s1549] sm:$0x8]
    %vm1551 = vcmask 1043459
    %v1552 = vsel %vm1551, %v1550, %v1548
    %s1553 = scalar_lea.vmem [#allocation1], 68
    %v1554 = vld [vmem:[%s1553] sm:$0x10]
    %vm1555 = vcmask 1044484
    %v1556 = vsel %vm1555, %v1554, %v1552
    %s1557 = scalar_lea.vmem [#allocation1], 195
    %v1558 = vld [vmem:[%s1557] sm:$0x20]
    %vm1559 = vcmask 1045509
    %v1560 = vsel %vm1559, %v1558, %v1556
    %s1561 = scalar_lea.vmem [#allocation1], 322
    %v1562 = vld [vmem:[%s1561] sm:$0x40]
    %vm1563 = vcmask 1046534
    %v1564 = vsel %vm1563, %v1562, %v1560
    %s1565 = scalar_lea.vmem [#allocation1], 449
    %v1566 = vld [vmem:[%s1565] sm:$0x80]
    %vm1567 = vcmask 1047559
    %v1568 = vsel %vm1567, %v1566, %v1564
    %1569 = vrot.lane.b32.xlu0 %v1568, 16
    %v1570 = vpop.permute.xlu0 %1569
    %vm1571 = vcmask 195712
    %1572 = vst.msk [vmem:[#allocation0] sm:$0xf] %vm1571, %v1570
    %s1573 = scalar_lea.vmem [#allocation0], 4
    %1574 = vst.msk [vmem:[%s1573] sm:$0xf0] %vm1571, %v1570
    %s1575 = scalar_lea.vmem [#allocation1], 520
    %v1576 = vld [vmem:[%s1575] sm:$0x1]
    %s1577 = scalar_lea.vmem [#allocation1], 647
    %v1578 = vld [vmem:[%s1577] sm:$0x2]
    %vm1579 = vcmask 1041409
    %v1580 = vsel %vm1579, %v1578, %v1576
    %s1581 = scalar_lea.vmem [#allocation1], 774
    %v1582 = vld [vmem:[%s1581] sm:$0x4]
    %vm1583 = vcmask 1042434
    %v1584 = vsel %vm1583, %v1582, %v1580
    %s1585 = scalar_lea.vmem [#allocation1], 901
    %v1586 = vld [vmem:[%s1585] sm:$0x8]
    %vm1587 = vcmask 1043459
    %v1588 = vsel %vm1587, %v1586, %v1584
    %s1589 = scalar_lea.vmem [#allocation1], 580
    %v1590 = vld [vmem:[%s1589] sm:$0x10]
    %vm1591 = vcmask 1044484
    %v1592 = vsel %vm1591, %v1590, %v1588
    %s1593 = scalar_lea.vmem [#allocation1], 707
    %v1594 = vld [vmem:[%s1593] sm:$0x20]
    %vm1595 = vcmask 1045509
    %v1596 = vsel %vm1595, %v1594, %v1592
    %s1597 = scalar_lea.vmem [#allocation1], 834
    %v1598 = vld [vmem:[%s1597] sm:$0x40]
    %vm1599 = vcmask 1046534
    %v1600 = vsel %vm1599, %v1598, %v1596
    %s1601 = scalar_lea.vmem [#allocation1], 961
    %v1602 = vld [vmem:[%s1601] sm:$0x80]
    %vm1603 = vcmask 1047559
    %v1604 = vsel %vm1603, %v1602, %v1600
    %1605 = vrot.lane.b32.xlu0 %v1604, 16
    %v1606 = vpop.permute.xlu0 %1605
    %vm1607 = vcmask 195712
    %s1608 = scalar_lea.vmem [#allocation0], 16
    %1609 = vst.msk [vmem:[%s1608] sm:$0xf] %vm1607, %v1606
    %s1610 = scalar_lea.vmem [#allocation0], 20
    %1611 = vst.msk [vmem:[%s1610] sm:$0xf0] %vm1607, %v1606
    %s1612 = scalar_lea.vmem [#allocation1], 1
    %v1613 = vld [vmem:[%s1612] sm:$0x1]
    %s1614 = scalar_lea.vmem [#allocation1], 128
    %v1615 = vld [vmem:[%s1614] sm:$0x2]
    %vm1616 = vcmask 1041409
    %v1617 = vsel %vm1616, %v1615, %v1613
    %s1618 = scalar_lea.vmem [#allocation1], 255
    %v1619 = vld [vmem:[%s1618] sm:$0x4]
    %vm1620 = vcmask 1042434
    %v1621 = vsel %vm1620, %v1619, %v1617
    %s1622 = scalar_lea.vmem [#allocation1], 382
    %v1623 = vld [vmem:[%s1622] sm:$0x8]
    %vm1624 = vcmask 1043459
    %v1625 = vsel %vm1624, %v1623, %v1621
    %s1626 = scalar_lea.vmem [#allocation1], 61
    %v1627 = vld [vmem:[%s1626] sm:$0x10]
    %vm1628 = vcmask 1044484
    %v1629 = vsel %vm1628, %v1627, %v1625
    %s1630 = scalar_lea.vmem [#allocation1], 188
    %v1631 = vld [vmem:[%s1630] sm:$0x20]
    %vm1632 = vcmask 1045509
    %v1633 = vsel %vm1632, %v1631, %v1629
    %s1634 = scalar_lea.vmem [#allocation1], 315
    %v1635 = vld [vmem:[%s1634] sm:$0x40]
    %vm1636 = vcmask 1046534
    %v1637 = vsel %vm1636, %v1635, %v1633
    %s1638 = scalar_lea.vmem [#allocation1], 442
    %v1639 = vld [vmem:[%s1638] sm:$0x80]
    %vm1640 = vcmask 1047559
    %v1641 = vsel %vm1640, %v1639, %v1637
    %1642 = vrot.lane.b32.xlu0 %v1641, 8
    %v1643 = vpop.permute.xlu0 %1642
    %vm1644 = vcmask 130112
    %1645 = vst.msk [vmem:[#allocation0] sm:$0xf] %vm1644, %v1643
    %s1646 = scalar_lea.vmem [#allocation0], 4
    %1647 = vst.msk [vmem:[%s1646] sm:$0xf0] %vm1644, %v1643
    %s1648 = scalar_lea.vmem [#allocation1], 513
    %v1649 = vld [vmem:[%s1648] sm:$0x1]
    %s1650 = scalar_lea.vmem [#allocation1], 640
    %v1651 = vld [vmem:[%s1650] sm:$0x2]
    %vm1652 = vcmask 1041409
    %v1653 = vsel %vm1652, %v1651, %v1649
    %s1654 = scalar_lea.vmem [#allocation1], 767
    %v1655 = vld [vmem:[%s1654] sm:$0x4]
    %vm1656 = vcmask 1042434
    %v1657 = vsel %vm1656, %v1655, %v1653
    %s1658 = scalar_lea.vmem [#allocation1], 894
    %v1659 = vld [vmem:[%s1658] sm:$0x8]
    %vm1660 = vcmask 1043459
    %v1661 = vsel %vm1660, %v1659, %v1657
    %s1662 = scalar_lea.vmem [#allocation1], 573
    %v1663 = vld [vmem:[%s1662] sm:$0x10]
    %vm1664 = vcmask 1044484
    %v1665 = vsel %vm1664, %v1663, %v1661
    %s1666 = scalar_lea.vmem [#allocation1], 700
    %v1667 = vld [vmem:[%s1666] sm:$0x20]
    %vm1668 = vcmask 1045509
    %v1669 = vsel %vm1668, %v1667, %v1665
    %s1670 = scalar_lea.vmem [#allocation1], 827
    %v1671 = vld [vmem:[%s1670] sm:$0x40]
    %vm1672 = vcmask 1046534
    %v1673 = vsel %vm1672, %v1671, %v1669
    %s1674 = scalar_lea.vmem [#allocation1], 954
    %v1675 = vld [vmem:[%s1674] sm:$0x80]
    %vm1676 = vcmask 1047559
    %v1677 = vsel %vm1676, %v1675, %v1673
    %1678 = vrot.lane.b32.xlu0 %v1677, 8
    %v1679 = vpop.permute.xlu0 %1678
    %vm1680 = vcmask 130112
    %s1681 = scalar_lea.vmem [#allocation0], 16
    %1682 = vst.msk [vmem:[%s1681] sm:$0xf] %vm1680, %v1679
    %s1683 = scalar_lea.vmem [#allocation0], 20
    %1684 = vst.msk [vmem:[%s1683] sm:$0xf0] %vm1680, %v1679
    %s1686 = ssub.s32 16, 1
    %v1687 = vld [vmem:[#allocation0] sm:%s1686]
    %s1689 = ssub.s32 16, 1
    %1690 = vst [vmem:[%s1] sm:%s1689] %v1687
    %s1691 = scalar_lea.vmem [#allocation0], 8
    %v1692 = vld [vmem:[%s1691] sm:%s1686]
    %s1694 = ssub.s32 16, 1
    %s1695 = scalar_lea.vmem %s1, 4
    %1696 = vst [vmem:[%s1695] sm:%s1694] %v1692
    %s1697 = scalar_lea.vmem [#allocation0], 16
    %v1698 = vld [vmem:[%s1697] sm:%s1686]
    %s1700 = ssub.s32 16, 1
    %s1701 = scalar_lea.vmem %s1, 8
    %1702 = vst [vmem:[%s1701] sm:%s1700] %v1698
    %s1703 = scalar_lea.vmem [#allocation0], 24
    %v1704 = vld [vmem:[%s1703] sm:%s1686]
    %s1706 = ssub.s32 16, 1
    %s1707 = scalar_lea.vmem %s1, 12
    %1708 = vst [vmem:[%s1707] sm:%s1706] %v1704

// kernel: spectral_transform.4
$region0: #{spectral_transform.4}
  #allocation0 [shape = 'u32[]', space=smem, size = 0x4, offset = 0x4, fixed_abs, tag = 'smem constant byte address 0x4 - core index']
  #allocation1 [shape = 'u32[72,128]{1,0:T(1,128)}', space=vmem, size = 0x9000, scoped, tag = 'internal scratch']
  %s0 = inlined_call_operand.vmem [shape: f32[2,4,256], index: 0, kind: input, shape index: {}]
  %s1 = inlined_call_operand.vmem [shape: f32[4,4], index: 1, kind: input, shape index: {}]
  %s2 = inlined_call_operand.vmem [shape: f32[4,1], index: 2, kind: input, shape index: {}]
  %s3 = inlined_call_operand.vmem [shape: f32[4,1], index: 3, kind: input, shape index: {}]
  %s4 = inlined_call_operand.vmem [shape: f32[2,4,256], index: 4, kind: output, shape index: {}]
  %s5 = sld [smem:[#allocation0]]
  $region49: #{spectral_transform.4} parent=0
    _
  %s7 = ssub.s32 1, %s5
  %s8 = scalar_select 0, %s7, %s5
  loop: start=0, step=1, limit=4
  $region2: #{spectral_transform.4} parent=0 // loop_pre_header
    _
  $region3: #{spectral_transform.4} parent=0 // loop_header
    %s10 = sphi 0, %s14
    %p11 = scmp.ge.s32.totalorder %s10, 4
    %s17 = sphi 0, %s29
    %s18 = sphi 0, %s25
    %s19 = sphi 0, %s17
    %s20 = sphi 0, %s18
    %s21 = sphi 0, %s19
    %s22 = sphi 0, %s20
    %s34 = sphi 0, %s36
    %s37 = sphi 0, %s34
    %s38 = sphi 0, %s37
    %s54 = sphi 0, %s38
    %s58 = sphi 0, %s58
    %s60 = sphi 0, %s58
    %s61 = sphi 0, %s60
    %s75 = sphi 0, %s61
    %s79 = sphi 0, %s79
    %s81 = sphi 0, %s79
    %s82 = sphi 0, %s81
    %s96 = sphi 0, %s82
    %s100 = sphi 0, %s100
    %s102 = sphi 0, %s100
    %s103 = sphi 0, %s102
    %s117 = sphi 0, %s103
    %s125 = sphi 0, %s127
    %s128 = sphi 0, %s125
    %s129 = sphi 0, %s128
    %s145 = sphi 0, %s129
  $region4: #{spectral_transform.4} parent=0 // loop_header_branch
    %13 = sbr.rel (%p11) target = $region8
  $region5: #{spectral_transform.4} parent=0 // loop_body
    %s15 = ssub.s32 %s10, 1
    %s16 = ssub.s32 %s10, 2
    %s23 = sadd.s32 1, %s18
    %p24 = scmp.ge.s32.totalorder %s23, 1
    %s25 = scalar_select %p24, 0, %s23
    %s26 = sadd.s32 1, %s17
    %s27 = scalar_select %p24, %s26, %s17
    %p28 = scmp.ge.s32.totalorder %s27, 2
    %s29 = scalar_select %p28, 0, %s27
    %s30 = ssub.s32 %s17, %s29
    %s31 = ssub.s32 %s18, %s25
    %s32 = sor.u32 %s30, %s31
    %p33 = scmp.eq.s32.totalorder %s32, 0
    %s35 = sadd.s32 %s34, 1
    %s36 = scalar_select %p33, %s34, %s35
    %p39 = pneg %p33
    %p40 = scmp.eq.s32.totalorder %s10, 1
    %p41 = por %p39, %p40
    %p42 = scmp.ne.s32.totalorder %s34, %s37
    %p43 = scmp.eq.s32.totalorder %s10, 0
    %p44 = por %p42, %p43
    %p45 = scmp.ne.s32.totalorder %s34, %s37
    %p46 = scmp.eq.s32.totalorder %s15, 1
    %p47 = por %p45, %p46
    %p48 = scmp.ne.s32.totalorder %s37, %s38
    %p49 = scmp.eq.s32.totalorder %s15, 0
    %p50 = por %p48, %p49
    %p51 = scmp.ne.s32.totalorder %s37, %s38
    %p52 = scmp.eq.s32.totalorder %s16, 1
    %p53 = por %p51, %p52
    %p55 = scmp.ne.s32.totalorder %s38, %s54
    %p56 = scmp.eq.s32.totalorder %s16, 0
    %p57 = por %p55, %p56
    %s59 = sadd.s32 %s58, 1
    %p62 = scmp.eq.s32.totalorder %s10, 1
    %p63 = scmp.ne.s32.totalorder %s58, %s60
    %p64 = scmp.eq.s32.totalorder %s10, 0
    %p65 = por %p63, %p64
    %p66 = scmp.ne.s32.totalorder %s58, %s60
    %p67 = scmp.eq.s32.totalorder %s15, 1
    %p68 = por %p66, %p67
    %p69 = scmp.ne.s32.totalorder %s60, %s61
    %p70 = scmp.eq.s32.totalorder %s15, 0
    %p71 = por %p69, %p70
    %p72 = scmp.ne.s32.totalorder %s60, %s61
    %p73 = scmp.eq.s32.totalorder %s16, 1
    %p74 = por %p72, %p73
    %p76 = scmp.ne.s32.totalorder %s61, %s75
    %p77 = scmp.eq.s32.totalorder %s16, 0
    %p78 = por %p76, %p77
    %s80 = sadd.s32 %s79, 1
    %p83 = scmp.eq.s32.totalorder %s10, 1
    %p84 = scmp.ne.s32.totalorder %s79, %s81
    %p85 = scmp.eq.s32.totalorder %s10, 0
    %p86 = por %p84, %p85
    %p87 = scmp.ne.s32.totalorder %s79, %s81
    %p88 = scmp.eq.s32.totalorder %s15, 1
    %p89 = por %p87, %p88
    %p90 = scmp.ne.s32.totalorder %s81, %s82
    %p91 = scmp.eq.s32.totalorder %s15, 0
    %p92 = por %p90, %p91
    %p93 = scmp.ne.s32.totalorder %s81, %s82
    %p94 = scmp.eq.s32.totalorder %s16, 1
    %p95 = por %p93, %p94
    %p97 = scmp.ne.s32.totalorder %s82, %s96
    %p98 = scmp.eq.s32.totalorder %s16, 0
    %p99 = por %p97, %p98
    %s101 = sadd.s32 %s100, 1
    %p104 = scmp.eq.s32.totalorder %s10, 1
    %p105 = scmp.ne.s32.totalorder %s100, %s102
    %p106 = scmp.eq.s32.totalorder %s10, 0
    %p107 = por %p105, %p106
    %p108 = scmp.ne.s32.totalorder %s100, %s102
    %p109 = scmp.eq.s32.totalorder %s15, 1
    %p110 = por %p108, %p109
    %p111 = scmp.ne.s32.totalorder %s102, %s103
    %p112 = scmp.eq.s32.totalorder %s15, 0
    %p113 = por %p111, %p112
    %p114 = scmp.ne.s32.totalorder %s102, %s103
    %p115 = scmp.eq.s32.totalorder %s16, 1
    %p116 = por %p114, %p115
    %p118 = scmp.ne.s32.totalorder %s103, %s117
    %p119 = scmp.eq.s32.totalorder %s16, 0
    %p120 = por %p118, %p119
    %s121 = ssub.s32 %s17, %s29
    %s122 = ssub.s32 %s18, %s25
    %s123 = sor.u32 %s121, %s122
    %p124 = scmp.eq.s32.totalorder %s123, 0
    %s126 = sadd.s32 %s125, 1
    %s127 = scalar_select %p124, %s125, %s126
    %p130 = pneg %p124
    %p131 = scmp.eq.s32.totalorder %s10, 1
    %p132 = por %p130, %p131
    %p133 = scmp.ne.s32.totalorder %s125, %s128
    %p134 = scmp.eq.s32.totalorder %s10, 0
    %p135 = por %p133, %p134
    %p136 = scmp.ne.s32.totalorder %s125, %s128
    %p137 = scmp.eq.s32.totalorder %s15, 1
    %p138 = por %p136, %p137
    %p139 = scmp.ne.s32.totalorder %s128, %s129
    %p140 = scmp.eq.s32.totalorder %s15, 0
    %p141 = por %p139, %p140
    %p142 = scmp.ne.s32.totalorder %s128, %s129
    %p143 = scmp.eq.s32.totalorder %s16, 1
    %p144 = por %p142, %p143
    %p146 = scmp.ne.s32.totalorder %s129, %s145
    %p147 = scmp.eq.s32.totalorder %s16, 0
    %p148 = por %p146, %p147
    %p149 = scmp.le.s32.totalorder 1, %s10
    %p150 = scmp.lt.s32.totalorder %s10, 3
    %p151 = pnand %p149, %p150
    %p152 = pneg %p151
    // Predicated region
    $region9: #{spectral_transform.4} parent=5 // pred_check
      _
    $region10: #{spectral_transform.4} parent=5 // pred_check_branch
      %154 = sbr.rel (%p151) target = $region12
    $region11: #{spectral_transform.4} parent=5 // pred_region
      %s155 = ssub.s32 %s10, 1
      // Predicated region
      $region13: #{spectral_transform.4} parent=11 // pred_check
        %p156 = pneg %p71
      $region14: #{spectral_transform.4} parent=11 // pred_check_branch
        %158 = sbr.rel (%p156) target = $region16
      $region15: #{spectral_transform.4} parent=11 // pred_region
        _
      $region16: #{spectral_transform.4} parent=11 // pred_fallthru
        _
      // Predicated region
      $region17: #{spectral_transform.4} parent=11 // pred_check
        %p159 = pneg %p92
      $region18: #{spectral_transform.4} parent=11 // pred_check_branch
        %161 = sbr.rel (%p159) target = $region20
      $region19: #{spectral_transform.4} parent=11 // pred_region
        _
      $region20: #{spectral_transform.4} parent=11 // pred_fallthru
        _
      // Predicated region
      $region21: #{spectral_transform.4} parent=11 // pred_check
        %p162 = pneg %p113
      $region22: #{spectral_transform.4} parent=11 // pred_check_branch
        %164 = sbr.rel (%p162) target = $region24
      $region23: #{spectral_transform.4} parent=11 // pred_region
        _
      $region24: #{spectral_transform.4} parent=11 // pred_fallthru
        _
    $region12: #{spectral_transform.4} parent=5 // pred_fallthru
      _
    %p165 = scmp.lt.s32.totalorder %s10, 2
    // Predicated region
    $region25: #{spectral_transform.4} parent=5 // pred_check
      %p166 = pneg %p165
    $region26: #{spectral_transform.4} parent=5 // pred_check_branch
      %168 = sbr.rel (%p166) target = $region28
    $region27: #{spectral_transform.4} parent=5 // pred_region
      // Predicated region
      $region29: #{spectral_transform.4} parent=27 // pred_check
        %p169 = pneg %p44
      $region30: #{spectral_transform.4} parent=27 // pred_check_branch
        %171 = sbr.rel (%p169) target = $region32
      $region31: #{spectral_transform.4} parent=27 // pred_region
        %s172 = smul.u32 2, %s18
        %p173 = scmp.lt.s32.totalorder %s17, 1
        %s174 = scalar_select %p173, %s17, 1
        %p175 = scmp.lt.s32.totalorder %s172, 1
        %s176 = scalar_select %p175, %s172, 1
        %s177 = smul.addr %s174, 2
        %s178 = sadd.s32 %s176, %s177
        %s179 = smul.addr %s178, 4
        %s180 = scalar_lea.vmem %s0, %s179
        %s181 = smul.u32 2, %s18
      $region32: #{spectral_transform.4} parent=27 // pred_fallthru
        _
    $region28: #{spectral_transform.4} parent=5 // pred_fallthru
      _
    %p182 = scmp.le.s32.totalorder 1, %s10
    %p183 = scmp.lt.s32.totalorder %s10, 3
    %p184 = pnand %p182, %p183
    %p185 = pneg %p184
    // Predicated region
    $region33: #{spectral_transform.4} parent=5 // pred_check
      _
    $region34: #{spectral_transform.4} parent=5 // pred_check_branch
      %187 = sbr.rel (%p184) target = $region36
    $region35: #{spectral_transform.4} parent=5 // pred_region
      %s188 = ssub.s32 %s10, 1
      %s189 = smul.u32 2, %s20
      %p190 = scmp.lt.s32.totalorder %s19, 1
      %s191 = scalar_select %p190, %s19, 1
      %p192 = scmp.lt.s32.totalorder %s189, 1
      %s193 = scalar_select %p192, %s189, 1
      %s194 = smul.addr %s191, 2
      %s195 = sadd.s32 %s193, %s194
      %s196 = smul.addr %s195, 4
      %s197 = scalar_lea.vmem %s0, %s196
      %p198 = pneg %p50
      %p199 = pneg %p47
      %p200 = pneg %p71
      %p201 = pneg %p68
      %p202 = pneg %p92
      %p203 = pneg %p89
      %p204 = pneg %p113
      %p205 = pneg %p110
      %p206 = pneg %p141
      %p207 = pneg %p138
      %s208 = smul.u32 2, %s20
      %p209 = scmp.lt.s32.totalorder %s19, 1
      %s210 = scalar_select %p209, %s19, 1
      %p211 = scmp.lt.s32.totalorder %s208, 1
      %s212 = scalar_select %p211, %s208, 1
      %s213 = smul.addr %s210, 2
      %s214 = sadd.s32 %s212, %s213
      %s215 = smul.addr %s214, 4
      %s216 = scalar_lea.vmem %s4, %s215
      %s217 = smul.u32 2, %s20
      %p218 = scmp.lt.s32.totalorder %s19, 1
      %s219 = scalar_select %p218, %s19, 1
      %p220 = scmp.lt.s32.totalorder %s217, 1
      %s221 = scalar_select %p220, %s217, 1
      %s222 = smul.addr %s219, 2
      %s223 = sadd.s32 %s221, %s222
      %s224 = smul.addr %s223, 4
      %s225 = scalar_lea.vmem %s0, %s224
      %s226 = smul.u32 2, %s20
      %s227 = smul.u32 2, %s20
      %p228 = scmp.lt.s32.totalorder %s19, 1
      %s229 = scalar_select %p228, %s19, 1
      %p230 = scmp.lt.s32.totalorder %s227, 1
      %s231 = scalar_select %p230, %s227, 1
      %s232 = smul.addr %s229, 2
      %s233 = sadd.s32 %s231, %s232
      %s234 = smul.addr %s233, 4
      %s235 = scalar_lea.vmem %s4, %s234
      %s236 = smul.u32 2, %s20
      %v237 = vld [vmem:[%s1] sm:$0xf]
      %v238 = vld [vmem:[%s225] sm:$0xff]
      %240 = vst [vmem:[#allocation1] ss:$2 sm:$0xff] %v238
      %v241 = vld.sshfl [vmem:[#allocation1] sm:$0xff pattern:$0x75316420]
      %v242 = vld.sshfl [vmem:[#allocation1 + $0x8] sm:$0xff pattern:$0x75316420]
      %vm243 = vcmask 31744
      %v245 = vsel %vm243, %v237, 0
      %vm247 = vcmask 1043456
      %v248 = vsel %vm247, %v241, 0
      %v250 = vsel %vm247, %v242, 0
      %252 = vmatpush.msra.mxu0 0.0
      %253 = vmatpush.msra.mxu0 0.0
      %254 = vmatpush.msra.mxu0 0.0
      %255 = vmatpush.msra.mxu0 0.0
      %256 = vmatpush.msra.mxu0 0.0
      %257 = vmatpush.msra.mxu0 0.0
      %258 = vmatpush.msra.mxu0 0.0
      %259 = vmatpush.msra.mxu0 0.0
      %260 = vmatpush.msra.mxu0 0.0
      %261 = vmatpush.msra.mxu0 0.0
      %262 = vmatpush.msra.mxu0 0.0
      %263 = vmatpush.msra.mxu0 0.0
      %264 = vmatpush.msra.mxu0 0.0
      %265 = vmatpush.msra.mxu0 0.0
      %266 = vmatpush.msra.mxu0 0.0
      %267 = vmatpush.msra.mxu0 %v248
      %268 = vmatmul.f32.gmra.mxu0 %v245
      %v269 = vpop.f32.mrf.mxu0
      %v270 = vadd.f32 0.0, %v269
      %271 = vdwg.mxu0
      %272 = vmatpush.msra.mxu0 0.0
      %273 = vmatpush.msra.mxu0 0.0
      %274 = vmatpush.msra.mxu0 0.0
      %275 = vmatpush.msra.mxu0 0.0
      %276 = vmatpush.msra.mxu0 0.0
      %277 = vmatpush.msra.mxu0 0.0
      %278 = vmatpush.msra.mxu0 0.0
      %279 = vmatpush.msra.mxu0 0.0
      %280 = vmatpush.msra.mxu0 0.0
      %281 = vmatpush.msra.mxu0 0.0
      %282 = vmatpush.msra.mxu0 0.0
      %283 = vmatpush.msra.mxu0 0.0
      %284 = vmatpush.msra.mxu0 0.0
      %285 = vmatpush.msra.mxu0 0.0
      %286 = vmatpush.msra.mxu0 0.0
      %287 = vmatpush.msra.mxu0 %v250
      %288 = vmatmul.f32.gmra.mxu0 %v245
      %v289 = vpop.f32.mrf.mxu0
      %v290 = vadd.f32 0.0, %v289
      %291 = vdwg.mxu0
      %v292 = vld [vmem:[%s2] sm:$0xf]
      %294 = vset.pattern.permute.xlu0 0
      %295 = vperm.xlu0 %294, %v292
      %v296 = vpop.permute.xlu0 %295
      %v298 = vmul.f32 %v270, %v296
      %v299 = vmul.f32 %v290, %v296
      %v300 = vld [vmem:[%s3] sm:$0xf]
      %302 = vset.pattern.permute.xlu0 0
      %303 = vperm.xlu0 %302, %v300
      %v304 = vpop.permute.xlu0 %303
      %v306 = vadd.f32 %v298, %v304
      %v307 = vadd.f32 %v299, %v304
      %v308 = vmax.f32 %v306, 0.0
      %v309 = vmax.f32 %v307, 0.0
      %v312 = vrot.slane %v309, 4
      %v313 = vsel %vm247, %v308, %v312
      %315 = vst [vmem:[%s235] sm:$0xff] %v313
      %s316 = smul.u32 2, %s20
      %p317 = scmp.lt.s32.totalorder %s19, 1
      %s318 = scalar_select %p317, %s19, 1
      %p319 = scmp.lt.s32.totalorder %s316, 1
      %s320 = scalar_select %p319, %s316, 1
      %s321 = smul.addr %s318, 2
      %s322 = sadd.s32 %s320, %s321
      %s323 = smul.addr %s322, 4
      %s324 = scalar_lea.vmem %s4, %s323
      // Predicated region
      $region37: #{spectral_transform.4} parent=35 // pred_check
        %p325 = pneg %p138
      $region38: #{spectral_transform.4} parent=35 // pred_check_branch
        %327 = sbr.rel (%p325) target = $region40
      $region39: #{spectral_transform.4} parent=35 // pred_region
        %s328 = smul.u32 2, %s20
      $region40: #{spectral_transform.4} parent=35 // pred_fallthru
        _
    $region36: #{spectral_transform.4} parent=5 // pred_fallthru
      _
    %p329 = scmp.le.s32.totalorder 2, %s10
    // Predicated region
    $region41: #{spectral_transform.4} parent=5 // pred_check
      %p330 = pneg %p329
    $region42: #{spectral_transform.4} parent=5 // pred_check_branch
      %332 = sbr.rel (%p330) target = $region44
    $region43: #{spectral_transform.4} parent=5 // pred_region
      %s333 = ssub.s32 %s10, 2
      // Predicated region
      $region45: #{spectral_transform.4} parent=43 // pred_check
        %p334 = pneg %p144
      $region46: #{spectral_transform.4} parent=43 // pred_check_branch
        %336 = sbr.rel (%p334) target = $region48
      $region47: #{spectral_transform.4} parent=43 // pred_region
        %s337 = smul.u32 2, %s22
        %p338 = scmp.lt.s32.totalorder %s21, 1
        %s339 = scalar_select %p338, %s21, 1
        %p340 = scmp.lt.s32.totalorder %s337, 1
        %s341 = scalar_select %p340, %s337, 1
        %s342 = smul.addr %s339, 2
        %s343 = sadd.s32 %s341, %s342
        %s344 = smul.addr %s343, 4
        %s345 = scalar_lea.vmem %s4, %s344
      $region48: #{spectral_transform.4} parent=43 // pred_fallthru
        _
    $region44: #{spectral_transform.4} parent=5 // pred_fallthru
      _
  $region6: #{spectral_transform.4} parent=0 // loop_footer
    %s14 = sadd.s32 1, %s10
  $region7: #{spectral_transform.4} parent=0 // loop_footer_branch
    %9 = sbr.rel target = $region3
  $region8: #{spectral_transform.4} parent=0 // loop_exit
    _

// kernel: spectral_transform.6
$region0: #{spectral_transform.6}
  #allocation0 [shape = 'u32[]', space=smem, size = 0x4, offset = 0x4, fixed_abs, tag = 'smem constant byte address 0x4 - core index']
  #allocation1 [shape = 'u32[72,128]{1,0:T(1,128)}', space=vmem, size = 0x9000, scoped, tag = 'internal scratch']
  %s0 = inlined_call_operand.vmem [shape: f32[2,4,64], index: 0, kind: input, shape index: {}]
  %s1 = inlined_call_operand.vmem [shape: f32[64,64], index: 1, kind: input, shape index: {}]
  %s2 = inlined_call_operand.vmem [shape: f32[64,64], index: 2, kind: input, shape index: {}]
  %s3 = inlined_call_operand.vmem [shape: f32[4,4], index: 3, kind: input, shape index: {}]
  %s4 = inlined_call_operand.vmem [shape: f32[4,4], index: 4, kind: input, shape index: {}]
  %s5 = inlined_call_operand.vmem [shape: f32[4,4], index: 5, kind: input, shape index: {}]
  %s6 = inlined_call_operand.vmem [shape: f32[4,4], index: 6, kind: input, shape index: {}]
  %s7 = inlined_call_operand.vmem [shape: f32[4,1], index: 7, kind: input, shape index: {}]
  %s8 = inlined_call_operand.vmem [shape: f32[4,1], index: 8, kind: input, shape index: {}]
  %s9 = inlined_call_operand.vmem [shape: f32[4,1], index: 9, kind: input, shape index: {}]
  %s10 = inlined_call_operand.vmem [shape: f32[4,1], index: 10, kind: input, shape index: {}]
  %s11 = inlined_call_operand.vmem [shape: f32[2,4,64], index: 11, kind: output, shape index: {}]
  %s12 = sld [smem:[#allocation0]]
  $region77: #{spectral_transform.6} parent=0
    _
  %s14 = ssub.s32 1, %s12
  %s15 = scalar_select 0, %s14, %s12
  loop: start=0, step=1, limit=4
  $region2: #{spectral_transform.6} parent=0 // loop_pre_header
    _
  $region3: #{spectral_transform.6} parent=0 // loop_header
    %s17 = sphi 0, %s21
    %p18 = scmp.ge.s32.totalorder %s17, 4
    %s27 = sphi 0, %s29
    %s30 = sphi 0, %s27
    %s31 = sphi 0, %s30
    %s47 = sphi 0, %s31
    %s51 = sphi 0, %s51
    %s53 = sphi 0, %s51
    %s54 = sphi 0, %s53
    %s68 = sphi 0, %s54
    %s72 = sphi 0, %s72
    %s74 = sphi 0, %s72
    %s75 = sphi 0, %s74
    %s89 = sphi 0, %s75
    %s93 = sphi 0, %s93
    %s95 = sphi 0, %s93
    %s96 = sphi 0, %s95
    %s110 = sphi 0, %s96
    %s114 = sphi 0, %s114
    %s116 = sphi 0, %s114
    %s117 = sphi 0, %s116
    %s131 = sphi 0, %s117
    %s135 = sphi 0, %s135
    %s137 = sphi 0, %s135
    %s138 = sphi 0, %s137
    %s152 = sphi 0, %s138
    %s156 = sphi 0, %s156
    %s158 = sphi 0, %s156
    %s159 = sphi 0, %s158
    %s173 = sphi 0, %s159
    %s177 = sphi 0, %s177
    %s179 = sphi 0, %s177
    %s180 = sphi 0, %s179
    %s194 = sphi 0, %s180
    %s198 = sphi 0, %s198
    %s200 = sphi 0, %s198
    %s201 = sphi 0, %s200
    %s215 = sphi 0, %s201
    %s219 = sphi 0, %s219
    %s221 = sphi 0, %s219
    %s222 = sphi 0, %s221
    %s236 = sphi 0, %s222
    %s240 = sphi 0, %s240
    %s242 = sphi 0, %s240
    %s243 = sphi 0, %s242
    %s257 = sphi 0, %s243
    %s263 = sphi 0, %s265
    %s266 = sphi 0, %s263
    %s267 = sphi 0, %s266
    %s283 = sphi 0, %s267
  $region4: #{spectral_transform.6} parent=0 // loop_header_branch
    %20 = sbr.rel (%p18) target = $region8
  $region5: #{spectral_transform.6} parent=0 // loop_body
    %s22 = ssub.s32 %s17, 1
    %s23 = ssub.s32 %s17, 2
    %s24 = sadd.s32 %s17, 1
    %s25 = ssub.s32 %s17, %s24
    %p26 = scmp.eq.s32.totalorder %s25, 0
    %s28 = sadd.s32 %s27, 1
    %s29 = scalar_select %p26, %s27, %s28
    %p32 = pneg %p26
    %p33 = scmp.eq.s32.totalorder %s17, 1
    %p34 = por %p32, %p33
    %p35 = scmp.ne.s32.totalorder %s27, %s30
    %p36 = scmp.eq.s32.totalorder %s17, 0
    %p37 = por %p35, %p36
    %p38 = scmp.ne.s32.totalorder %s27, %s30
    %p39 = scmp.eq.s32.totalorder %s22, 1
    %p40 = por %p38, %p39
    %p41 = scmp.ne.s32.totalorder %s30, %s31
    %p42 = scmp.eq.s32.totalorder %s22, 0
    %p43 = por %p41, %p42
    %p44 = scmp.ne.s32.totalorder %s30, %s31
    %p45 = scmp.eq.s32.totalorder %s23, 1
    %p46 = por %p44, %p45
    %p48 = scmp.ne.s32.totalorder %s31, %s47
    %p49 = scmp.eq.s32.totalorder %s23, 0
    %p50 = por %p48, %p49
    %s52 = sadd.s32 %s51, 1
    %p55 = scmp.eq.s32.totalorder %s17, 1
    %p56 = scmp.ne.s32.totalorder %s51, %s53
    %p57 = scmp.eq.s32.totalorder %s17, 0
    %p58 = por %p56, %p57
    %p59 = scmp.ne.s32.totalorder %s51, %s53
    %p60 = scmp.eq.s32.totalorder %s22, 1
    %p61 = por %p59, %p60
    %p62 = scmp.ne.s32.totalorder %s53, %s54
    %p63 = scmp.eq.s32.totalorder %s22, 0
    %p64 = por %p62, %p63
    %p65 = scmp.ne.s32.totalorder %s53, %s54
    %p66 = scmp.eq.s32.totalorder %s23, 1
    %p67 = por %p65, %p66
    %p69 = scmp.ne.s32.totalorder %s54, %s68
    %p70 = scmp.eq.s32.totalorder %s23, 0
    %p71 = por %p69, %p70
    %s73 = sadd.s32 %s72, 1
    %p76 = scmp.eq.s32.totalorder %s17, 1
    %p77 = scmp.ne.s32.totalorder %s72, %s74
    %p78 = scmp.eq.s32.totalorder %s17, 0
    %p79 = por %p77, %p78
    %p80 = scmp.ne.s32.totalorder %s72, %s74
    %p81 = scmp.eq.s32.totalorder %s22, 1
    %p82 = por %p80, %p81
    %p83 = scmp.ne.s32.totalorder %s74, %s75
    %p84 = scmp.eq.s32.totalorder %s22, 0
    %p85 = por %p83, %p84
    %p86 = scmp.ne.s32.totalorder %s74, %s75
    %p87 = scmp.eq.s32.totalorder %s23, 1
    %p88 = por %p86, %p87
    %p90 = scmp.ne.s32.totalorder %s75, %s89
    %p91 = scmp.eq.s32.totalorder %s23, 0
    %p92 = por %p90, %p91
    %s94 = sadd.s32 %s93, 1
    %p97 = scmp.eq.s32.totalorder %s17, 1
    %p98 = scmp.ne.s32.totalorder %s93, %s95
    %p99 = scmp.eq.s32.totalorder %s17, 0
    %p100 = por %p98, %p99
    %p101 = scmp.ne.s32.totalorder %s93, %s95
    %p102 = scmp.eq.s32.totalorder %s22, 1
    %p103 = por %p101, %p102
    %p104 = scmp.ne.s32.totalorder %s95, %s96
    %p105 = scmp.eq.s32.totalorder %s22, 0
    %p106 = por %p104, %p105
    %p107 = scmp.ne.s32.totalorder %s95, %s96
    %p108 = scmp.eq.s32.totalorder %s23, 1
    %p109 = por %p107, %p108
    %p111 = scmp.ne.s32.totalorder %s96, %s110
    %p112 = scmp.eq.s32.totalorder %s23, 0
    %p113 = por %p111, %p112
    %s115 = sadd.s32 %s114, 1
    %p118 = scmp.eq.s32.totalorder %s17, 1
    %p119 = scmp.ne.s32.totalorder %s114, %s116
    %p120 = scmp.eq.s32.totalorder %s17, 0
    %p121 = por %p119, %p120
    %p122 = scmp.ne.s32.totalorder %s114, %s116
    %p123 = scmp.eq.s32.totalorder %s22, 1
    %p124 = por %p122, %p123
    %p125 = scmp.ne.s32.totalorder %s116, %s117
    %p126 = scmp.eq.s32.totalorder %s22, 0
    %p127 = por %p125, %p126
    %p128 = scmp.ne.s32.totalorder %s116, %s117
    %p129 = scmp.eq.s32.totalorder %s23, 1
    %p130 = por %p128, %p129
    %p132 = scmp.ne.s32.totalorder %s117, %s131
    %p133 = scmp.eq.s32.totalorder %s23, 0
    %p134 = por %p132, %p133
    %s136 = sadd.s32 %s135, 1
    %p139 = scmp.eq.s32.totalorder %s17, 1
    %p140 = scmp.ne.s32.totalorder %s135, %s137
    %p141 = scmp.eq.s32.totalorder %s17, 0
    %p142 = por %p140, %p141
    %p143 = scmp.ne.s32.totalorder %s135, %s137
    %p144 = scmp.eq.s32.totalorder %s22, 1
    %p145 = por %p143, %p144
    %p146 = scmp.ne.s32.totalorder %s137, %s138
    %p147 = scmp.eq.s32.totalorder %s22, 0
    %p148 = por %p146, %p147
    %p149 = scmp.ne.s32.totalorder %s137, %s138
    %p150 = scmp.eq.s32.totalorder %s23, 1
    %p151 = por %p149, %p150
    %p153 = scmp.ne.s32.totalorder %s138, %s152
    %p154 = scmp.eq.s32.totalorder %s23, 0
    %p155 = por %p153, %p154
    %s157 = sadd.s32 %s156, 1
    %p160 = scmp.eq.s32.totalorder %s17, 1
    %p161 = scmp.ne.s32.totalorder %s156, %s158
    %p162 = scmp.eq.s32.totalorder %s17, 0
    %p163 = por %p161, %p162
    %p164 = scmp.ne.s32.totalorder %s156, %s158
    %p165 = scmp.eq.s32.totalorder %s22, 1
    %p166 = por %p164, %p165
    %p167 = scmp.ne.s32.totalorder %s158, %s159
    %p168 = scmp.eq.s32.totalorder %s22, 0
    %p169 = por %p167, %p168
    %p170 = scmp.ne.s32.totalorder %s158, %s159
    %p171 = scmp.eq.s32.totalorder %s23, 1
    %p172 = por %p170, %p171
    %p174 = scmp.ne.s32.totalorder %s159, %s173
    %p175 = scmp.eq.s32.totalorder %s23, 0
    %p176 = por %p174, %p175
    %s178 = sadd.s32 %s177, 1
    %p181 = scmp.eq.s32.totalorder %s17, 1
    %p182 = scmp.ne.s32.totalorder %s177, %s179
    %p183 = scmp.eq.s32.totalorder %s17, 0
    %p184 = por %p182, %p183
    %p185 = scmp.ne.s32.totalorder %s177, %s179
    %p186 = scmp.eq.s32.totalorder %s22, 1
    %p187 = por %p185, %p186
    %p188 = scmp.ne.s32.totalorder %s179, %s180
    %p189 = scmp.eq.s32.totalorder %s22, 0
    %p190 = por %p188, %p189
    %p191 = scmp.ne.s32.totalorder %s179, %s180
    %p192 = scmp.eq.s32.totalorder %s23, 1
    %p193 = por %p191, %p192
    %p195 = scmp.ne.s32.totalorder %s180, %s194
    %p196 = scmp.eq.s32.totalorder %s23, 0
    %p197 = por %p195, %p196
    %s199 = sadd.s32 %s198, 1
    %p202 = scmp.eq.s32.totalorder %s17, 1
    %p203 = scmp.ne.s32.totalorder %s198, %s200
    %p204 = scmp.eq.s32.totalorder %s17, 0
    %p205 = por %p203, %p204
    %p206 = scmp.ne.s32.totalorder %s198, %s200
    %p207 = scmp.eq.s32.totalorder %s22, 1
    %p208 = por %p206, %p207
    %p209 = scmp.ne.s32.totalorder %s200, %s201
    %p210 = scmp.eq.s32.totalorder %s22, 0
    %p211 = por %p209, %p210
    %p212 = scmp.ne.s32.totalorder %s200, %s201
    %p213 = scmp.eq.s32.totalorder %s23, 1
    %p214 = por %p212, %p213
    %p216 = scmp.ne.s32.totalorder %s201, %s215
    %p217 = scmp.eq.s32.totalorder %s23, 0
    %p218 = por %p216, %p217
    %s220 = sadd.s32 %s219, 1
    %p223 = scmp.eq.s32.totalorder %s17, 1
    %p224 = scmp.ne.s32.totalorder %s219, %s221
    %p225 = scmp.eq.s32.totalorder %s17, 0
    %p226 = por %p224, %p225
    %p227 = scmp.ne.s32.totalorder %s219, %s221
    %p228 = scmp.eq.s32.totalorder %s22, 1
    %p229 = por %p227, %p228
    %p230 = scmp.ne.s32.totalorder %s221, %s222
    %p231 = scmp.eq.s32.totalorder %s22, 0
    %p232 = por %p230, %p231
    %p233 = scmp.ne.s32.totalorder %s221, %s222
    %p234 = scmp.eq.s32.totalorder %s23, 1
    %p235 = por %p233, %p234
    %p237 = scmp.ne.s32.totalorder %s222, %s236
    %p238 = scmp.eq.s32.totalorder %s23, 0
    %p239 = por %p237, %p238
    %s241 = sadd.s32 %s240, 1
    %p244 = scmp.eq.s32.totalorder %s17, 1
    %p245 = scmp.ne.s32.totalorder %s240, %s242
    %p246 = scmp.eq.s32.totalorder %s17, 0
    %p247 = por %p245, %p246
    %p248 = scmp.ne.s32.totalorder %s240, %s242
    %p249 = scmp.eq.s32.totalorder %s22, 1
    %p250 = por %p248, %p249
    %p251 = scmp.ne.s32.totalorder %s242, %s243
    %p252 = scmp.eq.s32.totalorder %s22, 0
    %p253 = por %p251, %p252
    %p254 = scmp.ne.s32.totalorder %s242, %s243
    %p255 = scmp.eq.s32.totalorder %s23, 1
    %p256 = por %p254, %p255
    %p258 = scmp.ne.s32.totalorder %s243, %s257
    %p259 = scmp.eq.s32.totalorder %s23, 0
    %p260 = por %p258, %p259
    %s261 = ssub.s32 %s17, %s24
    %p262 = scmp.eq.s32.totalorder %s261, 0
    %s264 = sadd.s32 %s263, 1
    %s265 = scalar_select %p262, %s263, %s264
    %p268 = pneg %p262
    %p269 = scmp.eq.s32.totalorder %s17, 1
    %p270 = por %p268, %p269
    %p271 = scmp.ne.s32.totalorder %s263, %s266
    %p272 = scmp.eq.s32.totalorder %s17, 0
    %p273 = por %p271, %p272
    %p274 = scmp.ne.s32.totalorder %s263, %s266
    %p275 = scmp.eq.s32.totalorder %s22, 1
    %p276 = por %p274, %p275
    %p277 = scmp.ne.s32.totalorder %s266, %s267
    %p278 = scmp.eq.s32.totalorder %s22, 0
    %p279 = por %p277, %p278
    %p280 = scmp.ne.s32.totalorder %s266, %s267
    %p281 = scmp.eq.s32.totalorder %s23, 1
    %p282 = por %p280, %p281
    %p284 = scmp.ne.s32.totalorder %s267, %s283
    %p285 = scmp.eq.s32.totalorder %s23, 0
    %p286 = por %p284, %p285
    %p287 = scmp.le.s32.totalorder 1, %s17
    %p288 = scmp.lt.s32.totalorder %s17, 3
    %p289 = pnand %p287, %p288
    %p290 = pneg %p289
    // Predicated region
    $region9: #{spectral_transform.6} parent=5 // pred_check
      _
    $region10: #{spectral_transform.6} parent=5 // pred_check_branch
      %292 = sbr.rel (%p289) target = $region12
    $region11: #{spectral_transform.6} parent=5 // pred_region
      %s293 = ssub.s32 %s17, 1
      // Predicated region
      $region13: #{spectral_transform.6} parent=11 // pred_check
        %p294 = pneg %p64
      $region14: #{spectral_transform.6} parent=11 // pred_check_branch
        %296 = sbr.rel (%p294) target = $region16
      $region15: #{spectral_transform.6} parent=11 // pred_region
        _
      $region16: #{spectral_transform.6} parent=11 // pred_fallthru
        _
      // Predicated region
      $region17: #{spectral_transform.6} parent=11 // pred_check
        %p297 = pneg %p85
      $region18: #{spectral_transform.6} parent=11 // pred_check_branch
        %299 = sbr.rel (%p297) target = $region20
      $region19: #{spectral_transform.6} parent=11 // pred_region
        _
      $region20: #{spectral_transform.6} parent=11 // pred_fallthru
        _
      // Predicated region
      $region21: #{spectral_transform.6} parent=11 // pred_check
        %p300 = pneg %p106
      $region22: #{spectral_transform.6} parent=11 // pred_check_branch
        %302 = sbr.rel (%p300) target = $region24
      $region23: #{spectral_transform.6} parent=11 // pred_region
        _
      $region24: #{spectral_transform.6} parent=11 // pred_fallthru
        _
      // Predicated region
      $region25: #{spectral_transform.6} parent=11 // pred_check
        %p303 = pneg %p127
      $region26: #{spectral_transform.6} parent=11 // pred_check_branch
        %305 = sbr.rel (%p303) target = $region28
      $region27: #{spectral_transform.6} parent=11 // pred_region
        _
      $region28: #{spectral_transform.6} parent=11 // pred_fallthru
        _
      // Predicated region
      $region29: #{spectral_transform.6} parent=11 // pred_check
        %p306 = pneg %p148
      $region30: #{spectral_transform.6} parent=11 // pred_check_branch
        %308 = sbr.rel (%p306) target = $region32
      $region31: #{spectral_transform.6} parent=11 // pred_region
        _
      $region32: #{spectral_transform.6} parent=11 // pred_fallthru
        _
      // Predicated region
      $region33: #{spectral_transform.6} parent=11 // pred_check
        %p309 = pneg %p169
      $region34: #{spectral_transform.6} parent=11 // pred_check_branch
        %311 = sbr.rel (%p309) target = $region36
      $region35: #{spectral_transform.6} parent=11 // pred_region
        _
      $region36: #{spectral_transform.6} parent=11 // pred_fallthru
        _
      // Predicated region
      $region37: #{spectral_transform.6} parent=11 // pred_check
        %p312 = pneg %p190
      $region38: #{spectral_transform.6} parent=11 // pred_check_branch
        %314 = sbr.rel (%p312) target = $region40
      $region39: #{spectral_transform.6} parent=11 // pred_region
        _
      $region40: #{spectral_transform.6} parent=11 // pred_fallthru
        _
      // Predicated region
      $region41: #{spectral_transform.6} parent=11 // pred_check
        %p315 = pneg %p211
      $region42: #{spectral_transform.6} parent=11 // pred_check_branch
        %317 = sbr.rel (%p315) target = $region44
      $region43: #{spectral_transform.6} parent=11 // pred_region
        _
      $region44: #{spectral_transform.6} parent=11 // pred_fallthru
        _
      // Predicated region
      $region45: #{spectral_transform.6} parent=11 // pred_check
        %p318 = pneg %p232
      $region46: #{spectral_transform.6} parent=11 // pred_check_branch
        %320 = sbr.rel (%p318) target = $region48
      $region47: #{spectral_transform.6} parent=11 // pred_region
        _
      $region48: #{spectral_transform.6} parent=11 // pred_fallthru
        _
      // Predicated region
      $region49: #{spectral_transform.6} parent=11 // pred_check
        %p321 = pneg %p253
      $region50: #{spectral_transform.6} parent=11 // pred_check_branch
        %323 = sbr.rel (%p321) target = $region52
      $region51: #{spectral_transform.6} parent=11 // pred_region
        _
      $region52: #{spectral_transform.6} parent=11 // pred_fallthru
        _
    $region12: #{spectral_transform.6} parent=5 // pred_fallthru
      _
    %p324 = scmp.lt.s32.totalorder %s17, 2
    // Predicated region
    $region53: #{spectral_transform.6} parent=5 // pred_check
      %p325 = pneg %p324
    $region54: #{spectral_transform.6} parent=5 // pred_check_branch
      %327 = sbr.rel (%p325) target = $region56
    $region55: #{spectral_transform.6} parent=5 // pred_region
      // Predicated region
      $region57: #{spectral_transform.6} parent=55 // pred_check
        %p328 = pneg %p37
      $region58: #{spectral_transform.6} parent=55 // pred_check_branch
        %330 = sbr.rel (%p328) target = $region60
      $region59: #{spectral_transform.6} parent=55 // pred_region
        %p331 = scmp.lt.s32.totalorder %s17, 1
        %s332 = scalar_select %p331, %s17, 1
        %s333 = smul.addr %s332, 4
        %s334 = scalar_lea.vmem %s0, %s333
      $region60: #{spectral_transform.6} parent=55 // pred_fallthru
        _
    $region56: #{spectral_transform.6} parent=5 // pred_fallthru
      _
    %p335 = scmp.le.s32.totalorder 1, %s17
    %p336 = scmp.lt.s32.totalorder %s17, 3
    %p337 = pnand %p335, %p336
    %p338 = pneg %p337
    // Predicated region
    $region61: #{spectral_transform.6} parent=5 // pred_check
      _
    $region62: #{spectral_transform.6} parent=5 // pred_check_branch
      %340 = sbr.rel (%p337) target = $region64
    $region63: #{spectral_transform.6} parent=5 // pred_region
      %s341 = ssub.s32 %s17, 1
      %p342 = scmp.lt.s32.totalorder %s22, 1
      %s343 = scalar_select %p342, %s22, 1
      %s344 = smul.addr %s343, 4
      %s345 = scalar_lea.vmem %s0, %s344
      %p346 = pneg %p43
      %p347 = pneg %p40
      %p348 = pneg %p64
      %p349 = pneg %p61
      %p350 = pneg %p85
      %p351 = pneg %p82
      %p352 = pneg %p106
      %p353 = pneg %p103
      %p354 = pneg %p127
      %p355 = pneg %p124
      %p356 = pneg %p148
      %p357 = pneg %p145
      %p358 = pneg %p169
      %p359 = pneg %p166
      %p360 = pneg %p190
      %p361 = pneg %p187
      %p362 = pneg %p211
      %p363 = pneg %p208
      %p364 = pneg %p232
      %p365 = pneg %p229
      %p366 = pneg %p253
      %p367 = pneg %p250
      %p368 = pneg %p279
      %p369 = pneg %p276
      %p370 = scmp.lt.s32.totalorder %s22, 1
      %s371 = scalar_select %p370, %s22, 1
      %s372 = smul.addr %s371, 4
      %s373 = scalar_lea.vmem %s11, %s372
      %p374 = scmp.lt.s32.totalorder %s22, 1
      %s375 = scalar_select %p374, %s22, 1
      %s376 = smul.addr %s375, 4
      %s377 = scalar_lea.vmem %s0, %s376
      %p378 = scmp.lt.s32.totalorder %s22, 1
      %s379 = scalar_select %p378, %s22, 1
      %s380 = smul.addr %s379, 4
      %s381 = scalar_lea.vmem %s11, %s380
      %v382 = vld [vmem:[%s1] sm:$0xff]
      %v383 = vld [vmem:[%s1 + $0x8] sm:$0xff]
      %v384 = vld [vmem:[%s1 + $0x10] sm:$0xff]
      %v385 = vld [vmem:[%s1 + $0x18] sm:$0xff]
      %v386 = vld [vmem:[%s1 + $0x20] sm:$0xff]
      %v387 = vld [vmem:[%s1 + $0x28] sm:$0xff]
      %v388 = vld [vmem:[%s1 + $0x30] sm:$0xff]
      %v389 = vld [vmem:[%s1 + $0x38] sm:$0xff]
      %v390 = vld [vmem:[%s2] sm:$0xff]
      %v391 = vld [vmem:[%s2 + $0x8] sm:$0xff]
      %v392 = vld [vmem:[%s2 + $0x10] sm:$0xff]
      %v393 = vld [vmem:[%s2 + $0x18] sm:$0xff]
      %v394 = vld [vmem:[%s2 + $0x20] sm:$0xff]
      %v395 = vld [vmem:[%s2 + $0x28] sm:$0xff]
      %v396 = vld [vmem:[%s2 + $0x30] sm:$0xff]
      %v397 = vld [vmem:[%s2 + $0x38] sm:$0xff]
      %v398 = vld [vmem:[%s377] sm:$0xf]
      %vm399 = vcmask 523264
      %v401 = vsel %vm399, %v398, 0
      %403 = vmatpush.msra.mxu0 0.0
      %404 = vmatpush.msra.mxu0 0.0
      %405 = vmatpush.msra.mxu0 0.0
      %406 = vmatpush.msra.mxu0 0.0
      %407 = vmatpush.msra.mxu0 0.0
      %408 = vmatpush.msra.mxu0 0.0
      %409 = vmatpush.msra.mxu0 0.0
      %410 = vmatpush.msra.mxu0 0.0
      %411 = vmatpush.msra.mxu0 %v389
      %412 = vmatpush.msra.mxu0 %v388
      %413 = vmatpush.msra.mxu0 %v387
      %414 = vmatpush.msra.mxu0 %v386
      %415 = vmatpush.msra.mxu0 %v385
      %416 = vmatpush.msra.mxu0 %v384
      %417 = vmatpush.msra.mxu0 %v383
      %418 = vmatpush.msra.mxu0 %v382
      %419 = vmatmul.f32.gmra.mxu0 %v401
      %v420 = vpop.f32.mrf.mxu0
      %v421 = vadd.f32 0.0, %v420
      %422 = vdwg.mxu0
      %423 = vmatpush.msra.mxu0 0.0
      %424 = vmatpush.msra.mxu0 0.0
      %425 = vmatpush.msra.mxu0 0.0
      %426 = vmatpush.msra.mxu0 0.0
      %427 = vmatpush.msra.mxu0 0.0
      %428 = vmatpush.msra.mxu0 0.0
      %429 = vmatpush.msra.mxu0 0.0
      %430 = vmatpush.msra.mxu0 0.0
      %431 = vmatpush.msra.mxu0 %v397
      %432 = vmatpush.msra.mxu0 %v396
      %433 = vmatpush.msra.mxu0 %v395
      %434 = vmatpush.msra.mxu0 %v394
      %435 = vmatpush.msra.mxu0 %v393
      %436 = vmatpush.msra.mxu0 %v392
      %437 = vmatpush.msra.mxu0 %v391
      %438 = vmatpush.msra.mxu0 %v390
      %439 = vmatmul.f32.gmra.mxu0 %v401
      %v440 = vpop.f32.mrf.mxu0
      %v441 = vadd.f32 0.0, %v440
      %442 = vdwg.mxu0
      %v443 = vld [vmem:[%s3] sm:$0xf]
      %v444 = vld [vmem:[%s4] sm:$0xf]
      %vm445 = vcmask 31744
      %v447 = vsel %vm445, %v444, 0
      %vm449 = vcmask 1043456
      %v451 = vsel %vm449, %v441, 0
      %453 = vmatpush.msra.mxu0 0.0
      %454 = vmatpush.msra.mxu0 0.0
      %455 = vmatpush.msra.mxu0 0.0
      %456 = vmatpush.msra.mxu0 0.0
      %457 = vmatpush.msra.mxu0 0.0
      %458 = vmatpush.msra.mxu0 0.0
      %459 = vmatpush.msra.mxu0 0.0
      %460 = vmatpush.msra.mxu0 0.0
      %461 = vmatpush.msra.mxu0 0.0
      %462 = vmatpush.msra.mxu0 0.0
      %463 = vmatpush.msra.mxu0 0.0
      %464 = vmatpush.msra.mxu0 0.0
      %465 = vmatpush.msra.mxu0 0.0
      %466 = vmatpush.msra.mxu0 0.0
      %467 = vmatpush.msra.mxu0 0.0
      %468 = vmatpush.msra.mxu0 %v451
      %469 = vmatmul.f32.gmra.mxu0 %v447
      %v470 = vpop.f32.mrf.mxu0
      %v471 = vadd.f32 0.0, %v470
      %472 = vdwg.mxu0
      %v474 = vsel %vm445, %v443, 0
      %v477 = vsel %vm449, %v421, 0
      %479 = vmatpush.msra.mxu0 0.0
      %480 = vmatpush.msra.mxu0 0.0
      %481 = vmatpush.msra.mxu0 0.0
      %482 = vmatpush.msra.mxu0 0.0
      %483 = vmatpush.msra.mxu0 0.0
      %484 = vmatpush.msra.mxu0 0.0
      %485 = vmatpush.msra.mxu0 0.0
      %486 = vmatpush.msra.mxu0 0.0
      %487 = vmatpush.msra.mxu0 0.0
      %488 = vmatpush.msra.mxu0 0.0
      %489 = vmatpush.msra.mxu0 0.0
      %490 = vmatpush.msra.mxu0 0.0
      %491 = vmatpush.msra.mxu0 0.0
      %492 = vmatpush.msra.mxu0 0.0
      %493 = vmatpush.msra.mxu0 0.0
      %494 = vmatpush.msra.mxu0 %v477
      %495 = vmatmul.f32.gmra.mxu0 %v474
      %v496 = vpop.f32.mrf.mxu0
      %v497 = vadd.f32 %v471, %v496
      %498 = vdwg.mxu0
      %v499 = vld [vmem:[%s5] sm:$0xf]
      %v500 = vld [vmem:[%s6] sm:$0xf]
      %v502 = vsel %vm445, %v500, 0
      %504 = vmatpush.msra.mxu0 0.0
      %505 = vmatpush.msra.mxu0 0.0
      %506 = vmatpush.msra.mxu0 0.0
      %507 = vmatpush.msra.mxu0 0.0
      %508 = vmatpush.msra.mxu0 0.0
      %509 = vmatpush.msra.mxu0 0.0
      %510 = vmatpush.msra.mxu0 0.0
      %511 = vmatpush.msra.mxu0 0.0
      %512 = vmatpush.msra.mxu0 0.0
      %513 = vmatpush.msra.mxu0 0.0
      %514 = vmatpush.msra.mxu0 0.0
      %515 = vmatpush.msra.mxu0 0.0
      %516 = vmatpush.msra.mxu0 0.0
      %517 = vmatpush.msra.mxu0 0.0
      %518 = vmatpush.msra.mxu0 0.0
      %519 = vmatpush.msra.mxu0 %v451
      %520 = vmatmul.f32.gmra.mxu0 %v502
      %v521 = vpop.f32.mrf.mxu0
      %v522 = vadd.f32 0.0, %v521
      %523 = vdwg.mxu0
      %v525 = vsel %vm445, %v499, 0
      %527 = vmatpush.msra.mxu0 0.0
      %528 = vmatpush.msra.mxu0 0.0
      %529 = vmatpush.msra.mxu0 0.0
      %530 = vmatpush.msra.mxu0 0.0
      %531 = vmatpush.msra.mxu0 0.0
      %532 = vmatpush.msra.mxu0 0.0
      %533 = vmatpush.msra.mxu0 0.0
      %534 = vmatpush.msra.mxu0 0.0
      %535 = vmatpush.msra.mxu0 0.0
      %536 = vmatpush.msra.mxu0 0.0
      %537 = vmatpush.msra.mxu0 0.0
      %538 = vmatpush.msra.mxu0 0.0
      %539 = vmatpush.msra.mxu0 0.0
      %540 = vmatpush.msra.mxu0 0.0
      %541 = vmatpush.msra.mxu0 0.0
      %542 = vmatpush.msra.mxu0 %v477
      %543 = vmatmul.f32.gmra.mxu0 %v525
      %v544 = vpop.f32.mrf.mxu0
      %v545 = vadd.f32 %v522, %v544
      %546 = vdwg.mxu0
      %v547 = vld [vmem:[%s7] sm:$0xf]
      %549 = vset.pattern.permute.xlu0 0
      %550 = vperm.xlu0 %549, %v547
      %v551 = vpop.permute.xlu0 %550
      %v553 = vmul.f32 %v497, %v551
      %v554 = vld [vmem:[%s8] sm:$0xf]
      %556 = vset.pattern.permute.xlu0 0
      %557 = vperm.xlu0 %556, %v554
      %v558 = vpop.permute.xlu0 %557
      %v560 = vadd.f32 %v553, %v558
      %v561 = vmax.f32 %v560, 0.0
      %v562 = vld [vmem:[%s9] sm:$0xf]
      %564 = vset.pattern.permute.xlu0 0
      %565 = vperm.xlu0 %564, %v562
      %v566 = vpop.permute.xlu0 %565
      %v568 = vmul.f32 %v545, %v566
      %v569 = vld [vmem:[%s10] sm:$0xf]
      %571 = vset.pattern.permute.xlu0 0
      %572 = vperm.xlu0 %571, %v569
      %v573 = vpop.permute.xlu0 %572
      %v575 = vadd.f32 %v568, %v573
      %v576 = vmax.f32 %v575, 0.0
      %v578 = vsel %vm399, %v576, 0
      %580 = vmatpush.msra.mxu0 0.0
      %581 = vmatpush.msra.mxu0 0.0
      %582 = vmatpush.msra.mxu0 0.0
      %583 = vmatpush.msra.mxu0 0.0
      %584 = vmatpush.msra.mxu0 0.0
      %585 = vmatpush.msra.mxu0 0.0
      %586 = vmatpush.msra.mxu0 0.0
      %587 = vmatpush.msra.mxu0 0.0
      %588 = vmatpush.msra.mxu0 %v397
      %589 = vmatpush.msra.mxu0 %v396
      %590 = vmatpush.msra.mxu0 %v395
      %591 = vmatpush.msra.mxu0 %v394
      %592 = vmatpush.msra.mxu0 %v393
      %593 = vmatpush.msra.mxu0 %v392
      %594 = vmatpush.msra.mxu0 %v391
      %595 = vmatpush.msra.mxu0 %v390
      %596 = vmatmul.f32.gmra.mxu0 %v578
      %v597 = vpop.f32.mrf.mxu0
      %v598 = vadd.f32 0.0, %v597
      %599 = vdwg.mxu0
      %v601 = vsel %vm399, %v561, 0
      %603 = vmatpush.msra.mxu0 0.0
      %604 = vmatpush.msra.mxu0 0.0
      %605 = vmatpush.msra.mxu0 0.0
      %606 = vmatpush.msra.mxu0 0.0
      %607 = vmatpush.msra.mxu0 0.0
      %608 = vmatpush.msra.mxu0 0.0
      %609 = vmatpush.msra.mxu0 0.0
      %610 = vmatpush.msra.mxu0 0.0
      %611 = vmatpush.msra.mxu0 %v389
      %612 = vmatpush.msra.mxu0 %v388
      %613 = vmatpush.msra.mxu0 %v387
      %614 = vmatpush.msra.mxu0 %v386
      %615 = vmatpush.msra.mxu0 %v385
      %616 = vmatpush.msra.mxu0 %v384
      %617 = vmatpush.msra.mxu0 %v383
      %618 = vmatpush.msra.mxu0 %v382
      %619 = vmatmul.f32.gmra.mxu0 %v601
      %v620 = vpop.f32.mrf.mxu0
      %v621 = vadd.f32 %v598, %v620
      %622 = vdwg.mxu0
      %vm623 = vcmask 519168
      %624 = vst.msk [vmem:[%s381] sm:$0xf] %vm623, %v621
      %p625 = scmp.lt.s32.totalorder %s22, 1
      %s626 = scalar_select %p625, %s22, 1
      %s627 = smul.addr %s626, 4
      %s628 = scalar_lea.vmem %s11, %s627
      // Predicated region
      $region65: #{spectral_transform.6} parent=63 // pred_check
        %p629 = pneg %p276
      $region66: #{spectral_transform.6} parent=63 // pred_check_branch
        %631 = sbr.rel (%p629) target = $region68
      $region67: #{spectral_transform.6} parent=63 // pred_region
        _
      $region68: #{spectral_transform.6} parent=63 // pred_fallthru
        _
    $region64: #{spectral_transform.6} parent=5 // pred_fallthru
      _
    %p632 = scmp.le.s32.totalorder 2, %s17
    // Predicated region
    $region69: #{spectral_transform.6} parent=5 // pred_check
      %p633 = pneg %p632
    $region70: #{spectral_transform.6} parent=5 // pred_check_branch
      %635 = sbr.rel (%p633) target = $region72
    $region71: #{spectral_transform.6} parent=5 // pred_region
      %s636 = ssub.s32 %s17, 2
      // Predicated region
      $region73: #{spectral_transform.6} parent=71 // pred_check
        %p637 = pneg %p282
      $region74: #{spectral_transform.6} parent=71 // pred_check_branch
        %639 = sbr.rel (%p637) target = $region76
      $region75: #{spectral_transform.6} parent=71 // pred_region
        %p640 = scmp.lt.s32.totalorder %s23, 1
        %s641 = scalar_select %p640, %s23, 1
        %s642 = smul.addr %s641, 4
        %s643 = scalar_lea.vmem %s11, %s642
      $region76: #{spectral_transform.6} parent=71 // pred_fallthru
        _
    $region72: #{spectral_transform.6} parent=5 // pred_fallthru
      _
  $region6: #{spectral_transform.6} parent=0 // loop_footer
    %s21 = sadd.s32 1, %s17
  $region7: #{spectral_transform.6} parent=0 // loop_footer_branch
    %16 = sbr.rel target = $region3
  $region8: #{spectral_transform.6} parent=0 // loop_exit
    _

// kernel: spectral_transform.7
$region0: #{spectral_transform.7}
  #allocation0 [shape = 'u32[]', space=smem, size = 0x4, offset = 0x4, fixed_abs, tag = 'smem constant byte address 0x4 - core index']
  #allocation1 [shape = 'u32[72,128]{1,0:T(1,128)}', space=vmem, size = 0x9000, scoped, tag = 'internal scratch']
  %s0 = inlined_call_operand.vmem [shape: f32[2,4,256], index: 0, kind: input, shape index: {}]
  %s1 = inlined_call_operand.vmem [shape: f32[2,4,256], index: 1, kind: input, shape index: {}]
  %s2 = inlined_call_operand.vmem [shape: f32[2,4,256], index: 2, kind: input, shape index: {}]
  %s3 = inlined_call_operand.vmem [shape: f32[8,4], index: 3, kind: input, shape index: {}]
  %s4 = inlined_call_operand.vmem [shape: f32[2,8,256], index: 4, kind: output, shape index: {}]
  %s5 = sld [smem:[#allocation0]]
  $region49: #{spectral_transform.7} parent=0
    _
  %s7 = ssub.s32 1, %s5
  %s8 = scalar_select 0, %s7, %s5
  loop: start=0, step=1, limit=4
  $region2: #{spectral_transform.7} parent=0 // loop_pre_header
    _
  $region3: #{spectral_transform.7} parent=0 // loop_header
    %s10 = sphi 0, %s14
    %p11 = scmp.ge.s32.totalorder %s10, 4
    %s17 = sphi 0, %s29
    %s18 = sphi 0, %s25
    %s19 = sphi 0, %s17
    %s20 = sphi 0, %s18
    %s21 = sphi 0, %s19
    %s22 = sphi 0, %s20
    %s34 = sphi 0, %s36
    %s37 = sphi 0, %s34
    %s38 = sphi 0, %s37
    %s54 = sphi 0, %s38
    %s62 = sphi 0, %s64
    %s65 = sphi 0, %s62
    %s66 = sphi 0, %s65
    %s82 = sphi 0, %s66
    %s90 = sphi 0, %s92
    %s93 = sphi 0, %s90
    %s94 = sphi 0, %s93
    %s110 = sphi 0, %s94
    %s114 = sphi 0, %s114
    %s116 = sphi 0, %s114
    %s117 = sphi 0, %s116
    %s131 = sphi 0, %s117
    %s139 = sphi 0, %s141
    %s142 = sphi 0, %s139
    %s143 = sphi 0, %s142
    %s159 = sphi 0, %s143
  $region4: #{spectral_transform.7} parent=0 // loop_header_branch
    %13 = sbr.rel (%p11) target = $region8
  $region5: #{spectral_transform.7} parent=0 // loop_body
    %s15 = ssub.s32 %s10, 1
    %s16 = ssub.s32 %s10, 2
    %s23 = sadd.s32 1, %s18
    %p24 = scmp.ge.s32.totalorder %s23, 1
    %s25 = scalar_select %p24, 0, %s23
    %s26 = sadd.s32 1, %s17
    %s27 = scalar_select %p24, %s26, %s17
    %p28 = scmp.ge.s32.totalorder %s27, 2
    %s29 = scalar_select %p28, 0, %s27
    %s30 = ssub.s32 %s17, %s29
    %s31 = ssub.s32 %s18, %s25
    %s32 = sor.u32 %s30, %s31
    %p33 = scmp.eq.s32.totalorder %s32, 0
    %s35 = sadd.s32 %s34, 1
    %s36 = scalar_select %p33, %s34, %s35
    %p39 = pneg %p33
    %p40 = scmp.eq.s32.totalorder %s10, 1
    %p41 = por %p39, %p40
    %p42 = scmp.ne.s32.totalorder %s34, %s37
    %p43 = scmp.eq.s32.totalorder %s10, 0
    %p44 = por %p42, %p43
    %p45 = scmp.ne.s32.totalorder %s34, %s37
    %p46 = scmp.eq.s32.totalorder %s15, 1
    %p47 = por %p45, %p46
    %p48 = scmp.ne.s32.totalorder %s37, %s38
    %p49 = scmp.eq.s32.totalorder %s15, 0
    %p50 = por %p48, %p49
    %p51 = scmp.ne.s32.totalorder %s37, %s38
    %p52 = scmp.eq.s32.totalorder %s16, 1
    %p53 = por %p51, %p52
    %p55 = scmp.ne.s32.totalorder %s38, %s54
    %p56 = scmp.eq.s32.totalorder %s16, 0
    %p57 = por %p55, %p56
    %s58 = ssub.s32 %s17, %s29
    %s59 = ssub.s32 %s18, %s25
    %s60 = sor.u32 %s58, %s59
    %p61 = scmp.eq.s32.totalorder %s60, 0
    %s63 = sadd.s32 %s62, 1
    %s64 = scalar_select %p61, %s62, %s63
    %p67 = pneg %p61
    %p68 = scmp.eq.s32.totalorder %s10, 1
    %p69 = por %p67, %p68
    %p70 = scmp.ne.s32.totalorder %s62, %s65
    %p71 = scmp.eq.s32.totalorder %s10, 0
    %p72 = por %p70, %p71
    %p73 = scmp.ne.s32.totalorder %s62, %s65
    %p74 = scmp.eq.s32.totalorder %s15, 1
    %p75 = por %p73, %p74
    %p76 = scmp.ne.s32.totalorder %s65, %s66
    %p77 = scmp.eq.s32.totalorder %s15, 0
    %p78 = por %p76, %p77
    %p79 = scmp.ne.s32.totalorder %s65, %s66
    %p80 = scmp.eq.s32.totalorder %s16, 1
    %p81 = por %p79, %p80
    %p83 = scmp.ne.s32.totalorder %s66, %s82
    %p84 = scmp.eq.s32.totalorder %s16, 0
    %p85 = por %p83, %p84
    %s86 = ssub.s32 %s17, %s29
    %s87 = ssub.s32 %s18, %s25
    %s88 = sor.u32 %s86, %s87
    %p89 = scmp.eq.s32.totalorder %s88, 0
    %s91 = sadd.s32 %s90, 1
    %s92 = scalar_select %p89, %s90, %s91
    %p95 = pneg %p89
    %p96 = scmp.eq.s32.totalorder %s10, 1
    %p97 = por %p95, %p96
    %p98 = scmp.ne.s32.totalorder %s90, %s93
    %p99 = scmp.eq.s32.totalorder %s10, 0
    %p100 = por %p98, %p99
    %p101 = scmp.ne.s32.totalorder %s90, %s93
    %p102 = scmp.eq.s32.totalorder %s15, 1
    %p103 = por %p101, %p102
    %p104 = scmp.ne.s32.totalorder %s93, %s94
    %p105 = scmp.eq.s32.totalorder %s15, 0
    %p106 = por %p104, %p105
    %p107 = scmp.ne.s32.totalorder %s93, %s94
    %p108 = scmp.eq.s32.totalorder %s16, 1
    %p109 = por %p107, %p108
    %p111 = scmp.ne.s32.totalorder %s94, %s110
    %p112 = scmp.eq.s32.totalorder %s16, 0
    %p113 = por %p111, %p112
    %s115 = sadd.s32 %s114, 1
    %p118 = scmp.eq.s32.totalorder %s10, 1
    %p119 = scmp.ne.s32.totalorder %s114, %s116
    %p120 = scmp.eq.s32.totalorder %s10, 0
    %p121 = por %p119, %p120
    %p122 = scmp.ne.s32.totalorder %s114, %s116
    %p123 = scmp.eq.s32.totalorder %s15, 1
    %p124 = por %p122, %p123
    %p125 = scmp.ne.s32.totalorder %s116, %s117
    %p126 = scmp.eq.s32.totalorder %s15, 0
    %p127 = por %p125, %p126
    %p128 = scmp.ne.s32.totalorder %s116, %s117
    %p129 = scmp.eq.s32.totalorder %s16, 1
    %p130 = por %p128, %p129
    %p132 = scmp.ne.s32.totalorder %s117, %s131
    %p133 = scmp.eq.s32.totalorder %s16, 0
    %p134 = por %p132, %p133
    %s135 = ssub.s32 %s17, %s29
    %s136 = ssub.s32 %s18, %s25
    %s137 = sor.u32 %s135, %s136
    %p138 = scmp.eq.s32.totalorder %s137, 0
    %s140 = sadd.s32 %s139, 1
    %s141 = scalar_select %p138, %s139, %s140
    %p144 = pneg %p138
    %p145 = scmp.eq.s32.totalorder %s10, 1
    %p146 = por %p144, %p145
    %p147 = scmp.ne.s32.totalorder %s139, %s142
    %p148 = scmp.eq.s32.totalorder %s10, 0
    %p149 = por %p147, %p148
    %p150 = scmp.ne.s32.totalorder %s139, %s142
    %p151 = scmp.eq.s32.totalorder %s15, 1
    %p152 = por %p150, %p151
    %p153 = scmp.ne.s32.totalorder %s142, %s143
    %p154 = scmp.eq.s32.totalorder %s15, 0
    %p155 = por %p153, %p154
    %p156 = scmp.ne.s32.totalorder %s142, %s143
    %p157 = scmp.eq.s32.totalorder %s16, 1
    %p158 = por %p156, %p157
    %p160 = scmp.ne.s32.totalorder %s143, %s159
    %p161 = scmp.eq.s32.totalorder %s16, 0
    %p162 = por %p160, %p161
    %p163 = scmp.le.s32.totalorder 1, %s10
    %p164 = scmp.lt.s32.totalorder %s10, 3
    %p165 = pnand %p163, %p164
    %p166 = pneg %p165
    // Predicated region
    $region9: #{spectral_transform.7} parent=5 // pred_check
      _
    $region10: #{spectral_transform.7} parent=5 // pred_check_branch
      %168 = sbr.rel (%p165) target = $region12
    $region11: #{spectral_transform.7} parent=5 // pred_region
      %s169 = ssub.s32 %s10, 1
      // Predicated region
      $region13: #{spectral_transform.7} parent=11 // pred_check
        %p170 = pneg %p127
      $region14: #{spectral_transform.7} parent=11 // pred_check_branch
        %172 = sbr.rel (%p170) target = $region16
      $region15: #{spectral_transform.7} parent=11 // pred_region
        _
      $region16: #{spectral_transform.7} parent=11 // pred_fallthru
        _
    $region12: #{spectral_transform.7} parent=5 // pred_fallthru
      _
    %p173 = scmp.lt.s32.totalorder %s10, 2
    // Predicated region
    $region17: #{spectral_transform.7} parent=5 // pred_check
      %p174 = pneg %p173
    $region18: #{spectral_transform.7} parent=5 // pred_check_branch
      %176 = sbr.rel (%p174) target = $region20
    $region19: #{spectral_transform.7} parent=5 // pred_region
      // Predicated region
      $region21: #{spectral_transform.7} parent=19 // pred_check
        %p177 = pneg %p44
      $region22: #{spectral_transform.7} parent=19 // pred_check_branch
        %179 = sbr.rel (%p177) target = $region24
      $region23: #{spectral_transform.7} parent=19 // pred_region
        %s180 = smul.u32 2, %s18
        %p181 = scmp.lt.s32.totalorder %s17, 1
        %s182 = scalar_select %p181, %s17, 1
        %p183 = scmp.lt.s32.totalorder %s180, 1
        %s184 = scalar_select %p183, %s180, 1
        %s185 = smul.addr %s182, 2
        %s186 = sadd.s32 %s184, %s185
        %s187 = smul.addr %s186, 4
        %s188 = scalar_lea.vmem %s0, %s187
        %s189 = smul.u32 2, %s18
      $region24: #{spectral_transform.7} parent=19 // pred_fallthru
        _
      // Predicated region
      $region25: #{spectral_transform.7} parent=19 // pred_check
        %p190 = pneg %p72
      $region26: #{spectral_transform.7} parent=19 // pred_check_branch
        %192 = sbr.rel (%p190) target = $region28
      $region27: #{spectral_transform.7} parent=19 // pred_region
        %s193 = smul.u32 2, %s18
        %p194 = scmp.lt.s32.totalorder %s17, 1
        %s195 = scalar_select %p194, %s17, 1
        %p196 = scmp.lt.s32.totalorder %s193, 1
        %s197 = scalar_select %p196, %s193, 1
        %s198 = smul.addr %s195, 2
        %s199 = sadd.s32 %s197, %s198
        %s200 = smul.addr %s199, 4
        %s201 = scalar_lea.vmem %s1, %s200
        %s202 = smul.u32 2, %s18
      $region28: #{spectral_transform.7} parent=19 // pred_fallthru
        _
      // Predicated region
      $region29: #{spectral_transform.7} parent=19 // pred_check
        %p203 = pneg %p100
      $region30: #{spectral_transform.7} parent=19 // pred_check_branch
        %205 = sbr.rel (%p203) target = $region32
      $region31: #{spectral_transform.7} parent=19 // pred_region
        %s206 = smul.u32 2, %s18
        %p207 = scmp.lt.s32.totalorder %s17, 1
        %s208 = scalar_select %p207, %s17, 1
        %p209 = scmp.lt.s32.totalorder %s206, 1
        %s210 = scalar_select %p209, %s206, 1
        %s211 = smul.addr %s208, 2
        %s212 = sadd.s32 %s210, %s211
        %s213 = smul.addr %s212, 4
        %s214 = scalar_lea.vmem %s2, %s213
        %s215 = smul.u32 2, %s18
      $region32: #{spectral_transform.7} parent=19 // pred_fallthru
        _
    $region20: #{spectral_transform.7} parent=5 // pred_fallthru
      _
    %p216 = scmp.le.s32.totalorder 1, %s10
    %p217 = scmp.lt.s32.totalorder %s10, 3
    %p218 = pnand %p216, %p217
    %p219 = pneg %p218
    // Predicated region
    $region33: #{spectral_transform.7} parent=5 // pred_check
      _
    $region34: #{spectral_transform.7} parent=5 // pred_check_branch
      %221 = sbr.rel (%p218) target = $region36
    $region35: #{spectral_transform.7} parent=5 // pred_region
      %s222 = ssub.s32 %s10, 1
      %s223 = smul.u32 2, %s20
      %p224 = scmp.lt.s32.totalorder %s19, 1
      %s225 = scalar_select %p224, %s19, 1
      %p226 = scmp.lt.s32.totalorder %s223, 1
      %s227 = scalar_select %p226, %s223, 1
      %s228 = smul.addr %s225, 2
      %s229 = sadd.s32 %s227, %s228
      %s230 = smul.addr %s229, 4
      %s231 = scalar_lea.vmem %s0, %s230
      %p232 = pneg %p50
      %p233 = pneg %p47
      %s234 = smul.u32 2, %s20
      %p235 = scmp.lt.s32.totalorder %s19, 1
      %s236 = scalar_select %p235, %s19, 1
      %p237 = scmp.lt.s32.totalorder %s234, 1
      %s238 = scalar_select %p237, %s234, 1
      %s239 = smul.addr %s236, 2
      %s240 = sadd.s32 %s238, %s239
      %s241 = smul.addr %s240, 4
      %s242 = scalar_lea.vmem %s1, %s241
      %p243 = pneg %p78
      %p244 = pneg %p75
      %s245 = smul.u32 2, %s20
      %p246 = scmp.lt.s32.totalorder %s19, 1
      %s247 = scalar_select %p246, %s19, 1
      %p248 = scmp.lt.s32.totalorder %s245, 1
      %s249 = scalar_select %p248, %s245, 1
      %s250 = smul.addr %s247, 2
      %s251 = sadd.s32 %s249, %s250
      %s252 = smul.addr %s251, 4
      %s253 = scalar_lea.vmem %s2, %s252
      %p254 = pneg %p106
      %p255 = pneg %p103
      %p256 = pneg %p127
      %p257 = pneg %p124
      %p258 = pneg %p155
      %p259 = pneg %p152
      %s260 = smul.u32 2, %s20
      %p261 = scmp.lt.s32.totalorder %s19, 1
      %s262 = scalar_select %p261, %s19, 1
      %p263 = scmp.lt.s32.totalorder %s260, 1
      %s264 = scalar_select %p263, %s260, 1
      %s265 = smul.addr %s262, 2
      %s266 = sadd.s32 %s264, %s265
      %s267 = smul.addr %s266, 8
      %s268 = scalar_lea.vmem %s4, %s267
      %s269 = smul.u32 2, %s20
      %p270 = scmp.lt.s32.totalorder %s19, 1
      %s271 = scalar_select %p270, %s19, 1
      %p272 = scmp.lt.s32.totalorder %s269, 1
      %s273 = scalar_select %p272, %s269, 1
      %s274 = smul.addr %s271, 2
      %s275 = sadd.s32 %s273, %s274
      %s276 = smul.addr %s275, 4
      %s277 = scalar_lea.vmem %s0, %s276
      %s278 = smul.u32 2, %s20
      %s279 = smul.u32 2, %s20
      %p280 = scmp.lt.s32.totalorder %s19, 1
      %s281 = scalar_select %p280, %s19, 1
      %p282 = scmp.lt.s32.totalorder %s279, 1
      %s283 = scalar_select %p282, %s279, 1
      %s284 = smul.addr %s281, 2
      %s285 = sadd.s32 %s283, %s284
      %s286 = smul.addr %s285, 4
      %s287 = scalar_lea.vmem %s1, %s286
      %s288 = smul.u32 2, %s20
      %s289 = smul.u32 2, %s20
      %p290 = scmp.lt.s32.totalorder %s19, 1
      %s291 = scalar_select %p290, %s19, 1
      %p292 = scmp.lt.s32.totalorder %s289, 1
      %s293 = scalar_select %p292, %s289, 1
      %s294 = smul.addr %s291, 2
      %s295 = sadd.s32 %s293, %s294
      %s296 = smul.addr %s295, 4
      %s297 = scalar_lea.vmem %s2, %s296
      %s298 = smul.u32 2, %s20
      %s299 = smul.u32 2, %s20
      %p300 = scmp.lt.s32.totalorder %s19, 1
      %s301 = scalar_select %p300, %s19, 1
      %p302 = scmp.lt.s32.totalorder %s299, 1
      %s303 = scalar_select %p302, %s299, 1
      %s304 = smul.addr %s301, 2
      %s305 = sadd.s32 %s303, %s304
      %s306 = smul.addr %s305, 8
      %s307 = scalar_lea.vmem %s4, %s306
      %s308 = smul.u32 2, %s20
      %v309 = vld [vmem:[%s277] sm:$0xff]
      %v310 = vld [vmem:[%s287] sm:$0xff]
      %v311 = vadd.f32 %v309, %v310
      %v312 = vld [vmem:[%s297] sm:$0xff]
      %v313 = vadd.f32 %v311, %v312
      %v314 = vld [vmem:[%s3] sm:$0xff]
      %316 = vst [vmem:[#allocation1] ss:$2 sm:$0xff] %v313
      %v317 = vld.sshfl [vmem:[#allocation1] sm:$0xff pattern:$0x75316420]
      %v318 = vld.sshfl [vmem:[#allocation1 + $0x8] sm:$0xff pattern:$0x75316420]
      %vm319 = vcmask 31744
      %v321 = vsel %vm319, %v314, 0
      %vm323 = vcmask 1043456
      %v324 = vsel %vm323, %v317, 0
      %v326 = vsel %vm323, %v318, 0
      %328 = vmatpush.msra.mxu0 0.0
      %329 = vmatpush.msra.mxu0 0.0
      %330 = vmatpush.msra.mxu0 0.0
      %331 = vmatpush.msra.mxu0 0.0
      %332 = vmatpush.msra.mxu0 0.0
      %333 = vmatpush.msra.mxu0 0.0
      %334 = vmatpush.msra.mxu0 0.0
      %335 = vmatpush.msra.mxu0 0.0
      %336 = vmatpush.msra.mxu0 0.0
      %337 = vmatpush.msra.mxu0 0.0
      %338 = vmatpush.msra.mxu0 0.0
      %339 = vmatpush.msra.mxu0 0.0
      %340 = vmatpush.msra.mxu0 0.0
      %341 = vmatpush.msra.mxu0 0.0
      %342 = vmatpush.msra.mxu0 0.0
      %343 = vmatpush.msra.mxu0 %v324
      %344 = vmatmul.f32.gmra.mxu0 %v321
      %v345 = vpop.f32.mrf.mxu0
      %v346 = vadd.f32 0.0, %v345
      %347 = vdwg.mxu0
      %348 = vmatpush.msra.mxu0 0.0
      %349 = vmatpush.msra.mxu0 0.0
      %350 = vmatpush.msra.mxu0 0.0
      %351 = vmatpush.msra.mxu0 0.0
      %352 = vmatpush.msra.mxu0 0.0
      %353 = vmatpush.msra.mxu0 0.0
      %354 = vmatpush.msra.mxu0 0.0
      %355 = vmatpush.msra.mxu0 0.0
      %356 = vmatpush.msra.mxu0 0.0
      %357 = vmatpush.msra.mxu0 0.0
      %358 = vmatpush.msra.mxu0 0.0
      %359 = vmatpush.msra.mxu0 0.0
      %360 = vmatpush.msra.mxu0 0.0
      %361 = vmatpush.msra.mxu0 0.0
      %362 = vmatpush.msra.mxu0 0.0
      %363 = vmatpush.msra.mxu0 %v326
      %364 = vmatmul.f32.gmra.mxu0 %v321
      %v365 = vpop.f32.mrf.mxu0
      %v366 = vadd.f32 0.0, %v365
      %367 = vdwg.mxu0
      %368 = vst [vmem:[%s307] sm:$0xff] %v346
      %369 = vst [vmem:[%s307 + $0x8] sm:$0xff] %v366
      %s370 = smul.u32 2, %s20
      %p371 = scmp.lt.s32.totalorder %s19, 1
      %s372 = scalar_select %p371, %s19, 1
      %p373 = scmp.lt.s32.totalorder %s370, 1
      %s374 = scalar_select %p373, %s370, 1
      %s375 = smul.addr %s372, 2
      %s376 = sadd.s32 %s374, %s375
      %s377 = smul.addr %s376, 8
      %s378 = scalar_lea.vmem %s4, %s377
      // Predicated region
      $region37: #{spectral_transform.7} parent=35 // pred_check
        %p379 = pneg %p152
      $region38: #{spectral_transform.7} parent=35 // pred_check_branch
        %381 = sbr.rel (%p379) target = $region40
      $region39: #{spectral_transform.7} parent=35 // pred_region
        %s382 = smul.u32 2, %s20
      $region40: #{spectral_transform.7} parent=35 // pred_fallthru
        _
    $region36: #{spectral_transform.7} parent=5 // pred_fallthru
      _
    %p383 = scmp.le.s32.totalorder 2, %s10
    // Predicated region
    $region41: #{spectral_transform.7} parent=5 // pred_check
      %p384 = pneg %p383
    $region42: #{spectral_transform.7} parent=5 // pred_check_branch
      %386 = sbr.rel (%p384) target = $region44
    $region43: #{spectral_transform.7} parent=5 // pred_region
      %s387 = ssub.s32 %s10, 2
      // Predicated region
      $region45: #{spectral_transform.7} parent=43 // pred_check
        %p388 = pneg %p158
      $region46: #{spectral_transform.7} parent=43 // pred_check_branch
        %390 = sbr.rel (%p388) target = $region48
      $region47: #{spectral_transform.7} parent=43 // pred_region
        %s391 = smul.u32 2, %s22
        %p392 = scmp.lt.s32.totalorder %s21, 1
        %s393 = scalar_select %p392, %s21, 1
        %p394 = scmp.lt.s32.totalorder %s391, 1
        %s395 = scalar_select %p394, %s391, 1
        %s396 = smul.addr %s393, 2
        %s397 = sadd.s32 %s395, %s396
        %s398 = smul.addr %s397, 8
        %s399 = scalar_lea.vmem %s4, %s398
      $region48: #{spectral_transform.7} parent=43 // pred_fallthru
        _
    $region44: #{spectral_transform.7} parent=5 // pred_fallthru
      _
  $region6: #{spectral_transform.7} parent=0 // loop_footer
    %s14 = sadd.s32 1, %s10
  $region7: #{spectral_transform.7} parent=0 // loop_footer_branch
    %9 = sbr.rel target = $region3
  $region8: #{spectral_transform.7} parent=0 // loop_exit
    _

// kernel: spectral_transform.5
$region0: #{spectral_transform.5}
  #allocation0 [shape = 'u32[]', space=smem, size = 0x4, offset = 0x4, fixed_abs, tag = 'smem constant byte address 0x4 - core index']
  #allocation1 [shape = 'u32[72,128]{1,0:T(1,128)}', space=vmem, size = 0x9000, scoped, tag = 'internal scratch']
  %s0 = inlined_call_operand.vmem [shape: f32[2,4,256], index: 0, kind: input, shape index: {}]
  %s1 = inlined_call_operand.vmem [shape: f32[256,256], index: 1, kind: input, shape index: {}]
  %s2 = inlined_call_operand.hbm [shape: f32[256,256], index: 2, kind: input, shape index: {}]
  %s3 = inlined_call_operand.vmem [shape: f32[4,4], index: 3, kind: input, shape index: {}]
  %s4 = inlined_call_operand.vmem [shape: f32[4,4], index: 4, kind: input, shape index: {}]
  %s5 = inlined_call_operand.vmem [shape: f32[4,4], index: 5, kind: input, shape index: {}]
  %s6 = inlined_call_operand.vmem [shape: f32[4,4], index: 6, kind: input, shape index: {}]
  %s7 = inlined_call_operand.vmem [shape: f32[4,1], index: 7, kind: input, shape index: {}]
  %s8 = inlined_call_operand.vmem [shape: f32[4,1], index: 8, kind: input, shape index: {}]
  %s9 = inlined_call_operand.vmem [shape: f32[4,1], index: 9, kind: input, shape index: {}]
  %s10 = inlined_call_operand.vmem [shape: f32[4,1], index: 10, kind: input, shape index: {}]
  %s11 = inlined_call_operand.vmem [shape: f32[2,4,256], index: 11, kind: output, shape index: {}]
  %s12 = sld [smem:[#allocation0]]
  $region81: #{spectral_transform.5} parent=0
    _
  %s14 = ssub.s32 1, %s12
  %s15 = scalar_select 0, %s14, %s12
  $region1: #{spectral_transform.5} parent=0
    #allocation2 [shape = 'u8[262144]{0}', space=vmem, size = 0x40000, scoped, tag = 'input window, operand 2, single buffered']
    #allocation3 [shape = 's32[2]{0}', space=sflag, size = 0x8, scoped, tag = 'scoped memory for spectral_transform.5']
    %16 = vsyncpa [#allocation3], 0
    loop: start=0, step=1, limit=4
    $region2: #{spectral_transform.5} parent=1 // loop_pre_header
      _
    $region3: #{spectral_transform.5} parent=1 // loop_header
      %s18 = sphi 0, %s22
      %p19 = scmp.ge.s32.totalorder %s18, 4
      %s28 = sphi 0, %s30
      %s31 = sphi 0, %s28
      %s32 = sphi 0, %s31
      %s48 = sphi 0, %s32
      %s52 = sphi 0, %s52
      %s54 = sphi 0, %s52
      %s55 = sphi 0, %s54
      %s69 = sphi 0, %s55
      %s73 = sphi 0, %s73
      %s75 = sphi 0, %s73
      %s76 = sphi 0, %s75
      %s90 = sphi 0, %s76
      %s94 = sphi 0, %s94
      %s96 = sphi 0, %s94
      %s97 = sphi 0, %s96
      %s111 = sphi 0, %s97
      %s115 = sphi 0, %s115
      %s117 = sphi 0, %s115
      %s118 = sphi 0, %s117
      %s132 = sphi 0, %s118
      %s136 = sphi 0, %s136
      %s138 = sphi 0, %s136
      %s139 = sphi 0, %s138
      %s153 = sphi 0, %s139
      %s157 = sphi 0, %s157
      %s159 = sphi 0, %s157
      %s160 = sphi 0, %s159
      %s174 = sphi 0, %s160
      %s178 = sphi 0, %s178
      %s180 = sphi 0, %s178
      %s181 = sphi 0, %s180
      %s195 = sphi 0, %s181
      %s199 = sphi 0, %s199
      %s201 = sphi 0, %s199
      %s202 = sphi 0, %s201
      %s216 = sphi 0, %s202
      %s220 = sphi 0, %s220
      %s222 = sphi 0, %s220
      %s223 = sphi 0, %s222
      %s237 = sphi 0, %s223
      %s241 = sphi 0, %s241
      %s243 = sphi 0, %s241
      %s244 = sphi 0, %s243
      %s258 = sphi 0, %s244
      %s264 = sphi 0, %s266
      %s267 = sphi 0, %s264
      %s268 = sphi 0, %s267
      %s284 = sphi 0, %s268
    $region4: #{spectral_transform.5} parent=1 // loop_header_branch
      %21 = sbr.rel (%p19) target = $region8
    $region5: #{spectral_transform.5} parent=1 // loop_body
      %s23 = ssub.s32 %s18, 1
      %s24 = ssub.s32 %s18, 2
      %s25 = sadd.s32 %s18, 1
      %s26 = ssub.s32 %s18, %s25
      %p27 = scmp.eq.s32.totalorder %s26, 0
      %s29 = sadd.s32 %s28, 1
      %s30 = scalar_select %p27, %s28, %s29
      %p33 = pneg %p27
      %p34 = scmp.eq.s32.totalorder %s18, 1
      %p35 = por %p33, %p34
      %p36 = scmp.ne.s32.totalorder %s28, %s31
      %p37 = scmp.eq.s32.totalorder %s18, 0
      %p38 = por %p36, %p37
      %p39 = scmp.ne.s32.totalorder %s28, %s31
      %p40 = scmp.eq.s32.totalorder %s23, 1
      %p41 = por %p39, %p40
      %p42 = scmp.ne.s32.totalorder %s31, %s32
      %p43 = scmp.eq.s32.totalorder %s23, 0
      %p44 = por %p42, %p43
      %p45 = scmp.ne.s32.totalorder %s31, %s32
      %p46 = scmp.eq.s32.totalorder %s24, 1
      %p47 = por %p45, %p46
      %p49 = scmp.ne.s32.totalorder %s32, %s48
      %p50 = scmp.eq.s32.totalorder %s24, 0
      %p51 = por %p49, %p50
      %s53 = sadd.s32 %s52, 1
      %p56 = scmp.eq.s32.totalorder %s18, 1
      %p57 = scmp.ne.s32.totalorder %s52, %s54
      %p58 = scmp.eq.s32.totalorder %s18, 0
      %p59 = por %p57, %p58
      %p60 = scmp.ne.s32.totalorder %s52, %s54
      %p61 = scmp.eq.s32.totalorder %s23, 1
      %p62 = por %p60, %p61
      %p63 = scmp.ne.s32.totalorder %s54, %s55
      %p64 = scmp.eq.s32.totalorder %s23, 0
      %p65 = por %p63, %p64
      %p66 = scmp.ne.s32.totalorder %s54, %s55
      %p67 = scmp.eq.s32.totalorder %s24, 1
      %p68 = por %p66, %p67
      %p70 = scmp.ne.s32.totalorder %s55, %s69
      %p71 = scmp.eq.s32.totalorder %s24, 0
      %p72 = por %p70, %p71
      %s74 = sadd.s32 %s73, 1
      %p77 = scmp.eq.s32.totalorder %s18, 1
      %p78 = scmp.ne.s32.totalorder %s73, %s75
      %p79 = scmp.eq.s32.totalorder %s18, 0
      %p80 = por %p78, %p79
      %p81 = scmp.ne.s32.totalorder %s73, %s75
      %p82 = scmp.eq.s32.totalorder %s23, 1
      %p83 = por %p81, %p82
      %p84 = scmp.ne.s32.totalorder %s75, %s76
      %p85 = scmp.eq.s32.totalorder %s23, 0
      %p86 = por %p84, %p85
      %p87 = scmp.ne.s32.totalorder %s75, %s76
      %p88 = scmp.eq.s32.totalorder %s24, 1
      %p89 = por %p87, %p88
      %p91 = scmp.ne.s32.totalorder %s76, %s90
      %p92 = scmp.eq.s32.totalorder %s24, 0
      %p93 = por %p91, %p92
      %s95 = sadd.s32 %s94, 1
      %p98 = scmp.eq.s32.totalorder %s18, 1
      %p99 = scmp.ne.s32.totalorder %s94, %s96
      %p100 = scmp.eq.s32.totalorder %s18, 0
      %p101 = por %p99, %p100
      %p102 = scmp.ne.s32.totalorder %s94, %s96
      %p103 = scmp.eq.s32.totalorder %s23, 1
      %p104 = por %p102, %p103
      %p105 = scmp.ne.s32.totalorder %s96, %s97
      %p106 = scmp.eq.s32.totalorder %s23, 0
      %p107 = por %p105, %p106
      %p108 = scmp.ne.s32.totalorder %s96, %s97
      %p109 = scmp.eq.s32.totalorder %s24, 1
      %p110 = por %p108, %p109
      %p112 = scmp.ne.s32.totalorder %s97, %s111
      %p113 = scmp.eq.s32.totalorder %s24, 0
      %p114 = por %p112, %p113
      %s116 = sadd.s32 %s115, 1
      %p119 = scmp.eq.s32.totalorder %s18, 1
      %p120 = scmp.ne.s32.totalorder %s115, %s117
      %p121 = scmp.eq.s32.totalorder %s18, 0
      %p122 = por %p120, %p121
      %p123 = scmp.ne.s32.totalorder %s115, %s117
      %p124 = scmp.eq.s32.totalorder %s23, 1
      %p125 = por %p123, %p124
      %p126 = scmp.ne.s32.totalorder %s117, %s118
      %p127 = scmp.eq.s32.totalorder %s23, 0
      %p128 = por %p126, %p127
      %p129 = scmp.ne.s32.totalorder %s117, %s118
      %p130 = scmp.eq.s32.totalorder %s24, 1
      %p131 = por %p129, %p130
      %p133 = scmp.ne.s32.totalorder %s118, %s132
      %p134 = scmp.eq.s32.totalorder %s24, 0
      %p135 = por %p133, %p134
      %s137 = sadd.s32 %s136, 1
      %p140 = scmp.eq.s32.totalorder %s18, 1
      %p141 = scmp.ne.s32.totalorder %s136, %s138
      %p142 = scmp.eq.s32.totalorder %s18, 0
      %p143 = por %p141, %p142
      %p144 = scmp.ne.s32.totalorder %s136, %s138
      %p145 = scmp.eq.s32.totalorder %s23, 1
      %p146 = por %p144, %p145
      %p147 = scmp.ne.s32.totalorder %s138, %s139
      %p148 = scmp.eq.s32.totalorder %s23, 0
      %p149 = por %p147, %p148
      %p150 = scmp.ne.s32.totalorder %s138, %s139
      %p151 = scmp.eq.s32.totalorder %s24, 1
      %p152 = por %p150, %p151
      %p154 = scmp.ne.s32.totalorder %s139, %s153
      %p155 = scmp.eq.s32.totalorder %s24, 0
      %p156 = por %p154, %p155
      %s158 = sadd.s32 %s157, 1
      %p161 = scmp.eq.s32.totalorder %s18, 1
      %p162 = scmp.ne.s32.totalorder %s157, %s159
      %p163 = scmp.eq.s32.totalorder %s18, 0
      %p164 = por %p162, %p163
      %p165 = scmp.ne.s32.totalorder %s157, %s159
      %p166 = scmp.eq.s32.totalorder %s23, 1
      %p167 = por %p165, %p166
      %p168 = scmp.ne.s32.totalorder %s159, %s160
      %p169 = scmp.eq.s32.totalorder %s23, 0
      %p170 = por %p168, %p169
      %p171 = scmp.ne.s32.totalorder %s159, %s160
      %p172 = scmp.eq.s32.totalorder %s24, 1
      %p173 = por %p171, %p172
      %p175 = scmp.ne.s32.totalorder %s160, %s174
      %p176 = scmp.eq.s32.totalorder %s24, 0
      %p177 = por %p175, %p176
      %s179 = sadd.s32 %s178, 1
      %p182 = scmp.eq.s32.totalorder %s18, 1
      %p183 = scmp.ne.s32.totalorder %s178, %s180
      %p184 = scmp.eq.s32.totalorder %s18, 0
      %p185 = por %p183, %p184
      %p186 = scmp.ne.s32.totalorder %s178, %s180
      %p187 = scmp.eq.s32.totalorder %s23, 1
      %p188 = por %p186, %p187
      %p189 = scmp.ne.s32.totalorder %s180, %s181
      %p190 = scmp.eq.s32.totalorder %s23, 0
      %p191 = por %p189, %p190
      %p192 = scmp.ne.s32.totalorder %s180, %s181
      %p193 = scmp.eq.s32.totalorder %s24, 1
      %p194 = por %p192, %p193
      %p196 = scmp.ne.s32.totalorder %s181, %s195
      %p197 = scmp.eq.s32.totalorder %s24, 0
      %p198 = por %p196, %p197
      %s200 = sadd.s32 %s199, 1
      %p203 = scmp.eq.s32.totalorder %s18, 1
      %p204 = scmp.ne.s32.totalorder %s199, %s201
      %p205 = scmp.eq.s32.totalorder %s18, 0
      %p206 = por %p204, %p205
      %p207 = scmp.ne.s32.totalorder %s199, %s201
      %p208 = scmp.eq.s32.totalorder %s23, 1
      %p209 = por %p207, %p208
      %p210 = scmp.ne.s32.totalorder %s201, %s202
      %p211 = scmp.eq.s32.totalorder %s23, 0
      %p212 = por %p210, %p211
      %p213 = scmp.ne.s32.totalorder %s201, %s202
      %p214 = scmp.eq.s32.totalorder %s24, 1
      %p215 = por %p213, %p214
      %p217 = scmp.ne.s32.totalorder %s202, %s216
      %p218 = scmp.eq.s32.totalorder %s24, 0
      %p219 = por %p217, %p218
      %s221 = sadd.s32 %s220, 1
      %p224 = scmp.eq.s32.totalorder %s18, 1
      %p225 = scmp.ne.s32.totalorder %s220, %s222
      %p226 = scmp.eq.s32.totalorder %s18, 0
      %p227 = por %p225, %p226
      %p228 = scmp.ne.s32.totalorder %s220, %s222
      %p229 = scmp.eq.s32.totalorder %s23, 1
      %p230 = por %p228, %p229
      %p231 = scmp.ne.s32.totalorder %s222, %s223
      %p232 = scmp.eq.s32.totalorder %s23, 0
      %p233 = por %p231, %p232
      %p234 = scmp.ne.s32.totalorder %s222, %s223
      %p235 = scmp.eq.s32.totalorder %s24, 1
      %p236 = por %p234, %p235
      %p238 = scmp.ne.s32.totalorder %s223, %s237
      %p239 = scmp.eq.s32.totalorder %s24, 0
      %p240 = por %p238, %p239
      %s242 = sadd.s32 %s241, 1
      %p245 = scmp.eq.s32.totalorder %s18, 1
      %p246 = scmp.ne.s32.totalorder %s241, %s243
      %p247 = scmp.eq.s32.totalorder %s18, 0
      %p248 = por %p246, %p247
      %p249 = scmp.ne.s32.totalorder %s241, %s243
      %p250 = scmp.eq.s32.totalorder %s23, 1
      %p251 = por %p249, %p250
      %p252 = scmp.ne.s32.totalorder %s243, %s244
      %p253 = scmp.eq.s32.totalorder %s23, 0
      %p254 = por %p252, %p253
      %p255 = scmp.ne.s32.totalorder %s243, %s244
      %p256 = scmp.eq.s32.totalorder %s24, 1
      %p257 = por %p255, %p256
      %p259 = scmp.ne.s32.totalorder %s244, %s258
      %p260 = scmp.eq.s32.totalorder %s24, 0
      %p261 = por %p259, %p260
      %s262 = ssub.s32 %s18, %s25
      %p263 = scmp.eq.s32.totalorder %s262, 0
      %s265 = sadd.s32 %s264, 1
      %s266 = scalar_select %p263, %s264, %s265
      %p269 = pneg %p263
      %p270 = scmp.eq.s32.totalorder %s18, 1
      %p271 = por %p269, %p270
      %p272 = scmp.ne.s32.totalorder %s264, %s267
      %p273 = scmp.eq.s32.totalorder %s18, 0
      %p274 = por %p272, %p273
      %p275 = scmp.ne.s32.totalorder %s264, %s267
      %p276 = scmp.eq.s32.totalorder %s23, 1
      %p277 = por %p275, %p276
      %p278 = scmp.ne.s32.totalorder %s267, %s268
      %p279 = scmp.eq.s32.totalorder %s23, 0
      %p280 = por %p278, %p279
      %p281 = scmp.ne.s32.totalorder %s267, %s268
      %p282 = scmp.eq.s32.totalorder %s24, 1
      %p283 = por %p281, %p282
      %p285 = scmp.ne.s32.totalorder %s268, %s284
      %p286 = scmp.eq.s32.totalorder %s24, 0
      %p287 = por %p285, %p286
      %p288 = scmp.le.s32.totalorder 1, %s18
      %p289 = scmp.lt.s32.totalorder %s18, 3
      %p290 = pnand %p288, %p289
      %p291 = pneg %p290
      // Predicated region
      $region9: #{spectral_transform.5} parent=5 // pred_check
        _
      $region10: #{spectral_transform.5} parent=5 // pred_check_branch
        %293 = sbr.rel (%p290) target = $region12
      $region11: #{spectral_transform.5} parent=5 // pred_region
        %s294 = ssub.s32 %s18, 1
        // Predicated region
        $region13: #{spectral_transform.5} parent=11 // pred_check
          %p295 = pneg %p65
        $region14: #{spectral_transform.5} parent=11 // pred_check_branch
          %297 = sbr.rel (%p295) target = $region16
        $region15: #{spectral_transform.5} parent=11 // pred_region
          _
        $region16: #{spectral_transform.5} parent=11 // pred_fallthru
          _
        // Predicated region
        $region17: #{spectral_transform.5} parent=11 // pred_check
          %p298 = pneg %p86
        $region18: #{spectral_transform.5} parent=11 // pred_check_branch
          %300 = sbr.rel (%p298) target = $region20
        $region19: #{spectral_transform.5} parent=11 // pred_region
          %302 = vsyncadd [#allocation3], 0
          %s303 = sshll.u32 %s2, 4
          %s304 = int_to_ptr.hbm [resolvable:$true] %s303
          %s305 = sshll.u32 [#allocation2], 4
          %s306 = int_to_ptr.vmem [resolvable:$true] %s305
          %311 = dma.hbm_to_vmem [thread:$0]  %s304, 8192, %s306, [#allocation3], 256, 256, 16
        $region20: #{spectral_transform.5} parent=11 // pred_fallthru
          _
        // Predicated region
        $region21: #{spectral_transform.5} parent=11 // pred_check
          %p312 = pneg %p107
        $region22: #{spectral_transform.5} parent=11 // pred_check_branch
          %314 = sbr.rel (%p312) target = $region24
        $region23: #{spectral_transform.5} parent=11 // pred_region
          _
        $region24: #{spectral_transform.5} parent=11 // pred_fallthru
          _
        // Predicated region
        $region25: #{spectral_transform.5} parent=11 // pred_check
          %p315 = pneg %p128
        $region26: #{spectral_transform.5} parent=11 // pred_check_branch
          %317 = sbr.rel (%p315) target = $region28
        $region27: #{spectral_transform.5} parent=11 // pred_region
          _
        $region28: #{spectral_transform.5} parent=11 // pred_fallthru
          _
        // Predicated region
        $region29: #{spectral_transform.5} parent=11 // pred_check
          %p318 = pneg %p149
        $region30: #{spectral_transform.5} parent=11 // pred_check_branch
          %320 = sbr.rel (%p318) target = $region32
        $region31: #{spectral_transform.5} parent=11 // pred_region
          _
        $region32: #{spectral_transform.5} parent=11 // pred_fallthru
          _
        // Predicated region
        $region33: #{spectral_transform.5} parent=11 // pred_check
          %p321 = pneg %p170
        $region34: #{spectral_transform.5} parent=11 // pred_check_branch
          %323 = sbr.rel (%p321) target = $region36
        $region35: #{spectral_transform.5} parent=11 // pred_region
          _
        $region36: #{spectral_transform.5} parent=11 // pred_fallthru
          _
        // Predicated region
        $region37: #{spectral_transform.5} parent=11 // pred_check
          %p324 = pneg %p191
        $region38: #{spectral_transform.5} parent=11 // pred_check_branch
          %326 = sbr.rel (%p324) target = $region40
        $region39: #{spectral_transform.5} parent=11 // pred_region
          _
        $region40: #{spectral_transform.5} parent=11 // pred_fallthru
          _
        // Predicated region
        $region41: #{spectral_transform.5} parent=11 // pred_check
          %p327 = pneg %p212
        $region42: #{spectral_transform.5} parent=11 // pred_check_branch
          %329 = sbr.rel (%p327) target = $region44
        $region43: #{spectral_transform.5} parent=11 // pred_region
          _
        $region44: #{spectral_transform.5} parent=11 // pred_fallthru
          _
        // Predicated region
        $region45: #{spectral_transform.5} parent=11 // pred_check
          %p330 = pneg %p233
        $region46: #{spectral_transform.5} parent=11 // pred_check_branch
          %332 = sbr.rel (%p330) target = $region48
        $region47: #{spectral_transform.5} parent=11 // pred_region
          _
        $region48: #{spectral_transform.5} parent=11 // pred_fallthru
          _
        // Predicated region
        $region49: #{spectral_transform.5} parent=11 // pred_check
          %p333 = pneg %p254
        $region50: #{spectral_transform.5} parent=11 // pred_check_branch
          %335 = sbr.rel (%p333) target = $region52
        $region51: #{spectral_transform.5} parent=11 // pred_region
          _
        $region52: #{spectral_transform.5} parent=11 // pred_fallthru
          _
      $region12: #{spectral_transform.5} parent=5 // pred_fallthru
        _
      %p336 = scmp.lt.s32.totalorder %s18, 2
      // Predicated region
      $region53: #{spectral_transform.5} parent=5 // pred_check
        %p337 = pneg %p336
      $region54: #{spectral_transform.5} parent=5 // pred_check_branch
        %339 = sbr.rel (%p337) target = $region56
      $region55: #{spectral_transform.5} parent=5 // pred_region
        // Predicated region
        $region57: #{spectral_transform.5} parent=55 // pred_check
          %p340 = pneg %p38
        $region58: #{spectral_transform.5} parent=55 // pred_check_branch
          %342 = sbr.rel (%p340) target = $region60
        $region59: #{spectral_transform.5} parent=55 // pred_region
          %p343 = scmp.lt.s32.totalorder %s18, 1
          %s344 = scalar_select %p343, %s18, 1
          %s345 = smul.addr %s344, 2
          %s346 = smul.addr %s345, 4
          %s347 = scalar_lea.vmem %s0, %s346
        $region60: #{spectral_transform.5} parent=55 // pred_fallthru
          _
      $region56: #{spectral_transform.5} parent=5 // pred_fallthru
        _
      %p348 = scmp.le.s32.totalorder 1, %s18
      %p349 = scmp.lt.s32.totalorder %s18, 3
      %p350 = pnand %p348, %p349
      %p351 = pneg %p350
      // Predicated region
      $region61: #{spectral_transform.5} parent=5 // pred_check
        _
      $region62: #{spectral_transform.5} parent=5 // pred_check_branch
        %353 = sbr.rel (%p350) target = $region64
      $region63: #{spectral_transform.5} parent=5 // pred_region
        %s354 = ssub.s32 %s18, 1
        // Predicated region
        $region65: #{spectral_transform.5} parent=63 // pred_check
          %p355 = pneg %p86
        $region66: #{spectral_transform.5} parent=63 // pred_check_branch
          %357 = sbr.rel (%p355) target = $region68
        $region67: #{spectral_transform.5} parent=63 // pred_region
          %359 = dma.done [#allocation3], 8192
        $region68: #{spectral_transform.5} parent=63 // pred_fallthru
          _
        %p360 = scmp.lt.s32.totalorder %s23, 1
        %s361 = scalar_select %p360, %s23, 1
        %s362 = smul.addr %s361, 2
        %s363 = smul.addr %s362, 4
        %s364 = scalar_lea.vmem %s0, %s363
        %p365 = pneg %p44
        %p366 = pneg %p41
        %p367 = pneg %p65
        %p368 = pneg %p62
        %p369 = pneg %p86
        %p370 = pneg %p83
        %p371 = pneg %p107
        %p372 = pneg %p104
        %p373 = pneg %p128
        %p374 = pneg %p125
        %p375 = pneg %p149
        %p376 = pneg %p146
        %p377 = pneg %p170
        %p378 = pneg %p167
        %p379 = pneg %p191
        %p380 = pneg %p188
        %p381 = pneg %p212
        %p382 = pneg %p209
        %p383 = pneg %p233
        %p384 = pneg %p230
        %p385 = pneg %p254
        %p386 = pneg %p251
        %p387 = pneg %p280
        %p388 = pneg %p277
        %p389 = scmp.lt.s32.totalorder %s23, 1
        %s390 = scalar_select %p389, %s23, 1
        %s391 = smul.addr %s390, 2
        %s392 = smul.addr %s391, 4
        %s393 = scalar_lea.vmem %s11, %s392
        %p394 = scmp.lt.s32.totalorder %s23, 1
        %s395 = scalar_select %p394, %s23, 1
        %s396 = smul.addr %s395, 2
        %s397 = smul.addr %s396, 4
        %s398 = scalar_lea.vmem %s0, %s397
        %p399 = scmp.lt.s32.totalorder %s23, 1
        %s400 = scalar_select %p399, %s23, 1
        %s401 = smul.addr %s400, 2
        %s402 = smul.addr %s401, 4
        %s403 = scalar_lea.vmem %s11, %s402
        %v404 = vld [vmem:[%s1] sm:$0xff]
        %v405 = vld [vmem:[%s1 + $0x8] sm:$0xff]
        %v406 = vld [vmem:[%s1 + $0x10] sm:$0xff]
        %v407 = vld [vmem:[%s1 + $0x18] sm:$0xff]
        %v408 = vld [vmem:[%s1 + $0x20] sm:$0xff]
        %v409 = vld [vmem:[%s1 + $0x28] sm:$0xff]
        %v410 = vld [vmem:[%s1 + $0x30] sm:$0xff]
        %v411 = vld [vmem:[%s1 + $0x38] sm:$0xff]
        %v412 = vld [vmem:[%s1 + $0x40] sm:$0xff]
        %v413 = vld [vmem:[%s1 + $0x48] sm:$0xff]
        %v414 = vld [vmem:[%s1 + $0x50] sm:$0xff]
        %v415 = vld [vmem:[%s1 + $0x58] sm:$0xff]
        %v416 = vld [vmem:[%s1 + $0x60] sm:$0xff]
        %v417 = vld [vmem:[%s1 + $0x68] sm:$0xff]
        %v418 = vld [vmem:[%s1 + $0x70] sm:$0xff]
        %v419 = vld [vmem:[%s1 + $0x78] sm:$0xff]
        %v420 = vld [vmem:[%s1 + $0x80] sm:$0xff]
        %v421 = vld [vmem:[%s1 + $0x88] sm:$0xff]
        %v422 = vld [vmem:[%s1 + $0x90] sm:$0xff]
        %v423 = vld [vmem:[%s1 + $0x98] sm:$0xff]
        %v424 = vld [vmem:[%s1 + $0xa0] sm:$0xff]
        %v425 = vld [vmem:[%s1 + $0xa8] sm:$0xff]
        %v426 = vld [vmem:[%s1 + $0xb0] sm:$0xff]
        %v427 = vld [vmem:[%s1 + $0xb8] sm:$0xff]
        %v428 = vld [vmem:[%s1 + $0xc0] sm:$0xff]
        %v429 = vld [vmem:[%s1 + $0xc8] sm:$0xff]
        %v430 = vld [vmem:[%s1 + $0xd0] sm:$0xff]
        %v431 = vld [vmem:[%s1 + $0xd8] sm:$0xff]
        %v432 = vld [vmem:[%s1 + $0xe0] sm:$0xff]
        %v433 = vld [vmem:[%s1 + $0xe8] sm:$0xff]
        %v434 = vld [vmem:[%s1 + $0xf0] sm:$0xff]
        %v435 = vld [vmem:[%s1 + $0xf8] sm:$0xff]
        %v436 = vld [vmem:[%s1 + $0x100] sm:$0xff]
        %v437 = vld [vmem:[%s1 + $0x108] sm:$0xff]
        %v438 = vld [vmem:[%s1 + $0x110] sm:$0xff]
        %v439 = vld [vmem:[%s1 + $0x118] sm:$0xff]
        %v440 = vld [vmem:[%s1 + $0x120] sm:$0xff]
        %v441 = vld [vmem:[%s1 + $0x128] sm:$0xff]
        %v442 = vld [vmem:[%s1 + $0x130] sm:$0xff]
        %v443 = vld [vmem:[%s1 + $0x138] sm:$0xff]
        %v444 = vld [vmem:[%s1 + $0x140] sm:$0xff]
        %v445 = vld [vmem:[%s1 + $0x148] sm:$0xff]
        %v446 = vld [vmem:[%s1 + $0x150] sm:$0xff]
        %v447 = vld [vmem:[%s1 + $0x158] sm:$0xff]
        %v448 = vld [vmem:[%s1 + $0x160] sm:$0xff]
        %v449 = vld [vmem:[%s1 + $0x168] sm:$0xff]
        %v450 = vld [vmem:[%s1 + $0x170] sm:$0xff]
        %v451 = vld [vmem:[%s1 + $0x178] sm:$0xff]
        %v452 = vld [vmem:[%s1 + $0x180] sm:$0xff]
        %v453 = vld [vmem:[%s1 + $0x188] sm:$0xff]
        %v454 = vld [vmem:[%s1 + $0x190] sm:$0xff]
        %v455 = vld [vmem:[%s1 + $0x198] sm:$0xff]
        %v456 = vld [vmem:[%s1 + $0x1a0] sm:$0xff]
        %v457 = vld [vmem:[%s1 + $0x1a8] sm:$0xff]
        %v458 = vld [vmem:[%s1 + $0x1b0] sm:$0xff]
        %v459 = vld [vmem:[%s1 + $0x1b8] sm:$0xff]
        %v460 = vld [vmem:[%s1 + $0x1c0] sm:$0xff]
        %v461 = vld [vmem:[%s1 + $0x1c8] sm:$0xff]
        %v462 = vld [vmem:[%s1 + $0x1d0] sm:$0xff]
        %v463 = vld [vmem:[%s1 + $0x1d8] sm:$0xff]
        %v464 = vld [vmem:[%s1 + $0x1e0] sm:$0xff]
        %v465 = vld [vmem:[%s1 + $0x1e8] sm:$0xff]
        %v466 = vld [vmem:[%s1 + $0x1f0] sm:$0xff]
        %v467 = vld [vmem:[%s1 + $0x1f8] sm:$0xff]
        %v468 = vld [vmem:[#allocation2] sm:$0xff]
        %v469 = vld [vmem:[#allocation2 + $0x8] sm:$0xff]
        %v470 = vld [vmem:[#allocation2 + $0x10] sm:$0xff]
        %v471 = vld [vmem:[#allocation2 + $0x18] sm:$0xff]
        %v472 = vld [vmem:[#allocation2 + $0x20] sm:$0xff]
        %v473 = vld [vmem:[#allocation2 + $0x28] sm:$0xff]
        %v474 = vld [vmem:[#allocation2 + $0x30] sm:$0xff]
        %v475 = vld [vmem:[#allocation2 + $0x38] sm:$0xff]
        %v476 = vld [vmem:[#allocation2 + $0x40] sm:$0xff]
        %v477 = vld [vmem:[#allocation2 + $0x48] sm:$0xff]
        %v478 = vld [vmem:[#allocation2 + $0x50] sm:$0xff]
        %v479 = vld [vmem:[#allocation2 + $0x58] sm:$0xff]
        %v480 = vld [vmem:[#allocation2 + $0x60] sm:$0xff]
        %v481 = vld [vmem:[#allocation2 + $0x68] sm:$0xff]
        %v482 = vld [vmem:[#allocation2 + $0x70] sm:$0xff]
        %v483 = vld [vmem:[#allocation2 + $0x78] sm:$0xff]
        %v484 = vld [vmem:[#allocation2 + $0x80] sm:$0xff]
        %v485 = vld [vmem:[#allocation2 + $0x88] sm:$0xff]
        %v486 = vld [vmem:[#allocation2 + $0x90] sm:$0xff]
        %v487 = vld [vmem:[#allocation2 + $0x98] sm:$0xff]
        %v488 = vld [vmem:[#allocation2 + $0xa0] sm:$0xff]
        %v489 = vld [vmem:[#allocation2 + $0xa8] sm:$0xff]
        %v490 = vld [vmem:[#allocation2 + $0xb0] sm:$0xff]
        %v491 = vld [vmem:[#allocation2 + $0xb8] sm:$0xff]
        %v492 = vld [vmem:[#allocation2 + $0xc0] sm:$0xff]
        %v493 = vld [vmem:[#allocation2 + $0xc8] sm:$0xff]
        %v494 = vld [vmem:[#allocation2 + $0xd0] sm:$0xff]
        %v495 = vld [vmem:[#allocation2 + $0xd8] sm:$0xff]
        %v496 = vld [vmem:[#allocation2 + $0xe0] sm:$0xff]
        %v497 = vld [vmem:[#allocation2 + $0xe8] sm:$0xff]
        %v498 = vld [vmem:[#allocation2 + $0xf0] sm:$0xff]
        %v499 = vld [vmem:[#allocation2 + $0xf8] sm:$0xff]
        %v500 = vld [vmem:[#allocation2 + $0x100] sm:$0xff]
        %v501 = vld [vmem:[#allocation2 + $0x108] sm:$0xff]
        %v502 = vld [vmem:[#allocation2 + $0x110] sm:$0xff]
        %v503 = vld [vmem:[#allocation2 + $0x118] sm:$0xff]
        %v504 = vld [vmem:[#allocation2 + $0x120] sm:$0xff]
        %v505 = vld [vmem:[#allocation2 + $0x128] sm:$0xff]
        %v506 = vld [vmem:[#allocation2 + $0x130] sm:$0xff]
        %v507 = vld [vmem:[#allocation2 + $0x138] sm:$0xff]
        %v508 = vld [vmem:[#allocation2 + $0x140] sm:$0xff]
        %v509 = vld [vmem:[#allocation2 + $0x148] sm:$0xff]
        %v510 = vld [vmem:[#allocation2 + $0x150] sm:$0xff]
        %v511 = vld [vmem:[#allocation2 + $0x158] sm:$0xff]
        %v512 = vld [vmem:[#allocation2 + $0x160] sm:$0xff]
        %v513 = vld [vmem:[#allocation2 + $0x168] sm:$0xff]
        %v514 = vld [vmem:[#allocation2 + $0x170] sm:$0xff]
        %v515 = vld [vmem:[#allocation2 + $0x178] sm:$0xff]
        %v516 = vld [vmem:[#allocation2 + $0x180] sm:$0xff]
        %v517 = vld [vmem:[#allocation2 + $0x188] sm:$0xff]
        %v518 = vld [vmem:[#allocation2 + $0x190] sm:$0xff]
        %v519 = vld [vmem:[#allocation2 + $0x198] sm:$0xff]
        %v520 = vld [vmem:[#allocation2 + $0x1a0] sm:$0xff]
        %v521 = vld [vmem:[#allocation2 + $0x1a8] sm:$0xff]
        %v522 = vld [vmem:[#allocation2 + $0x1b0] sm:$0xff]
        %v523 = vld [vmem:[#allocation2 + $0x1b8] sm:$0xff]
        %v524 = vld [vmem:[#allocation2 + $0x1c0] sm:$0xff]
        %v525 = vld [vmem:[#allocation2 + $0x1c8] sm:$0xff]
        %v526 = vld [vmem:[#allocation2 + $0x1d0] sm:$0xff]
        %v527 = vld [vmem:[#allocation2 + $0x1d8] sm:$0xff]
        %v528 = vld [vmem:[#allocation2 + $0x1e0] sm:$0xff]
        %v529 = vld [vmem:[#allocation2 + $0x1e8] sm:$0xff]
        %v530 = vld [vmem:[#allocation2 + $0x1f0] sm:$0xff]
        %v531 = vld [vmem:[#allocation2 + $0x1f8] sm:$0xff]
        %v532 = vld [vmem:[%s398] sm:$0xff]
        %534 = vst [vmem:[#allocation1] ss:$2 sm:$0xff] %v532
        %v535 = vld.sshfl [vmem:[#allocation1] sm:$0xff pattern:$0x75316420]
        %v536 = vld.sshfl [vmem:[#allocation1 + $0x8] sm:$0xff pattern:$0x75316420]
        %539 = vmatpush.msra.mxu0 %v434
        %540 = vmatpush.msra.mxu0 %v432
        %541 = vmatpush.msra.mxu0 %v430
        %542 = vmatpush.msra.mxu0 %v428
        %543 = vmatpush.msra.mxu0 %v426
        %544 = vmatpush.msra.mxu0 %v424
        %545 = vmatpush.msra.mxu0 %v422
        %546 = vmatpush.msra.mxu0 %v420
        %547 = vmatpush.msra.mxu0 %v418
        %548 = vmatpush.msra.mxu0 %v416
        %549 = vmatpush.msra.mxu0 %v414
        %550 = vmatpush.msra.mxu0 %v412
        %551 = vmatpush.msra.mxu0 %v410
        %552 = vmatpush.msra.mxu0 %v408
        %553 = vmatpush.msra.mxu0 %v406
        %554 = vmatpush.msra.mxu0 %v404
        %555 = vmatmul.f32.gmra.mxu0 %v535
        %v556 = vpop.f32.mrf.mxu0
        %v557 = vadd.f32 0.0, %v556
        %558 = vdwg.mxu0
        %559 = vmatpush.msra.mxu0 %v466
        %560 = vmatpush.msra.mxu0 %v464
        %561 = vmatpush.msra.mxu0 %v462
        %562 = vmatpush.msra.mxu0 %v460
        %563 = vmatpush.msra.mxu0 %v458
        %564 = vmatpush.msra.mxu0 %v456
        %565 = vmatpush.msra.mxu0 %v454
        %566 = vmatpush.msra.mxu0 %v452
        %567 = vmatpush.msra.mxu0 %v450
        %568 = vmatpush.msra.mxu0 %v448
        %569 = vmatpush.msra.mxu0 %v446
        %570 = vmatpush.msra.mxu0 %v444
        %571 = vmatpush.msra.mxu0 %v442
        %572 = vmatpush.msra.mxu0 %v440
        %573 = vmatpush.msra.mxu0 %v438
        %574 = vmatpush.msra.mxu0 %v436
        %575 = vmatmul.f32.gmra.mxu0 %v536
        %v576 = vpop.f32.mrf.mxu0
        %v577 = vadd.f32 %v557, %v576
        %578 = vdwg.mxu0
        %579 = vmatpush.msra.mxu0 %v435
        %580 = vmatpush.msra.mxu0 %v433
        %581 = vmatpush.msra.mxu0 %v431
        %582 = vmatpush.msra.mxu0 %v429
        %583 = vmatpush.msra.mxu0 %v427
        %584 = vmatpush.msra.mxu0 %v425
        %585 = vmatpush.msra.mxu0 %v423
        %586 = vmatpush.msra.mxu0 %v421
        %587 = vmatpush.msra.mxu0 %v419
        %588 = vmatpush.msra.mxu0 %v417
        %589 = vmatpush.msra.mxu0 %v415
        %590 = vmatpush.msra.mxu0 %v413
        %591 = vmatpush.msra.mxu0 %v411
        %592 = vmatpush.msra.mxu0 %v409
        %593 = vmatpush.msra.mxu0 %v407
        %594 = vmatpush.msra.mxu0 %v405
        %595 = vmatmul.f32.gmra.mxu0 %v535
        %v596 = vpop.f32.mrf.mxu0
        %v597 = vadd.f32 0.0, %v596
        %598 = vdwg.mxu0
        %599 = vmatpush.msra.mxu0 %v467
        %600 = vmatpush.msra.mxu0 %v465
        %601 = vmatpush.msra.mxu0 %v463
        %602 = vmatpush.msra.mxu0 %v461
        %603 = vmatpush.msra.mxu0 %v459
        %604 = vmatpush.msra.mxu0 %v457
        %605 = vmatpush.msra.mxu0 %v455
        %606 = vmatpush.msra.mxu0 %v453
        %607 = vmatpush.msra.mxu0 %v451
        %608 = vmatpush.msra.mxu0 %v449
        %609 = vmatpush.msra.mxu0 %v447
        %610 = vmatpush.msra.mxu0 %v445
        %611 = vmatpush.msra.mxu0 %v443
        %612 = vmatpush.msra.mxu0 %v441
        %613 = vmatpush.msra.mxu0 %v439
        %614 = vmatpush.msra.mxu0 %v437
        %615 = vmatmul.f32.gmra.mxu0 %v536
        %v616 = vpop.f32.mrf.mxu0
        %v617 = vadd.f32 %v597, %v616
        %618 = vdwg.mxu0
        %619 = vst [vmem:[#allocation1] ss:$2 sm:$0xff] %v532
        %v620 = vld.sshfl [vmem:[#allocation1] sm:$0xff pattern:$0x75316420]
        %v621 = vld.sshfl [vmem:[#allocation1 + $0x8] sm:$0xff pattern:$0x75316420]
        %624 = vmatpush.msra.mxu0 %v498
        %625 = vmatpush.msra.mxu0 %v496
        %626 = vmatpush.msra.mxu0 %v494
        %627 = vmatpush.msra.mxu0 %v492
        %628 = vmatpush.msra.mxu0 %v490
        %629 = vmatpush.msra.mxu0 %v488
        %630 = vmatpush.msra.mxu0 %v486
        %631 = vmatpush.msra.mxu0 %v484
        %632 = vmatpush.msra.mxu0 %v482
        %633 = vmatpush.msra.mxu0 %v480
        %634 = vmatpush.msra.mxu0 %v478
        %635 = vmatpush.msra.mxu0 %v476
        %636 = vmatpush.msra.mxu0 %v474
        %637 = vmatpush.msra.mxu0 %v472
        %638 = vmatpush.msra.mxu0 %v470
        %639 = vmatpush.msra.mxu0 %v468
        %640 = vmatmul.f32.gmra.mxu0 %v620
        %v641 = vpop.f32.mrf.mxu0
        %v642 = vadd.f32 0.0, %v641
        %643 = vdwg.mxu0
        %644 = vmatpush.msra.mxu0 %v530
        %645 = vmatpush.msra.mxu0 %v528
        %646 = vmatpush.msra.mxu0 %v526
        %647 = vmatpush.msra.mxu0 %v524
        %648 = vmatpush.msra.mxu0 %v522
        %649 = vmatpush.msra.mxu0 %v520
        %650 = vmatpush.msra.mxu0 %v518
        %651 = vmatpush.msra.mxu0 %v516
        %652 = vmatpush.msra.mxu0 %v514
        %653 = vmatpush.msra.mxu0 %v512
        %654 = vmatpush.msra.mxu0 %v510
        %655 = vmatpush.msra.mxu0 %v508
        %656 = vmatpush.msra.mxu0 %v506
        %657 = vmatpush.msra.mxu0 %v504
        %658 = vmatpush.msra.mxu0 %v502
        %659 = vmatpush.msra.mxu0 %v500
        %660 = vmatmul.f32.gmra.mxu0 %v621
        %v661 = vpop.f32.mrf.mxu0
        %v662 = vadd.f32 %v642, %v661
        %663 = vdwg.mxu0
        %664 = vmatpush.msra.mxu0 %v499
        %665 = vmatpush.msra.mxu0 %v497
        %666 = vmatpush.msra.mxu0 %v495
        %667 = vmatpush.msra.mxu0 %v493
        %668 = vmatpush.msra.mxu0 %v491
        %669 = vmatpush.msra.mxu0 %v489
        %670 = vmatpush.msra.mxu0 %v487
        %671 = vmatpush.msra.mxu0 %v485
        %672 = vmatpush.msra.mxu0 %v483
        %673 = vmatpush.msra.mxu0 %v481
        %674 = vmatpush.msra.mxu0 %v479
        %675 = vmatpush.msra.mxu0 %v477
        %676 = vmatpush.msra.mxu0 %v475
        %677 = vmatpush.msra.mxu0 %v473
        %678 = vmatpush.msra.mxu0 %v471
        %679 = vmatpush.msra.mxu0 %v469
        %680 = vmatmul.f32.gmra.mxu0 %v620
        %v681 = vpop.f32.mrf.mxu0
        %v682 = vadd.f32 0.0, %v681
        %683 = vdwg.mxu0
        %684 = vmatpush.msra.mxu0 %v531
        %685 = vmatpush.msra.mxu0 %v529
        %686 = vmatpush.msra.mxu0 %v527
        %687 = vmatpush.msra.mxu0 %v525
        %688 = vmatpush.msra.mxu0 %v523
        %689 = vmatpush.msra.mxu0 %v521
        %690 = vmatpush.msra.mxu0 %v519
        %691 = vmatpush.msra.mxu0 %v517
        %692 = vmatpush.msra.mxu0 %v515
        %693 = vmatpush.msra.mxu0 %v513
        %694 = vmatpush.msra.mxu0 %v511
        %695 = vmatpush.msra.mxu0 %v509
        %696 = vmatpush.msra.mxu0 %v507
        %697 = vmatpush.msra.mxu0 %v505
        %698 = vmatpush.msra.mxu0 %v503
        %699 = vmatpush.msra.mxu0 %v501
        %700 = vmatmul.f32.gmra.mxu0 %v621
        %v701 = vpop.f32.mrf.mxu0
        %v702 = vadd.f32 %v682, %v701
        %703 = vdwg.mxu0
        %v704 = vld [vmem:[%s3] sm:$0xf]
        %v705 = vld [vmem:[%s4] sm:$0xf]
        %vm706 = vcmask 31744
        %v708 = vsel %vm706, %v705, 0
        %vm710 = vcmask 1043456
        %v712 = vsel %vm710, %v662, 0
        %v715 = vsel %vm710, %v702, 0
        %717 = vmatpush.msra.mxu0 0.0
        %718 = vmatpush.msra.mxu0 0.0
        %719 = vmatpush.msra.mxu0 0.0
        %720 = vmatpush.msra.mxu0 0.0
        %721 = vmatpush.msra.mxu0 0.0
        %722 = vmatpush.msra.mxu0 0.0
        %723 = vmatpush.msra.mxu0 0.0
        %724 = vmatpush.msra.mxu0 0.0
        %725 = vmatpush.msra.mxu0 0.0
        %726 = vmatpush.msra.mxu0 0.0
        %727 = vmatpush.msra.mxu0 0.0
        %728 = vmatpush.msra.mxu0 0.0
        %729 = vmatpush.msra.mxu0 0.0
        %730 = vmatpush.msra.mxu0 0.0
        %731 = vmatpush.msra.mxu0 0.0
        %732 = vmatpush.msra.mxu0 %v712
        %733 = vmatmul.f32.gmra.mxu0 %v708
        %v734 = vpop.f32.mrf.mxu0
        %v735 = vadd.f32 0.0, %v734
        %736 = vdwg.mxu0
        %737 = vmatpush.msra.mxu0 0.0
        %738 = vmatpush.msra.mxu0 0.0
        %739 = vmatpush.msra.mxu0 0.0
        %740 = vmatpush.msra.mxu0 0.0
        %741 = vmatpush.msra.mxu0 0.0
        %742 = vmatpush.msra.mxu0 0.0
        %743 = vmatpush.msra.mxu0 0.0
        %744 = vmatpush.msra.mxu0 0.0
        %745 = vmatpush.msra.mxu0 0.0
        %746 = vmatpush.msra.mxu0 0.0
        %747 = vmatpush.msra.mxu0 0.0
        %748 = vmatpush.msra.mxu0 0.0
        %749 = vmatpush.msra.mxu0 0.0
        %750 = vmatpush.msra.mxu0 0.0
        %751 = vmatpush.msra.mxu0 0.0
        %752 = vmatpush.msra.mxu0 %v715
        %753 = vmatmul.f32.gmra.mxu0 %v708
        %v754 = vpop.f32.mrf.mxu0
        %v755 = vadd.f32 0.0, %v754
        %756 = vdwg.mxu0
        %v758 = vsel %vm706, %v704, 0
        %v761 = vsel %vm710, %v577, 0
        %v764 = vsel %vm710, %v617, 0
        %766 = vmatpush.msra.mxu0 0.0
        %767 = vmatpush.msra.mxu0 0.0
        %768 = vmatpush.msra.mxu0 0.0
        %769 = vmatpush.msra.mxu0 0.0
        %770 = vmatpush.msra.mxu0 0.0
        %771 = vmatpush.msra.mxu0 0.0
        %772 = vmatpush.msra.mxu0 0.0
        %773 = vmatpush.msra.mxu0 0.0
        %774 = vmatpush.msra.mxu0 0.0
        %775 = vmatpush.msra.mxu0 0.0
        %776 = vmatpush.msra.mxu0 0.0
        %777 = vmatpush.msra.mxu0 0.0
        %778 = vmatpush.msra.mxu0 0.0
        %779 = vmatpush.msra.mxu0 0.0
        %780 = vmatpush.msra.mxu0 0.0
        %781 = vmatpush.msra.mxu0 %v761
        %782 = vmatmul.f32.gmra.mxu0 %v758
        %v783 = vpop.f32.mrf.mxu0
        %v784 = vadd.f32 %v735, %v783
        %785 = vdwg.mxu0
        %786 = vmatpush.msra.mxu0 0.0
        %787 = vmatpush.msra.mxu0 0.0
        %788 = vmatpush.msra.mxu0 0.0
        %789 = vmatpush.msra.mxu0 0.0
        %790 = vmatpush.msra.mxu0 0.0
        %791 = vmatpush.msra.mxu0 0.0
        %792 = vmatpush.msra.mxu0 0.0
        %793 = vmatpush.msra.mxu0 0.0
        %794 = vmatpush.msra.mxu0 0.0
        %795 = vmatpush.msra.mxu0 0.0
        %796 = vmatpush.msra.mxu0 0.0
        %797 = vmatpush.msra.mxu0 0.0
        %798 = vmatpush.msra.mxu0 0.0
        %799 = vmatpush.msra.mxu0 0.0
        %800 = vmatpush.msra.mxu0 0.0
        %801 = vmatpush.msra.mxu0 %v764
        %802 = vmatmul.f32.gmra.mxu0 %v758
        %v803 = vpop.f32.mrf.mxu0
        %v804 = vadd.f32 %v755, %v803
        %805 = vdwg.mxu0
        %v806 = vld [vmem:[%s5] sm:$0xf]
        %v807 = vld [vmem:[%s6] sm:$0xf]
        %v809 = vsel %vm706, %v807, 0
        %811 = vmatpush.msra.mxu0 0.0
        %812 = vmatpush.msra.mxu0 0.0
        %813 = vmatpush.msra.mxu0 0.0
        %814 = vmatpush.msra.mxu0 0.0
        %815 = vmatpush.msra.mxu0 0.0
        %816 = vmatpush.msra.mxu0 0.0
        %817 = vmatpush.msra.mxu0 0.0
        %818 = vmatpush.msra.mxu0 0.0
        %819 = vmatpush.msra.mxu0 0.0
        %820 = vmatpush.msra.mxu0 0.0
        %821 = vmatpush.msra.mxu0 0.0
        %822 = vmatpush.msra.mxu0 0.0
        %823 = vmatpush.msra.mxu0 0.0
        %824 = vmatpush.msra.mxu0 0.0
        %825 = vmatpush.msra.mxu0 0.0
        %826 = vmatpush.msra.mxu0 %v712
        %827 = vmatmul.f32.gmra.mxu0 %v809
        %v828 = vpop.f32.mrf.mxu0
        %v829 = vadd.f32 0.0, %v828
        %830 = vdwg.mxu0
        %831 = vmatpush.msra.mxu0 0.0
        %832 = vmatpush.msra.mxu0 0.0
        %833 = vmatpush.msra.mxu0 0.0
        %834 = vmatpush.msra.mxu0 0.0
        %835 = vmatpush.msra.mxu0 0.0
        %836 = vmatpush.msra.mxu0 0.0
        %837 = vmatpush.msra.mxu0 0.0
        %838 = vmatpush.msra.mxu0 0.0
        %839 = vmatpush.msra.mxu0 0.0
        %840 = vmatpush.msra.mxu0 0.0
        %841 = vmatpush.msra.mxu0 0.0
        %842 = vmatpush.msra.mxu0 0.0
        %843 = vmatpush.msra.mxu0 0.0
        %844 = vmatpush.msra.mxu0 0.0
        %845 = vmatpush.msra.mxu0 0.0
        %846 = vmatpush.msra.mxu0 %v715
        %847 = vmatmul.f32.gmra.mxu0 %v809
        %v848 = vpop.f32.mrf.mxu0
        %v849 = vadd.f32 0.0, %v848
        %850 = vdwg.mxu0
        %v852 = vsel %vm706, %v806, 0
        %854 = vmatpush.msra.mxu0 0.0
        %855 = vmatpush.msra.mxu0 0.0
        %856 = vmatpush.msra.mxu0 0.0
        %857 = vmatpush.msra.mxu0 0.0
        %858 = vmatpush.msra.mxu0 0.0
        %859 = vmatpush.msra.mxu0 0.0
        %860 = vmatpush.msra.mxu0 0.0
        %861 = vmatpush.msra.mxu0 0.0
        %862 = vmatpush.msra.mxu0 0.0
        %863 = vmatpush.msra.mxu0 0.0
        %864 = vmatpush.msra.mxu0 0.0
        %865 = vmatpush.msra.mxu0 0.0
        %866 = vmatpush.msra.mxu0 0.0
        %867 = vmatpush.msra.mxu0 0.0
        %868 = vmatpush.msra.mxu0 0.0
        %869 = vmatpush.msra.mxu0 %v761
        %870 = vmatmul.f32.gmra.mxu0 %v852
        %v871 = vpop.f32.mrf.mxu0
        %v872 = vadd.f32 %v829, %v871
        %873 = vdwg.mxu0
        %874 = vmatpush.msra.mxu0 0.0
        %875 = vmatpush.msra.mxu0 0.0
        %876 = vmatpush.msra.mxu0 0.0
        %877 = vmatpush.msra.mxu0 0.0
        %878 = vmatpush.msra.mxu0 0.0
        %879 = vmatpush.msra.mxu0 0.0
        %880 = vmatpush.msra.mxu0 0.0
        %881 = vmatpush.msra.mxu0 0.0
        %882 = vmatpush.msra.mxu0 0.0
        %883 = vmatpush.msra.mxu0 0.0
        %884 = vmatpush.msra.mxu0 0.0
        %885 = vmatpush.msra.mxu0 0.0
        %886 = vmatpush.msra.mxu0 0.0
        %887 = vmatpush.msra.mxu0 0.0
        %888 = vmatpush.msra.mxu0 0.0
        %889 = vmatpush.msra.mxu0 %v764
        %890 = vmatmul.f32.gmra.mxu0 %v852
        %v891 = vpop.f32.mrf.mxu0
        %v892 = vadd.f32 %v849, %v891
        %893 = vdwg.mxu0
        %v894 = vld [vmem:[%s7] sm:$0xf]
        %896 = vset.pattern.permute.xlu0 0
        %897 = vperm.xlu0 %896, %v894
        %v898 = vpop.permute.xlu0 %897
        %v900 = vmul.f32 %v784, %v898
        %v901 = vmul.f32 %v804, %v898
        %v902 = vld [vmem:[%s8] sm:$0xf]
        %904 = vset.pattern.permute.xlu0 0
        %905 = vperm.xlu0 %904, %v902
        %v906 = vpop.permute.xlu0 %905
        %v908 = vadd.f32 %v900, %v906
        %v909 = vadd.f32 %v901, %v906
        %v910 = vmax.f32 %v908, 0.0
        %v911 = vmax.f32 %v909, 0.0
        %v912 = vld [vmem:[%s9] sm:$0xf]
        %914 = vset.pattern.permute.xlu0 0
        %915 = vperm.xlu0 %914, %v912
        %v916 = vpop.permute.xlu0 %915
        %v918 = vmul.f32 %v872, %v916
        %v919 = vmul.f32 %v892, %v916
        %v920 = vld [vmem:[%s10] sm:$0xf]
        %922 = vset.pattern.permute.xlu0 0
        %923 = vperm.xlu0 %922, %v920
        %v924 = vpop.permute.xlu0 %923
        %v926 = vadd.f32 %v918, %v924
        %v927 = vadd.f32 %v919, %v924
        %v928 = vmax.f32 %v926, 0.0
        %v929 = vmax.f32 %v927, 0.0
        %930 = vmatpush.msra.mxu0 %v498
        %931 = vmatpush.msra.mxu0 %v496
        %932 = vmatpush.msra.mxu0 %v494
        %933 = vmatpush.msra.mxu0 %v492
        %934 = vmatpush.msra.mxu0 %v490
        %935 = vmatpush.msra.mxu0 %v488
        %936 = vmatpush.msra.mxu0 %v486
        %937 = vmatpush.msra.mxu0 %v484
        %938 = vmatpush.msra.mxu0 %v482
        %939 = vmatpush.msra.mxu0 %v480
        %940 = vmatpush.msra.mxu0 %v478
        %941 = vmatpush.msra.mxu0 %v476
        %942 = vmatpush.msra.mxu0 %v474
        %943 = vmatpush.msra.mxu0 %v472
        %944 = vmatpush.msra.mxu0 %v470
        %945 = vmatpush.msra.mxu0 %v468
        %946 = vmatmul.f32.gmra.mxu0 %v928
        %v947 = vpop.f32.mrf.mxu0
        %v948 = vadd.f32 0.0, %v947
        %949 = vdwg.mxu0
        %950 = vmatpush.msra.mxu0 %v530
        %951 = vmatpush.msra.mxu0 %v528
        %952 = vmatpush.msra.mxu0 %v526
        %953 = vmatpush.msra.mxu0 %v524
        %954 = vmatpush.msra.mxu0 %v522
        %955 = vmatpush.msra.mxu0 %v520
        %956 = vmatpush.msra.mxu0 %v518
        %957 = vmatpush.msra.mxu0 %v516
        %958 = vmatpush.msra.mxu0 %v514
        %959 = vmatpush.msra.mxu0 %v512
        %960 = vmatpush.msra.mxu0 %v510
        %961 = vmatpush.msra.mxu0 %v508
        %962 = vmatpush.msra.mxu0 %v506
        %963 = vmatpush.msra.mxu0 %v504
        %964 = vmatpush.msra.mxu0 %v502
        %965 = vmatpush.msra.mxu0 %v500
        %966 = vmatmul.f32.gmra.mxu0 %v929
        %v967 = vpop.f32.mrf.mxu0
        %v968 = vadd.f32 %v948, %v967
        %969 = vdwg.mxu0
        %970 = vmatpush.msra.mxu0 %v499
        %971 = vmatpush.msra.mxu0 %v497
        %972 = vmatpush.msra.mxu0 %v495
        %973 = vmatpush.msra.mxu0 %v493
        %974 = vmatpush.msra.mxu0 %v491
        %975 = vmatpush.msra.mxu0 %v489
        %976 = vmatpush.msra.mxu0 %v487
        %977 = vmatpush.msra.mxu0 %v485
        %978 = vmatpush.msra.mxu0 %v483
        %979 = vmatpush.msra.mxu0 %v481
        %980 = vmatpush.msra.mxu0 %v479
        %981 = vmatpush.msra.mxu0 %v477
        %982 = vmatpush.msra.mxu0 %v475
        %983 = vmatpush.msra.mxu0 %v473
        %984 = vmatpush.msra.mxu0 %v471
        %985 = vmatpush.msra.mxu0 %v469
        %986 = vmatmul.f32.gmra.mxu0 %v928
        %v987 = vpop.f32.mrf.mxu0
        %v988 = vadd.f32 0.0, %v987
        %989 = vdwg.mxu0
        %990 = vmatpush.msra.mxu0 %v531
        %991 = vmatpush.msra.mxu0 %v529
        %992 = vmatpush.msra.mxu0 %v527
        %993 = vmatpush.msra.mxu0 %v525
        %994 = vmatpush.msra.mxu0 %v523
        %995 = vmatpush.msra.mxu0 %v521
        %996 = vmatpush.msra.mxu0 %v519
        %997 = vmatpush.msra.mxu0 %v517
        %998 = vmatpush.msra.mxu0 %v515
        %999 = vmatpush.msra.mxu0 %v513
        %1000 = vmatpush.msra.mxu0 %v511
        %1001 = vmatpush.msra.mxu0 %v509
        %1002 = vmatpush.msra.mxu0 %v507
        %1003 = vmatpush.msra.mxu0 %v505
        %1004 = vmatpush.msra.mxu0 %v503
        %1005 = vmatpush.msra.mxu0 %v501
        %1006 = vmatmul.f32.gmra.mxu0 %v929
        %v1007 = vpop.f32.mrf.mxu0
        %v1008 = vadd.f32 %v988, %v1007
        %1009 = vdwg.mxu0
        %1010 = vmatpush.msra.mxu0 %v434
        %1011 = vmatpush.msra.mxu0 %v432
        %1012 = vmatpush.msra.mxu0 %v430
        %1013 = vmatpush.msra.mxu0 %v428
        %1014 = vmatpush.msra.mxu0 %v426
        %1015 = vmatpush.msra.mxu0 %v424
        %1016 = vmatpush.msra.mxu0 %v422
        %1017 = vmatpush.msra.mxu0 %v420
        %1018 = vmatpush.msra.mxu0 %v418
        %1019 = vmatpush.msra.mxu0 %v416
        %1020 = vmatpush.msra.mxu0 %v414
        %1021 = vmatpush.msra.mxu0 %v412
        %1022 = vmatpush.msra.mxu0 %v410
        %1023 = vmatpush.msra.mxu0 %v408
        %1024 = vmatpush.msra.mxu0 %v406
        %1025 = vmatpush.msra.mxu0 %v404
        %1026 = vmatmul.f32.gmra.mxu0 %v910
        %v1027 = vpop.f32.mrf.mxu0
        %v1028 = vadd.f32 %v968, %v1027
        %1029 = vdwg.mxu0
        %1030 = vmatpush.msra.mxu0 %v466
        %1031 = vmatpush.msra.mxu0 %v464
        %1032 = vmatpush.msra.mxu0 %v462
        %1033 = vmatpush.msra.mxu0 %v460
        %1034 = vmatpush.msra.mxu0 %v458
        %1035 = vmatpush.msra.mxu0 %v456
        %1036 = vmatpush.msra.mxu0 %v454
        %1037 = vmatpush.msra.mxu0 %v452
        %1038 = vmatpush.msra.mxu0 %v450
        %1039 = vmatpush.msra.mxu0 %v448
        %1040 = vmatpush.msra.mxu0 %v446
        %1041 = vmatpush.msra.mxu0 %v444
        %1042 = vmatpush.msra.mxu0 %v442
        %1043 = vmatpush.msra.mxu0 %v440
        %1044 = vmatpush.msra.mxu0 %v438
        %1045 = vmatpush.msra.mxu0 %v436
        %1046 = vmatmul.f32.gmra.mxu0 %v911
        %v1047 = vpop.f32.mrf.mxu0
        %v1048 = vadd.f32 %v1028, %v1047
        %1049 = vdwg.mxu0
        %1050 = vmatpush.msra.mxu0 %v435
        %1051 = vmatpush.msra.mxu0 %v433
        %1052 = vmatpush.msra.mxu0 %v431
        %1053 = vmatpush.msra.mxu0 %v429
        %1054 = vmatpush.msra.mxu0 %v427
        %1055 = vmatpush.msra.mxu0 %v425
        %1056 = vmatpush.msra.mxu0 %v423
        %1057 = vmatpush.msra.mxu0 %v421
        %1058 = vmatpush.msra.mxu0 %v419
        %1059 = vmatpush.msra.mxu0 %v417
        %1060 = vmatpush.msra.mxu0 %v415
        %1061 = vmatpush.msra.mxu0 %v413
        %1062 = vmatpush.msra.mxu0 %v411
        %1063 = vmatpush.msra.mxu0 %v409
        %1064 = vmatpush.msra.mxu0 %v407
        %1065 = vmatpush.msra.mxu0 %v405
        %1066 = vmatmul.f32.gmra.mxu0 %v910
        %v1067 = vpop.f32.mrf.mxu0
        %v1068 = vadd.f32 %v1008, %v1067
        %1069 = vdwg.mxu0
        %1070 = vmatpush.msra.mxu0 %v467
        %1071 = vmatpush.msra.mxu0 %v465
        %1072 = vmatpush.msra.mxu0 %v463
        %1073 = vmatpush.msra.mxu0 %v461
        %1074 = vmatpush.msra.mxu0 %v459
        %1075 = vmatpush.msra.mxu0 %v457
        %1076 = vmatpush.msra.mxu0 %v455
        %1077 = vmatpush.msra.mxu0 %v453
        %1078 = vmatpush.msra.mxu0 %v451
        %1079 = vmatpush.msra.mxu0 %v449
        %1080 = vmatpush.msra.mxu0 %v447
        %1081 = vmatpush.msra.mxu0 %v445
        %1082 = vmatpush.msra.mxu0 %v443
        %1083 = vmatpush.msra.mxu0 %v441
        %1084 = vmatpush.msra.mxu0 %v439
        %1085 = vmatpush.msra.mxu0 %v437
        %1086 = vmatmul.f32.gmra.mxu0 %v911
        %v1087 = vpop.f32.mrf.mxu0
        %v1088 = vadd.f32 %v1068, %v1087
        %1089 = vdwg.mxu0
        %v1092 = vrot.slane %v1088, 4
        %v1093 = vsel %vm710, %v1048, %v1092
        %1095 = vst [vmem:[%s403] sm:$0xff] %v1093
        %p1096 = scmp.lt.s32.totalorder %s23, 1
        %s1097 = scalar_select %p1096, %s23, 1
        %s1098 = smul.addr %s1097, 2
        %s1099 = smul.addr %s1098, 4
        %s1100 = scalar_lea.vmem %s11, %s1099
        // Predicated region
        $region69: #{spectral_transform.5} parent=63 // pred_check
          %p1101 = pneg %p277
        $region70: #{spectral_transform.5} parent=63 // pred_check_branch
          %1103 = sbr.rel (%p1101) target = $region72
        $region71: #{spectral_transform.5} parent=63 // pred_region
          _
        $region72: #{spectral_transform.5} parent=63 // pred_fallthru
          _
      $region64: #{spectral_transform.5} parent=5 // pred_fallthru
        _
      %p1104 = scmp.le.s32.totalorder 2, %s18
      // Predicated region
      $region73: #{spectral_transform.5} parent=5 // pred_check
        %p1105 = pneg %p1104
      $region74: #{spectral_transform.5} parent=5 // pred_check_branch
        %1107 = sbr.rel (%p1105) target = $region76
      $region75: #{spectral_transform.5} parent=5 // pred_region
        %s1108 = ssub.s32 %s18, 2
        // Predicated region
        $region77: #{spectral_transform.5} parent=75 // pred_check
          %p1109 = pneg %p283
        $region78: #{spectral_transform.5} parent=75 // pred_check_branch
          %1111 = sbr.rel (%p1109) target = $region80
        $region79: #{spectral_transform.5} parent=75 // pred_region
          %p1112 = scmp.lt.s32.totalorder %s24, 1
          %s1113 = scalar_select %p1112, %s24, 1
          %s1114 = smul.addr %s1113, 2
          %s1115 = smul.addr %s1114, 4
          %s1116 = scalar_lea.vmem %s11, %s1115
        $region80: #{spectral_transform.5} parent=75 // pred_fallthru
          _
      $region76: #{spectral_transform.5} parent=5 // pred_fallthru
        _
    $region6: #{spectral_transform.5} parent=1 // loop_footer
      %s22 = sadd.s32 1, %s18
    $region7: #{spectral_transform.5} parent=1 // loop_footer_branch
      %17 = sbr.rel target = $region3
    $region8: #{spectral_transform.5} parent=1 // loop_exit
      _
    %1117 = vsyncpa [#allocation3], 1
    %s1118 = scalar_lea.sflag [#allocation3], 1
    %1119 = vsyncpa %s1118, 1

</llo_original>
